<compile_context>
chip_gen: v6e
topology: v6e:2x2x1
jax: 0.10.0
libtpu: 0.0.40
codegen_flags: <defaults>
</compile_context>

<pallas_src>
import functools

import numpy as np
import jax
import jax.numpy as jnp
from jax.experimental import pallas as pl
from jax.experimental.pallas import tpu as pltpu

EMBED_DIM = 32     # embed_dim
CLIP_DIM = 128     # clip_dim (concat of text-encoder hidden dims) -- lane-dense
GRAPH_WIDTH = 32   # graph_cfg.width (hidden_dim of the graph MLPs)
GRAPH_LAYERS = 2   # graph_cfg.layers (graph_net depth; +1 for graph_conv)
TARGET_LEN = 77    # CLIP prompt length


# ---------------------------------------------------------------------------
# Fused per-graph kernel. One grid step == one graph.
# ---------------------------------------------------------------------------
def _sg_fused_kernel(obj_ref, pred_ref, sh_ref, oh_ref, shts_ref, ohts_ref,
                     gobj_ref, gpred_ref, bep_ref, sos_ref, eos_ref,
                     alpha_ref, p1_ref, p2_ref,
                     w1as_ref, w1ap_ref, w1ao_ref, b1a_ref,
                     w1bs_ref, b1bs_ref, w1bp_ref, b1bp_ref, w1bo_ref, b1bo_ref,
                     w2a_ref, b2a_ref, w2b_ref, b2b_ref,
                     out_ref, *, num_layers):
    f32 = jnp.float32

    def dot(a, b):
        return jnp.dot(a, b, preferred_element_type=f32)

    # projection_mlp_1 (bias-free)
    obj = dot(obj_ref[0], p1_ref[...])        # [O, ED]
    pred = dot(pred_ref[0], p1_ref[...])      # [T, ED]

    sh, oh = sh_ref[0], oh_ref[0]             # [T, O] one-hots (edge gather)
    shts, ohts = shts_ref[0], ohts_ref[0]     # [O, T] one-hot^T, pre-scaled by 1/count

    # graph_conv + graph_net layers (all weights VMEM-resident, unrolled)
    for l in range(num_layers):
        cur_s = dot(sh, obj)                  # obj_vecs[s_idx]
        cur_o = dot(oh, obj)                  # obj_vecs[o_idx]
        # net1 layer 1 on [s, p, o] (concat avoided via split weight)
        h = jnp.maximum(
            dot(cur_s, w1as_ref[l]) + dot(pred, w1ap_ref[l])
            + dot(cur_o, w1ao_ref[l]) + b1a_ref[l], 0.0)              # [T, H]
        # net1 layer 2, split into lane-aligned s / p / o outputs
        new_s = jnp.maximum(dot(h, w1bs_ref[l]) + b1bs_ref[l], 0.0)   # [T, H]
        new_p = jnp.maximum(dot(h, w1bp_ref[l]) + b1bp_ref[l], 0.0)   # [T, ED]
        new_o = jnp.maximum(dot(h, w1bo_ref[l]) + b1bo_ref[l], 0.0)   # [T, H]
        # scatter_add + avg pooling (reciprocal counts folded into shts/ohts)
        pooled = dot(shts, new_s) + dot(ohts, new_o)                  # [O, H]
        # net2
        g = jnp.maximum(dot(pooled, w2a_ref[l]) + b2a_ref[l], 0.0)    # [O, H]
        obj = jnp.maximum(dot(g, w2b_ref[l]) + b2b_ref[l], 0.0)       # [O, ED]
        pred = new_p

    # F.normalize(p=2, dim=1)  (rsqrt -> EUP, no divide)
    obj = obj * jax.lax.rsqrt(
        jnp.maximum(jnp.sum(obj * obj, axis=1, keepdims=True), 1e-24))
    pred = pred * jax.lax.rsqrt(
        jnp.maximum(jnp.sum(pred * pred, axis=1, keepdims=True), 1e-24))

    # projection_mlp_2 (bias-free)
    obj = dot(obj, p2_ref[...])               # [O, CD]
    pred = dot(pred, p2_ref[...])             # [T, CD]

    # generate_total_embedding_for_unet: ragged per-triple slicing baked into
    # the gobj/gpred selection matrices (rows beyond the prompt length / 75
    # truncation are all-zero), so it is one pair of matmuls here.
    prompt = dot(gobj_ref[0], obj) + dot(gpred_ref[0], pred)          # [L, CD]
    be = bep_ref[0] + alpha_ref[...] * prompt                         # [L, CD]

    sos = sos_ref[0]                          # [1, CD]
    eos = eos_ref[0]                          # [1, CD]
    L, CD = be.shape
    rows_after_sos = out_ref.shape[1] - 1
    if L >= rows_after_sos:                   # static (trace-time) branch
        final = jnp.concatenate([sos, be[:rows_after_sos]], axis=0)
    else:
        pad = jnp.broadcast_to(eos, (rows_after_sos - L, CD))
        final = jnp.concatenate([sos, be, pad], axis=0)               # [77, CD]
    out_ref[0] = final


def sg_fused_call(pk, batch):
    B, O, CD = batch["obj_emb"].shape
    NL = pk["w1as"].shape[0]

    def per_graph(arr):
        nz = arr.ndim - 1
        return pl.BlockSpec((1,) + arr.shape[1:],
                            lambda b, _nz=nz: (b,) + (0,) * _nz)

    def shared(arr):
        nd = arr.ndim
        return pl.BlockSpec(arr.shape, lambda b, _nd=nd: (0,) * _nd)

    per_graph_args = [batch["obj_emb"], batch["pred_emb"], batch["sh"],
                      batch["oh"], batch["shts"], batch["ohts"],
                      batch["gobj"], batch["gpred"], batch["be_prompt"],
                      batch["be_sos"], batch["be_eos"]]
    shared_args = [pk["alpha"], pk["p1t"], pk["p2t"],
                   pk["w1as"], pk["w1ap"], pk["w1ao"], pk["b1a"],
                   pk["w1bs"], pk["b1bs"], pk["w1bp"], pk["b1bp"],
                   pk["w1bo"], pk["b1bo"],
                   pk["w2a"], pk["b2a"], pk["w2b"], pk["b2b"]]

    return pl.pallas_call(
        functools.partial(_sg_fused_kernel, num_layers=NL),
        out_shape=jax.ShapeDtypeStruct((B, TARGET_LEN, CD), jnp.float32),
        grid=(B,),
        in_specs=[per_graph(a) for a in per_graph_args]
                 + [shared(a) for a in shared_args],
        out_specs=pl.BlockSpec((1, TARGET_LEN, CD), lambda b: (b, 0, 0)),
        compiler_params=pltpu.CompilerParams(
            dimension_semantics=("parallel",),
            vmem_limit_bytes=64 * 1024 * 1024),
    )(*per_graph_args, *shared_args)


# ---------------------------------------------------------------------------
# Parameters (deterministic, in-script) + packing into kernel-friendly slabs.
# ---------------------------------------------------------------------------
def init_params(key):
    keys = iter(jax.random.split(key, 64))

    def w(shape, scale=0.1):
        return (jax.random.normal(next(keys), shape) * scale).astype(jnp.float32)

    def gconv_params(din, dout, hidden):
        # PyTorch nn.Linear layout: weight [out, in]
        return dict(
            w1a=w((hidden, 3 * din)), b1a=w((hidden,)),
            w1b=w((2 * hidden + dout, hidden)), b1b=w((2 * hidden + dout,)),
            w2a=w((hidden, hidden)), b2a=w((hidden,)),
            w2b=w((dout, hidden)), b2b=w((dout,)),
        )

    return dict(
        # module default is zeros(1); set nonzero so the graph path contributes
        alpha_obj=jnp.array([0.5], jnp.float32),
        proj1_w=w((EMBED_DIM, CLIP_DIM)),   # nn.Linear(clip_dim, embed_dim, bias=False)
        proj2_w=w((CLIP_DIM, EMBED_DIM)),   # nn.Linear(embed_dim, clip_dim, bias=False)
        gconvs=[gconv_params(EMBED_DIM, EMBED_DIM, GRAPH_WIDTH)
                for _ in range(1 + GRAPH_LAYERS)],   # graph_conv + graph_net layers
    )


def pack_params(params):
    ED, H = EMBED_DIM, GRAPH_WIDTH
    gps = params["gconvs"]

    def stack(fn):
        return jnp.stack([fn(gp) for gp in gps], axis=0)

    return dict(
        alpha=params["alpha_obj"].reshape(1, 1),
        p1t=params["proj1_w"].T,                               # [CD, ED]
        p2t=params["proj2_w"].T,                               # [ED, CD]
        w1as=stack(lambda gp: gp["w1a"][:, 0:ED].T),           # [NL, ED, H]
        w1ap=stack(lambda gp: gp["w1a"][:, ED:2 * ED].T),
        w1ao=stack(lambda gp: gp["w1a"][:, 2 * ED:3 * ED].T),
        b1a=stack(lambda gp: gp["b1a"][None, :]),              # [NL, 1, H]
        w1bs=stack(lambda gp: gp["w1b"][0:H, :].T),            # [NL, H, H]
        b1bs=stack(lambda gp: gp["b1b"][None, 0:H]),
        w1bp=stack(lambda gp: gp["w1b"][H:H + ED, :].T),       # [NL, H, ED]
        b1bp=stack(lambda gp: gp["b1b"][None, H:H + ED]),
        w1bo=stack(lambda gp: gp["w1b"][H + ED:, :].T),        # [NL, H, H]
        b1bo=stack(lambda gp: gp["b1b"][None, H + ED:]),
        w2a=stack(lambda gp: gp["w2a"].T),                     # [NL, H, H]
        b2a=stack(lambda gp: gp["b2a"][None, :]),
        w2b=stack(lambda gp: gp["w2b"].T),                     # [NL, H, ED]
        b2b=stack(lambda gp: gp["b2b"][None, :]),
    )


# ---------------------------------------------------------------------------
# Host-side (static) graph preprocessing: one-hots, avg-pool reciprocals and
# the ragged prompt-gather matrices of generate_total_embedding_for_unet.
# ---------------------------------------------------------------------------
def build_gather(index_list, O, T, L):
    rows = []  # (is_pred, source_row), in prompt order
    o_begin = 0
    for o_index, p_index, s_index in index_list:
        for r in range(o_begin, o_index + 1):
            rows.append((0, r))
        for r in range(p_index[0], p_index[1] + 1):
            rows.append((1, r))
        for r in range(o_index + 1, s_index + 1):
            rows.append((0, r))
        o_begin = s_index + 1
    c = min(len(rows), 75)            # truncation at 75 as in the module
    assert c <= L, "prompt longer than be_prompt buffer"
    gobj = np.zeros((L, O), np.float32)
    gpred = np.zeros((L, T), np.float32)
    for i in range(c):
        is_pred, r = rows[i]
        (gpred if is_pred else gobj)[i, r] = 1.0
    return gobj, gpred


def prep_batch(graphs):
    O = graphs[0]["obj_emb"].shape[0]
    T = graphs[0]["pred_emb"].shape[0]
    L = graphs[0]["be_prompt"].shape[0]
    sh_l, oh_l, shts_l, ohts_l, gobj_l, gpred_l = [], [], [], [], [], []
    for g in graphs:
        edges = np.asarray(g["edges"])
        sh = np.zeros((T, O), np.float32)
        oh = np.zeros((T, O), np.float32)
        sh[np.arange(T), edges[:, 0]] = 1.0
        oh[np.arange(T), edges[:, 1]] = 1.0
        counts = sh.sum(0) + oh.sum(0)
        inv = (1.0 / np.maximum(counts, 1.0)).astype(np.float32)
        sh_l.append(sh)
        oh_l.append(oh)
        shts_l.append(sh.T * inv[:, None])
        ohts_l.append(oh.T * inv[:, None])
        gobj, gpred = build_gather(g["index_list"], O, T, L)
        gobj_l.append(gobj)
        gpred_l.append(gpred)
    return dict(
        obj_emb=jnp.stack([g["obj_emb"] for g in graphs]),
        pred_emb=jnp.stack([g["pred_emb"] for g in graphs]),
        sh=jnp.asarray(np.stack(sh_l)),
        oh=jnp.asarray(np.stack(oh_l)),
        shts=jnp.asarray(np.stack(shts_l)),
        ohts=jnp.asarray(np.stack(ohts_l)),
        gobj=jnp.asarray(np.stack(gobj_l)),
        gpred=jnp.asarray(np.stack(gpred_l)),
        be_prompt=jnp.stack([g["be_prompt"] for g in graphs]),
        be_sos=jnp.stack([g["be_sos"] for g in graphs]),
        be_eos=jnp.stack([g["be_eos"] for g in graphs]),
        be_pooled=jnp.concatenate([g["be_pooled"] for g in graphs], axis=0),
    )


def sg_encoder_forward(params, graphs):
    packed = pack_params(params)
    batch = prep_batch(graphs)
    final_all = sg_fused_call(packed, batch)
    return final_all, batch["be_pooled"]


# ---------------------------------------------------------------------------
# Synthetic deterministic inputs (stand-ins for the text-encoder outputs).
# ---------------------------------------------------------------------------
def make_graph(key):
    ks = jax.random.split(key, 6)
    O, T, L = 10, 10, 20
    # edge layout matching get_triple_embeddings for 2 triples:
    #   item1: 3 tokens, item2: 2 tokens, relation: 2 tokens, attribute '-': 1 token
    edges = np.array([[0, 2], [1, 2], [3, 4], [2, 4], [2, 4],
                      [5, 7], [6, 7], [8, 9], [7, 9], [7, 9]], dtype=np.int32)
    index_list = [[2, [3, 4], 4], [7, [8, 9], 9]]  # triple_o_p_o_index_list
    return dict(
        obj_emb=(jax.random.normal(ks[0], (O, CLIP_DIM)) * 0.1).astype(jnp.float32),
        pred_emb=(jax.random.normal(ks[1], (T, CLIP_DIM)) * 0.1).astype(jnp.float32),
        edges=edges,
        index_list=index_list,
        be_sos=(jax.random.normal(ks[2], (1, CLIP_DIM)) * 0.1).astype(jnp.float32),
        be_eos=(jax.random.normal(ks[3], (1, CLIP_DIM)) * 0.1).astype(jnp.float32),
        be_prompt=(jax.random.normal(ks[4], (L, CLIP_DIM)) * 0.1).astype(jnp.float32),
        be_pooled=(jax.random.normal(ks[5], (1, CLIP_DIM)) * 0.1).astype(jnp.float32),
    )


if __name__ == "__main__":
    root = jax.random.PRNGKey(0)
    pkey, g0, g1 = jax.random.split(root, 3)
    params = init_params(pkey)
    graphs = [make_graph(g0), make_graph(g1)]

    final_all, pooled_all = sg_encoder_forward(params, graphs)
    jax.block_until_ready((final_all, pooled_all))

    assert final_all.shape == (2, TARGET_LEN, CLIP_DIM), final_all.shape
    assert pooled_all.shape == (2, CLIP_DIM), pooled_all.shape
    assert bool(jnp.all(jnp.isfinite(final_all)))
    print("KERNEL_OK")
</pallas_src>

<mosaic_0001>
module attributes {stable_mosaic.version = 11 : i64} {
  func.func @_sg_fused_kernel(%arg0: i32, %arg1: memref<1x10x128xf32, #tpu.memory_space<vmem>>, %arg2: memref<1x10x128xf32, #tpu.memory_space<vmem>>, %arg3: memref<1x10x10xf32, #tpu.memory_space<vmem>>, %arg4: memref<1x10x10xf32, #tpu.memory_space<vmem>>, %arg5: memref<1x10x10xf32, #tpu.memory_space<vmem>>, %arg6: memref<1x10x10xf32, #tpu.memory_space<vmem>>, %arg7: memref<1x20x10xf32, #tpu.memory_space<vmem>>, %arg8: memref<1x20x10xf32, #tpu.memory_space<vmem>>, %arg9: memref<1x20x128xf32, #tpu.memory_space<vmem>>, %arg10: memref<1x1x128xf32, #tpu.memory_space<vmem>>, %arg11: memref<1x1x128xf32, #tpu.memory_space<vmem>>, %arg12: memref<1x1xf32, #tpu.memory_space<vmem>>, %arg13: memref<128x32xf32, #tpu.memory_space<vmem>>, %arg14: memref<32x128xf32, #tpu.memory_space<vmem>>, %arg15: memref<3x32x32xf32, #tpu.memory_space<vmem>>, %arg16: memref<3x32x32xf32, #tpu.memory_space<vmem>>, %arg17: memref<3x32x32xf32, #tpu.memory_space<vmem>>, %arg18: memref<3x1x32xf32, #tpu.memory_space<vmem>>, %arg19: memref<3x32x32xf32, #tpu.memory_space<vmem>>, %arg20: memref<3x1x32xf32, #tpu.memory_space<vmem>>, %arg21: memref<3x32x32xf32, #tpu.memory_space<vmem>>, %arg22: memref<3x1x32xf32, #tpu.memory_space<vmem>>, %arg23: memref<3x32x32xf32, #tpu.memory_space<vmem>>, %arg24: memref<3x1x32xf32, #tpu.memory_space<vmem>>, %arg25: memref<3x32x32xf32, #tpu.memory_space<vmem>>, %arg26: memref<3x1x32xf32, #tpu.memory_space<vmem>>, %arg27: memref<3x32x32xf32, #tpu.memory_space<vmem>>, %arg28: memref<3x1x32xf32, #tpu.memory_space<vmem>>, %arg29: memref<1x77x128xf32, #tpu.memory_space<vmem>>) attributes {dimension_semantics = [#tpu.dimension_semantics<parallel>], iteration_bounds = array<i64: 2>, scalar_prefetch = 0 : i64, scratch_operands = 0 : i64, tpu.core_type = #tpu.core_type<tc>, window_params = [{transform_indices = @transform_0, window_bounds = array<i64: 1, 10, 128>}, {transform_indices = @transform_1, window_bounds = array<i64: 1, 10, 128>}, {transform_indices = @transform_2, window_bounds = array<i64: 1, 10, 10>}, {transform_indices = @transform_3, window_bounds = array<i64: 1, 10, 10>}, {transform_indices = @transform_4, window_bounds = array<i64: 1, 10, 10>}, {transform_indices = @transform_5, window_bounds = array<i64: 1, 10, 10>}, {transform_indices = @transform_6, window_bounds = array<i64: 1, 20, 10>}, {transform_indices = @transform_7, window_bounds = array<i64: 1, 20, 10>}, {transform_indices = @transform_8, window_bounds = array<i64: 1, 20, 128>}, {transform_indices = @transform_9, window_bounds = array<i64: 1, 1, 128>}, {transform_indices = @transform_10, window_bounds = array<i64: 1, 1, 128>}, {pipeline_mode = #tpu.pipeline_mode<synchronous>, transform_indices = @transform_11, window_bounds = array<i64: 1, 1>}, {pipeline_mode = #tpu.pipeline_mode<synchronous>, transform_indices = @transform_12, window_bounds = array<i64: 128, 32>}, {pipeline_mode = #tpu.pipeline_mode<synchronous>, transform_indices = @transform_13, window_bounds = array<i64: 32, 128>}, {pipeline_mode = #tpu.pipeline_mode<synchronous>, transform_indices = @transform_14, window_bounds = array<i64: 3, 32, 32>}, {pipeline_mode = #tpu.pipeline_mode<synchronous>, transform_indices = @transform_15, window_bounds = array<i64: 3, 32, 32>}, {pipeline_mode = #tpu.pipeline_mode<synchronous>, transform_indices = @transform_16, window_bounds = array<i64: 3, 32, 32>}, {pipeline_mode = #tpu.pipeline_mode<synchronous>, transform_indices = @transform_17, window_bounds = array<i64: 3, 1, 32>}, {pipeline_mode = #tpu.pipeline_mode<synchronous>, transform_indices = @transform_18, window_bounds = array<i64: 3, 32, 32>}, {pipeline_mode = #tpu.pipeline_mode<synchronous>, transform_indices = @transform_19, window_bounds = array<i64: 3, 1, 32>}, {pipeline_mode = #tpu.pipeline_mode<synchronous>, transform_indices = @transform_20, window_bounds = array<i64: 3, 32, 32>}, {pipeline_mode = #tpu.pipeline_mode<synchronous>, transform_indices = @transform_21, window_bounds = array<i64: 3, 1, 32>}, {pipeline_mode = #tpu.pipeline_mode<synchronous>, transform_indices = @transform_22, window_bounds = array<i64: 3, 32, 32>}, {pipeline_mode = #tpu.pipeline_mode<synchronous>, transform_indices = @transform_23, window_bounds = array<i64: 3, 1, 32>}, {pipeline_mode = #tpu.pipeline_mode<synchronous>, transform_indices = @transform_24, window_bounds = array<i64: 3, 32, 32>}, {pipeline_mode = #tpu.pipeline_mode<synchronous>, transform_indices = @transform_25, window_bounds = array<i64: 3, 1, 32>}, {pipeline_mode = #tpu.pipeline_mode<synchronous>, transform_indices = @transform_26, window_bounds = array<i64: 3, 32, 32>}, {pipeline_mode = #tpu.pipeline_mode<synchronous>, transform_indices = @transform_27, window_bounds = array<i64: 3, 1, 32>}, {transform_indices = @transform_28, window_bounds = array<i64: 1, 77, 128>}]} {
    %c0 = arith.constant 0 : index
    %c0_0 = arith.constant 0 : index
    %c0_1 = arith.constant 0 : index
    %0 = vector.load %arg1[%c0, %c0_0, %c0_1] : memref<1x10x128xf32, #tpu.memory_space<vmem>>, vector<1x10x128xf32>
    %1 = vector.shape_cast %0 : vector<1x10x128xf32> to vector<10x128xf32>
    %c0_2 = arith.constant 0 : index
    %c0_3 = arith.constant 0 : index
    %2 = vector.load %arg13[%c0_2, %c0_3] : memref<128x32xf32, #tpu.memory_space<vmem>>, vector<128x32xf32>
    %cst = arith.constant dense<0.000000e+00> : vector<10x32xf32>
    %3 = tpu.matmul %1, %2, %cst {dimension_numbers = #tpu.dot_dimension_numbers<[1], [0], [0], [1], [0, 0, 1, 1], [], []>} : vector<10x128xf32>, vector<128x32xf32>, vector<10x32xf32> -> vector<10x32xf32>
    %c0_4 = arith.constant 0 : index
    %c0_5 = arith.constant 0 : index
    %c0_6 = arith.constant 0 : index
    %4 = vector.load %arg2[%c0_4, %c0_5, %c0_6] : memref<1x10x128xf32, #tpu.memory_space<vmem>>, vector<1x10x128xf32>
    %5 = vector.shape_cast %4 : vector<1x10x128xf32> to vector<10x128xf32>
    %c0_7 = arith.constant 0 : index
    %c0_8 = arith.constant 0 : index
    %6 = vector.load %arg13[%c0_7, %c0_8] : memref<128x32xf32, #tpu.memory_space<vmem>>, vector<128x32xf32>
    %cst_9 = arith.constant dense<0.000000e+00> : vector<10x32xf32>
    %7 = tpu.matmul %5, %6, %cst_9 {dimension_numbers = #tpu.dot_dimension_numbers<[1], [0], [0], [1], [0, 0, 1, 1], [], []>} : vector<10x128xf32>, vector<128x32xf32>, vector<10x32xf32> -> vector<10x32xf32>
    %c0_10 = arith.constant 0 : index
    %c0_11 = arith.constant 0 : index
    %c0_12 = arith.constant 0 : index
    %8 = vector.load %arg3[%c0_10, %c0_11, %c0_12] : memref<1x10x10xf32, #tpu.memory_space<vmem>>, vector<1x10x10xf32>
    %9 = vector.shape_cast %8 : vector<1x10x10xf32> to vector<10x10xf32>
    %c0_13 = arith.constant 0 : index
    %c0_14 = arith.constant 0 : index
    %c0_15 = arith.constant 0 : index
    %10 = vector.load %arg4[%c0_13, %c0_14, %c0_15] : memref<1x10x10xf32, #tpu.memory_space<vmem>>, vector<1x10x10xf32>
    %11 = vector.shape_cast %10 : vector<1x10x10xf32> to vector<10x10xf32>
    %c0_16 = arith.constant 0 : index
    %c0_17 = arith.constant 0 : index
    %c0_18 = arith.constant 0 : index
    %12 = vector.load %arg5[%c0_16, %c0_17, %c0_18] : memref<1x10x10xf32, #tpu.memory_space<vmem>>, vector<1x10x10xf32>
    %13 = vector.shape_cast %12 : vector<1x10x10xf32> to vector<10x10xf32>
    %c0_19 = arith.constant 0 : index
    %c0_20 = arith.constant 0 : index
    %c0_21 = arith.constant 0 : index
    %14 = vector.load %arg6[%c0_19, %c0_20, %c0_21] : memref<1x10x10xf32, #tpu.memory_space<vmem>>, vector<1x10x10xf32>
    %15 = vector.shape_cast %14 : vector<1x10x10xf32> to vector<10x10xf32>
    %cst_22 = arith.constant dense<0.000000e+00> : vector<10x32xf32>
    %16 = tpu.matmul %9, %3, %cst_22 {dimension_numbers = #tpu.dot_dimension_numbers<[1], [0], [0], [1], [0, 0, 1, 1], [], []>} : vector<10x10xf32>, vector<10x32xf32>, vector<10x32xf32> -> vector<10x32xf32>
    %cst_23 = arith.constant dense<0.000000e+00> : vector<10x32xf32>
    %17 = tpu.matmul %11, %3, %cst_23 {dimension_numbers = #tpu.dot_dimension_numbers<[1], [0], [0], [1], [0, 0, 1, 1], [], []>} : vector<10x10xf32>, vector<10x32xf32>, vector<10x32xf32> -> vector<10x32xf32>
    %c0_24 = arith.constant 0 : index
    %c0_25 = arith.constant 0 : index
    %c0_26 = arith.constant 0 : index
    %18 = vector.load %arg15[%c0_24, %c0_25, %c0_26] : memref<3x32x32xf32, #tpu.memory_space<vmem>>, vector<1x32x32xf32>
    %19 = vector.shape_cast %18 : vector<1x32x32xf32> to vector<32x32xf32>
    %cst_27 = arith.constant dense<0.000000e+00> : vector<10x32xf32>
    %20 = tpu.matmul %16, %19, %cst_27 {dimension_numbers = #tpu.dot_dimension_numbers<[1], [0], [0], [1], [0, 0, 1, 1], [], []>} : vector<10x32xf32>, vector<32x32xf32>, vector<10x32xf32> -> vector<10x32xf32>
    %c0_28 = arith.constant 0 : index
    %c0_29 = arith.constant 0 : index
    %c0_30 = arith.constant 0 : index
    %21 = vector.load %arg16[%c0_28, %c0_29, %c0_30] : memref<3x32x32xf32, #tpu.memory_space<vmem>>, vector<1x32x32xf32>
    %22 = vector.shape_cast %21 : vector<1x32x32xf32> to vector<32x32xf32>
    %cst_31 = arith.constant dense<0.000000e+00> : vector<10x32xf32>
    %23 = tpu.matmul %7, %22, %cst_31 {dimension_numbers = #tpu.dot_dimension_numbers<[1], [0], [0], [1], [0, 0, 1, 1], [], []>} : vector<10x32xf32>, vector<32x32xf32>, vector<10x32xf32> -> vector<10x32xf32>
    %24 = arith.addf %20, %23 : vector<10x32xf32>
    %c0_32 = arith.constant 0 : index
    %c0_33 = arith.constant 0 : index
    %c0_34 = arith.constant 0 : index
    %25 = vector.load %arg17[%c0_32, %c0_33, %c0_34] : memref<3x32x32xf32, #tpu.memory_space<vmem>>, vector<1x32x32xf32>
    %26 = vector.shape_cast %25 : vector<1x32x32xf32> to vector<32x32xf32>
    %cst_35 = arith.constant dense<0.000000e+00> : vector<10x32xf32>
    %27 = tpu.matmul %17, %26, %cst_35 {dimension_numbers = #tpu.dot_dimension_numbers<[1], [0], [0], [1], [0, 0, 1, 1], [], []>} : vector<10x32xf32>, vector<32x32xf32>, vector<10x32xf32> -> vector<10x32xf32>
    %28 = arith.addf %24, %27 : vector<10x32xf32>
    %c0_36 = arith.constant 0 : index
    %c0_37 = arith.constant 0 : index
    %c0_38 = arith.constant 0 : index
    %29 = vector.load %arg18[%c0_36, %c0_37, %c0_38] : memref<3x1x32xf32, #tpu.memory_space<vmem>>, vector<1x1x32xf32>
    %30 = vector.shape_cast %29 : vector<1x1x32xf32> to vector<1x32xf32>
    %31 = vector.broadcast %30 : vector<1x32xf32> to vector<10x32xf32>
    %32 = arith.addf %28, %31 : vector<10x32xf32>
    %cst_39 = arith.constant 0.000000e+00 : f32
    %33 = vector.broadcast %cst_39 : f32 to vector<10x32xf32>
    %34 = arith.maximumf %32, %33 : vector<10x32xf32>
    %c0_40 = arith.constant 0 : index
    %c0_41 = arith.constant 0 : index
    %c0_42 = arith.constant 0 : index
    %35 = vector.load %arg19[%c0_40, %c0_41, %c0_42] : memref<3x32x32xf32, #tpu.memory_space<vmem>>, vector<1x32x32xf32>
    %36 = vector.shape_cast %35 : vector<1x32x32xf32> to vector<32x32xf32>
    %cst_43 = arith.constant dense<0.000000e+00> : vector<10x32xf32>
    %37 = tpu.matmul %34, %36, %cst_43 {dimension_numbers = #tpu.dot_dimension_numbers<[1], [0], [0], [1], [0, 0, 1, 1], [], []>} : vector<10x32xf32>, vector<32x32xf32>, vector<10x32xf32> -> vector<10x32xf32>
    %c0_44 = arith.constant 0 : index
    %c0_45 = arith.constant 0 : index
    %c0_46 = arith.constant 0 : index
    %38 = vector.load %arg20[%c0_44, %c0_45, %c0_46] : memref<3x1x32xf32, #tpu.memory_space<vmem>>, vector<1x1x32xf32>
    %39 = vector.shape_cast %38 : vector<1x1x32xf32> to vector<1x32xf32>
    %40 = vector.broadcast %39 : vector<1x32xf32> to vector<10x32xf32>
    %41 = arith.addf %37, %40 : vector<10x32xf32>
    %cst_47 = arith.constant 0.000000e+00 : f32
    %42 = vector.broadcast %cst_47 : f32 to vector<10x32xf32>
    %43 = arith.maximumf %41, %42 : vector<10x32xf32>
    %c0_48 = arith.constant 0 : index
    %c0_49 = arith.constant 0 : index
    %c0_50 = arith.constant 0 : index
    %44 = vector.load %arg21[%c0_48, %c0_49, %c0_50] : memref<3x32x32xf32, #tpu.memory_space<vmem>>, vector<1x32x32xf32>
    %45 = vector.shape_cast %44 : vector<1x32x32xf32> to vector<32x32xf32>
    %cst_51 = arith.constant dense<0.000000e+00> : vector<10x32xf32>
    %46 = tpu.matmul %34, %45, %cst_51 {dimension_numbers = #tpu.dot_dimension_numbers<[1], [0], [0], [1], [0, 0, 1, 1], [], []>} : vector<10x32xf32>, vector<32x32xf32>, vector<10x32xf32> -> vector<10x32xf32>
    %c0_52 = arith.constant 0 : index
    %c0_53 = arith.constant 0 : index
    %c0_54 = arith.constant 0 : index
    %47 = vector.load %arg22[%c0_52, %c0_53, %c0_54] : memref<3x1x32xf32, #tpu.memory_space<vmem>>, vector<1x1x32xf32>
    %48 = vector.shape_cast %47 : vector<1x1x32xf32> to vector<1x32xf32>
    %49 = vector.broadcast %48 : vector<1x32xf32> to vector<10x32xf32>
    %50 = arith.addf %46, %49 : vector<10x32xf32>
    %cst_55 = arith.constant 0.000000e+00 : f32
    %51 = vector.broadcast %cst_55 : f32 to vector<10x32xf32>
    %52 = arith.maximumf %50, %51 : vector<10x32xf32>
    %c0_56 = arith.constant 0 : index
    %c0_57 = arith.constant 0 : index
    %c0_58 = arith.constant 0 : index
    %53 = vector.load %arg23[%c0_56, %c0_57, %c0_58] : memref<3x32x32xf32, #tpu.memory_space<vmem>>, vector<1x32x32xf32>
    %54 = vector.shape_cast %53 : vector<1x32x32xf32> to vector<32x32xf32>
    %cst_59 = arith.constant dense<0.000000e+00> : vector<10x32xf32>
    %55 = tpu.matmul %34, %54, %cst_59 {dimension_numbers = #tpu.dot_dimension_numbers<[1], [0], [0], [1], [0, 0, 1, 1], [], []>} : vector<10x32xf32>, vector<32x32xf32>, vector<10x32xf32> -> vector<10x32xf32>
    %c0_60 = arith.constant 0 : index
    %c0_61 = arith.constant 0 : index
    %c0_62 = arith.constant 0 : index
    %56 = vector.load %arg24[%c0_60, %c0_61, %c0_62] : memref<3x1x32xf32, #tpu.memory_space<vmem>>, vector<1x1x32xf32>
    %57 = vector.shape_cast %56 : vector<1x1x32xf32> to vector<1x32xf32>
    %58 = vector.broadcast %57 : vector<1x32xf32> to vector<10x32xf32>
    %59 = arith.addf %55, %58 : vector<10x32xf32>
    %cst_63 = arith.constant 0.000000e+00 : f32
    %60 = vector.broadcast %cst_63 : f32 to vector<10x32xf32>
    %61 = arith.maximumf %59, %60 : vector<10x32xf32>
    %cst_64 = arith.constant dense<0.000000e+00> : vector<10x32xf32>
    %62 = tpu.matmul %13, %43, %cst_64 {dimension_numbers = #tpu.dot_dimension_numbers<[1], [0], [0], [1], [0, 0, 1, 1], [], []>} : vector<10x10xf32>, vector<10x32xf32>, vector<10x32xf32> -> vector<10x32xf32>
    %cst_65 = arith.constant dense<0.000000e+00> : vector<10x32xf32>
    %63 = tpu.matmul %15, %61, %cst_65 {dimension_numbers = #tpu.dot_dimension_numbers<[1], [0], [0], [1], [0, 0, 1, 1], [], []>} : vector<10x10xf32>, vector<10x32xf32>, vector<10x32xf32> -> vector<10x32xf32>
    %64 = arith.addf %62, %63 : vector<10x32xf32>
    %c0_66 = arith.constant 0 : index
    %c0_67 = arith.constant 0 : index
    %c0_68 = arith.constant 0 : index
    %65 = vector.load %arg25[%c0_66, %c0_67, %c0_68] : memref<3x32x32xf32, #tpu.memory_space<vmem>>, vector<1x32x32xf32>
    %66 = vector.shape_cast %65 : vector<1x32x32xf32> to vector<32x32xf32>
    %cst_69 = arith.constant dense<0.000000e+00> : vector<10x32xf32>
    %67 = tpu.matmul %64, %66, %cst_69 {dimension_numbers = #tpu.dot_dimension_numbers<[1], [0], [0], [1], [0, 0, 1, 1], [], []>} : vector<10x32xf32>, vector<32x32xf32>, vector<10x32xf32> -> vector<10x32xf32>
    %c0_70 = arith.constant 0 : index
    %c0_71 = arith.constant 0 : index
    %c0_72 = arith.constant 0 : index
    %68 = vector.load %arg26[%c0_70, %c0_71, %c0_72] : memref<3x1x32xf32, #tpu.memory_space<vmem>>, vector<1x1x32xf32>
    %69 = vector.shape_cast %68 : vector<1x1x32xf32> to vector<1x32xf32>
    %70 = vector.broadcast %69 : vector<1x32xf32> to vector<10x32xf32>
    %71 = arith.addf %67, %70 : vector<10x32xf32>
    %cst_73 = arith.constant 0.000000e+00 : f32
    %72 = vector.broadcast %cst_73 : f32 to vector<10x32xf32>
    %73 = arith.maximumf %71, %72 : vector<10x32xf32>
    %c0_74 = arith.constant 0 : index
    %c0_75 = arith.constant 0 : index
    %c0_76 = arith.constant 0 : index
    %74 = vector.load %arg27[%c0_74, %c0_75, %c0_76] : memref<3x32x32xf32, #tpu.memory_space<vmem>>, vector<1x32x32xf32>
    %75 = vector.shape_cast %74 : vector<1x32x32xf32> to vector<32x32xf32>
    %cst_77 = arith.constant dense<0.000000e+00> : vector<10x32xf32>
    %76 = tpu.matmul %73, %75, %cst_77 {dimension_numbers = #tpu.dot_dimension_numbers<[1], [0], [0], [1], [0, 0, 1, 1], [], []>} : vector<10x32xf32>, vector<32x32xf32>, vector<10x32xf32> -> vector<10x32xf32>
    %c0_78 = arith.constant 0 : index
    %c0_79 = arith.constant 0 : index
    %c0_80 = arith.constant 0 : index
    %77 = vector.load %arg28[%c0_78, %c0_79, %c0_80] : memref<3x1x32xf32, #tpu.memory_space<vmem>>, vector<1x1x32xf32>
    %78 = vector.shape_cast %77 : vector<1x1x32xf32> to vector<1x32xf32>
    %79 = vector.broadcast %78 : vector<1x32xf32> to vector<10x32xf32>
    %80 = arith.addf %76, %79 : vector<10x32xf32>
    %cst_81 = arith.constant 0.000000e+00 : f32
    %81 = vector.broadcast %cst_81 : f32 to vector<10x32xf32>
    %82 = arith.maximumf %80, %81 : vector<10x32xf32>
    %cst_82 = arith.constant dense<0.000000e+00> : vector<10x32xf32>
    %83 = tpu.matmul %9, %82, %cst_82 {dimension_numbers = #tpu.dot_dimension_numbers<[1], [0], [0], [1], [0, 0, 1, 1], [], []>} : vector<10x10xf32>, vector<10x32xf32>, vector<10x32xf32> -> vector<10x32xf32>
    %cst_83 = arith.constant dense<0.000000e+00> : vector<10x32xf32>
    %84 = tpu.matmul %11, %82, %cst_83 {dimension_numbers = #tpu.dot_dimension_numbers<[1], [0], [0], [1], [0, 0, 1, 1], [], []>} : vector<10x10xf32>, vector<10x32xf32>, vector<10x32xf32> -> vector<10x32xf32>
    %c1 = arith.constant 1 : index
    %c0_84 = arith.constant 0 : index
    %c0_85 = arith.constant 0 : index
    %85 = vector.load %arg15[%c1, %c0_84, %c0_85] : memref<3x32x32xf32, #tpu.memory_space<vmem>>, vector<1x32x32xf32>
    %86 = vector.shape_cast %85 : vector<1x32x32xf32> to vector<32x32xf32>
    %cst_86 = arith.constant dense<0.000000e+00> : vector<10x32xf32>
    %87 = tpu.matmul %83, %86, %cst_86 {dimension_numbers = #tpu.dot_dimension_numbers<[1], [0], [0], [1], [0, 0, 1, 1], [], []>} : vector<10x32xf32>, vector<32x32xf32>, vector<10x32xf32> -> vector<10x32xf32>
    %c1_87 = arith.constant 1 : index
    %c0_88 = arith.constant 0 : index
    %c0_89 = arith.constant 0 : index
    %88 = vector.load %arg16[%c1_87, %c0_88, %c0_89] : memref<3x32x32xf32, #tpu.memory_space<vmem>>, vector<1x32x32xf32>
    %89 = vector.shape_cast %88 : vector<1x32x32xf32> to vector<32x32xf32>
    %cst_90 = arith.constant dense<0.000000e+00> : vector<10x32xf32>
    %90 = tpu.matmul %52, %89, %cst_90 {dimension_numbers = #tpu.dot_dimension_numbers<[1], [0], [0], [1], [0, 0, 1, 1], [], []>} : vector<10x32xf32>, vector<32x32xf32>, vector<10x32xf32> -> vector<10x32xf32>
    %91 = arith.addf %87, %90 : vector<10x32xf32>
    %c1_91 = arith.constant 1 : index
    %c0_92 = arith.constant 0 : index
    %c0_93 = arith.constant 0 : index
    %92 = vector.load %arg17[%c1_91, %c0_92, %c0_93] : memref<3x32x32xf32, #tpu.memory_space<vmem>>, vector<1x32x32xf32>
    %93 = vector.shape_cast %92 : vector<1x32x32xf32> to vector<32x32xf32>
    %cst_94 = arith.constant dense<0.000000e+00> : vector<10x32xf32>
    %94 = tpu.matmul %84, %93, %cst_94 {dimension_numbers = #tpu.dot_dimension_numbers<[1], [0], [0], [1], [0, 0, 1, 1], [], []>} : vector<10x32xf32>, vector<32x32xf32>, vector<10x32xf32> -> vector<10x32xf32>
    %95 = arith.addf %91, %94 : vector<10x32xf32>
    %c1_95 = arith.constant 1 : index
    %c0_96 = arith.constant 0 : index
    %c0_97 = arith.constant 0 : index
    %96 = vector.load %arg18[%c1_95, %c0_96, %c0_97] : memref<3x1x32xf32, #tpu.memory_space<vmem>>, vector<1x1x32xf32>
    %97 = vector.shape_cast %96 : vector<1x1x32xf32> to vector<1x32xf32>
    %98 = vector.broadcast %97 : vector<1x32xf32> to vector<10x32xf32>
    %99 = arith.addf %95, %98 : vector<10x32xf32>
    %cst_98 = arith.constant 0.000000e+00 : f32
    %100 = vector.broadcast %cst_98 : f32 to vector<10x32xf32>
    %101 = arith.maximumf %99, %100 : vector<10x32xf32>
    %c1_99 = arith.constant 1 : index
    %c0_100 = arith.constant 0 : index
    %c0_101 = arith.constant 0 : index
    %102 = vector.load %arg19[%c1_99, %c0_100, %c0_101] : memref<3x32x32xf32, #tpu.memory_space<vmem>>, vector<1x32x32xf32>
    %103 = vector.shape_cast %102 : vector<1x32x32xf32> to vector<32x32xf32>
    %cst_102 = arith.constant dense<0.000000e+00> : vector<10x32xf32>
    %104 = tpu.matmul %101, %103, %cst_102 {dimension_numbers = #tpu.dot_dimension_numbers<[1], [0], [0], [1], [0, 0, 1, 1], [], []>} : vector<10x32xf32>, vector<32x32xf32>, vector<10x32xf32> -> vector<10x32xf32>
    %c1_103 = arith.constant 1 : index
    %c0_104 = arith.constant 0 : index
    %c0_105 = arith.constant 0 : index
    %105 = vector.load %arg20[%c1_103, %c0_104, %c0_105] : memref<3x1x32xf32, #tpu.memory_space<vmem>>, vector<1x1x32xf32>
    %106 = vector.shape_cast %105 : vector<1x1x32xf32> to vector<1x32xf32>
    %107 = vector.broadcast %106 : vector<1x32xf32> to vector<10x32xf32>
    %108 = arith.addf %104, %107 : vector<10x32xf32>
    %cst_106 = arith.constant 0.000000e+00 : f32
    %109 = vector.broadcast %cst_106 : f32 to vector<10x32xf32>
    %110 = arith.maximumf %108, %109 : vector<10x32xf32>
    %c1_107 = arith.constant 1 : index
    %c0_108 = arith.constant 0 : index
    %c0_109 = arith.constant 0 : index
    %111 = vector.load %arg21[%c1_107, %c0_108, %c0_109] : memref<3x32x32xf32, #tpu.memory_space<vmem>>, vector<1x32x32xf32>
    %112 = vector.shape_cast %111 : vector<1x32x32xf32> to vector<32x32xf32>
    %cst_110 = arith.constant dense<0.000000e+00> : vector<10x32xf32>
    %113 = tpu.matmul %101, %112, %cst_110 {dimension_numbers = #tpu.dot_dimension_numbers<[1], [0], [0], [1], [0, 0, 1, 1], [], []>} : vector<10x32xf32>, vector<32x32xf32>, vector<10x32xf32> -> vector<10x32xf32>
    %c1_111 = arith.constant 1 : index
    %c0_112 = arith.constant 0 : index
    %c0_113 = arith.constant 0 : index
    %114 = vector.load %arg22[%c1_111, %c0_112, %c0_113] : memref<3x1x32xf32, #tpu.memory_space<vmem>>, vector<1x1x32xf32>
    %115 = vector.shape_cast %114 : vector<1x1x32xf32> to vector<1x32xf32>
    %116 = vector.broadcast %115 : vector<1x32xf32> to vector<10x32xf32>
    %117 = arith.addf %113, %116 : vector<10x32xf32>
    %cst_114 = arith.constant 0.000000e+00 : f32
    %118 = vector.broadcast %cst_114 : f32 to vector<10x32xf32>
    %119 = arith.maximumf %117, %118 : vector<10x32xf32>
    %c1_115 = arith.constant 1 : index
    %c0_116 = arith.constant 0 : index
    %c0_117 = arith.constant 0 : index
    %120 = vector.load %arg23[%c1_115, %c0_116, %c0_117] : memref<3x32x32xf32, #tpu.memory_space<vmem>>, vector<1x32x32xf32>
    %121 = vector.shape_cast %120 : vector<1x32x32xf32> to vector<32x32xf32>
    %cst_118 = arith.constant dense<0.000000e+00> : vector<10x32xf32>
    %122 = tpu.matmul %101, %121, %cst_118 {dimension_numbers = #tpu.dot_dimension_numbers<[1], [0], [0], [1], [0, 0, 1, 1], [], []>} : vector<10x32xf32>, vector<32x32xf32>, vector<10x32xf32> -> vector<10x32xf32>
    %c1_119 = arith.constant 1 : index
    %c0_120 = arith.constant 0 : index
    %c0_121 = arith.constant 0 : index
    %123 = vector.load %arg24[%c1_119, %c0_120, %c0_121] : memref<3x1x32xf32, #tpu.memory_space<vmem>>, vector<1x1x32xf32>
    %124 = vector.shape_cast %123 : vector<1x1x32xf32> to vector<1x32xf32>
    %125 = vector.broadcast %124 : vector<1x32xf32> to vector<10x32xf32>
    %126 = arith.addf %122, %125 : vector<10x32xf32>
    %cst_122 = arith.constant 0.000000e+00 : f32
    %127 = vector.broadcast %cst_122 : f32 to vector<10x32xf32>
    %128 = arith.maximumf %126, %127 : vector<10x32xf32>
    %cst_123 = arith.constant dense<0.000000e+00> : vector<10x32xf32>
    %129 = tpu.matmul %13, %110, %cst_123 {dimension_numbers = #tpu.dot_dimension_numbers<[1], [0], [0], [1], [0, 0, 1, 1], [], []>} : vector<10x10xf32>, vector<10x32xf32>, vector<10x32xf32> -> vector<10x32xf32>
    %cst_124 = arith.constant dense<0.000000e+00> : vector<10x32xf32>
    %130 = tpu.matmul %15, %128, %cst_124 {dimension_numbers = #tpu.dot_dimension_numbers<[1], [0], [0], [1], [0, 0, 1, 1], [], []>} : vector<10x10xf32>, vector<10x32xf32>, vector<10x32xf32> -> vector<10x32xf32>
    %131 = arith.addf %129, %130 : vector<10x32xf32>
    %c1_125 = arith.constant 1 : index
    %c0_126 = arith.constant 0 : index
    %c0_127 = arith.constant 0 : index
    %132 = vector.load %arg25[%c1_125, %c0_126, %c0_127] : memref<3x32x32xf32, #tpu.memory_space<vmem>>, vector<1x32x32xf32>
    %133 = vector.shape_cast %132 : vector<1x32x32xf32> to vector<32x32xf32>
    %cst_128 = arith.constant dense<0.000000e+00> : vector<10x32xf32>
    %134 = tpu.matmul %131, %133, %cst_128 {dimension_numbers = #tpu.dot_dimension_numbers<[1], [0], [0], [1], [0, 0, 1, 1], [], []>} : vector<10x32xf32>, vector<32x32xf32>, vector<10x32xf32> -> vector<10x32xf32>
    %c1_129 = arith.constant 1 : index
    %c0_130 = arith.constant 0 : index
    %c0_131 = arith.constant 0 : index
    %135 = vector.load %arg26[%c1_129, %c0_130, %c0_131] : memref<3x1x32xf32, #tpu.memory_space<vmem>>, vector<1x1x32xf32>
    %136 = vector.shape_cast %135 : vector<1x1x32xf32> to vector<1x32xf32>
    %137 = vector.broadcast %136 : vector<1x32xf32> to vector<10x32xf32>
    %138 = arith.addf %134, %137 : vector<10x32xf32>
    %cst_132 = arith.constant 0.000000e+00 : f32
    %139 = vector.broadcast %cst_132 : f32 to vector<10x32xf32>
    %140 = arith.maximumf %138, %139 : vector<10x32xf32>
    %c1_133 = arith.constant 1 : index
    %c0_134 = arith.constant 0 : index
    %c0_135 = arith.constant 0 : index
    %141 = vector.load %arg27[%c1_133, %c0_134, %c0_135] : memref<3x32x32xf32, #tpu.memory_space<vmem>>, vector<1x32x32xf32>
    %142 = vector.shape_cast %141 : vector<1x32x32xf32> to vector<32x32xf32>
    %cst_136 = arith.constant dense<0.000000e+00> : vector<10x32xf32>
    %143 = tpu.matmul %140, %142, %cst_136 {dimension_numbers = #tpu.dot_dimension_numbers<[1], [0], [0], [1], [0, 0, 1, 1], [], []>} : vector<10x32xf32>, vector<32x32xf32>, vector<10x32xf32> -> vector<10x32xf32>
    %c1_137 = arith.constant 1 : index
    %c0_138 = arith.constant 0 : index
    %c0_139 = arith.constant 0 : index
    %144 = vector.load %arg28[%c1_137, %c0_138, %c0_139] : memref<3x1x32xf32, #tpu.memory_space<vmem>>, vector<1x1x32xf32>
    %145 = vector.shape_cast %144 : vector<1x1x32xf32> to vector<1x32xf32>
    %146 = vector.broadcast %145 : vector<1x32xf32> to vector<10x32xf32>
    %147 = arith.addf %143, %146 : vector<10x32xf32>
    %cst_140 = arith.constant 0.000000e+00 : f32
    %148 = vector.broadcast %cst_140 : f32 to vector<10x32xf32>
    %149 = arith.maximumf %147, %148 : vector<10x32xf32>
    %cst_141 = arith.constant dense<0.000000e+00> : vector<10x32xf32>
    %150 = tpu.matmul %9, %149, %cst_141 {dimension_numbers = #tpu.dot_dimension_numbers<[1], [0], [0], [1], [0, 0, 1, 1], [], []>} : vector<10x10xf32>, vector<10x32xf32>, vector<10x32xf32> -> vector<10x32xf32>
    %cst_142 = arith.constant dense<0.000000e+00> : vector<10x32xf32>
    %151 = tpu.matmul %11, %149, %cst_142 {dimension_numbers = #tpu.dot_dimension_numbers<[1], [0], [0], [1], [0, 0, 1, 1], [], []>} : vector<10x10xf32>, vector<10x32xf32>, vector<10x32xf32> -> vector<10x32xf32>
    %c2 = arith.constant 2 : index
    %c0_143 = arith.constant 0 : index
    %c0_144 = arith.constant 0 : index
    %152 = vector.load %arg15[%c2, %c0_143, %c0_144] : memref<3x32x32xf32, #tpu.memory_space<vmem>>, vector<1x32x32xf32>
    %153 = vector.shape_cast %152 : vector<1x32x32xf32> to vector<32x32xf32>
    %cst_145 = arith.constant dense<0.000000e+00> : vector<10x32xf32>
    %154 = tpu.matmul %150, %153, %cst_145 {dimension_numbers = #tpu.dot_dimension_numbers<[1], [0], [0], [1], [0, 0, 1, 1], [], []>} : vector<10x32xf32>, vector<32x32xf32>, vector<10x32xf32> -> vector<10x32xf32>
    %c2_146 = arith.constant 2 : index
    %c0_147 = arith.constant 0 : index
    %c0_148 = arith.constant 0 : index
    %155 = vector.load %arg16[%c2_146, %c0_147, %c0_148] : memref<3x32x32xf32, #tpu.memory_space<vmem>>, vector<1x32x32xf32>
    %156 = vector.shape_cast %155 : vector<1x32x32xf32> to vector<32x32xf32>
    %cst_149 = arith.constant dense<0.000000e+00> : vector<10x32xf32>
    %157 = tpu.matmul %119, %156, %cst_149 {dimension_numbers = #tpu.dot_dimension_numbers<[1], [0], [0], [1], [0, 0, 1, 1], [], []>} : vector<10x32xf32>, vector<32x32xf32>, vector<10x32xf32> -> vector<10x32xf32>
    %158 = arith.addf %154, %157 : vector<10x32xf32>
    %c2_150 = arith.constant 2 : index
    %c0_151 = arith.constant 0 : index
    %c0_152 = arith.constant 0 : index
    %159 = vector.load %arg17[%c2_150, %c0_151, %c0_152] : memref<3x32x32xf32, #tpu.memory_space<vmem>>, vector<1x32x32xf32>
    %160 = vector.shape_cast %159 : vector<1x32x32xf32> to vector<32x32xf32>
    %cst_153 = arith.constant dense<0.000000e+00> : vector<10x32xf32>
    %161 = tpu.matmul %151, %160, %cst_153 {dimension_numbers = #tpu.dot_dimension_numbers<[1], [0], [0], [1], [0, 0, 1, 1], [], []>} : vector<10x32xf32>, vector<32x32xf32>, vector<10x32xf32> -> vector<10x32xf32>
    %162 = arith.addf %158, %161 : vector<10x32xf32>
    %c2_154 = arith.constant 2 : index
    %c0_155 = arith.constant 0 : index
    %c0_156 = arith.constant 0 : index
    %163 = vector.load %arg18[%c2_154, %c0_155, %c0_156] : memref<3x1x32xf32, #tpu.memory_space<vmem>>, vector<1x1x32xf32>
    %164 = vector.shape_cast %163 : vector<1x1x32xf32> to vector<1x32xf32>
    %165 = vector.broadcast %164 : vector<1x32xf32> to vector<10x32xf32>
    %166 = arith.addf %162, %165 : vector<10x32xf32>
    %cst_157 = arith.constant 0.000000e+00 : f32
    %167 = vector.broadcast %cst_157 : f32 to vector<10x32xf32>
    %168 = arith.maximumf %166, %167 : vector<10x32xf32>
    %c2_158 = arith.constant 2 : index
    %c0_159 = arith.constant 0 : index
    %c0_160 = arith.constant 0 : index
    %169 = vector.load %arg19[%c2_158, %c0_159, %c0_160] : memref<3x32x32xf32, #tpu.memory_space<vmem>>, vector<1x32x32xf32>
    %170 = vector.shape_cast %169 : vector<1x32x32xf32> to vector<32x32xf32>
    %cst_161 = arith.constant dense<0.000000e+00> : vector<10x32xf32>
    %171 = tpu.matmul %168, %170, %cst_161 {dimension_numbers = #tpu.dot_dimension_numbers<[1], [0], [0], [1], [0, 0, 1, 1], [], []>} : vector<10x32xf32>, vector<32x32xf32>, vector<10x32xf32> -> vector<10x32xf32>
    %c2_162 = arith.constant 2 : index
    %c0_163 = arith.constant 0 : index
    %c0_164 = arith.constant 0 : index
    %172 = vector.load %arg20[%c2_162, %c0_163, %c0_164] : memref<3x1x32xf32, #tpu.memory_space<vmem>>, vector<1x1x32xf32>
    %173 = vector.shape_cast %172 : vector<1x1x32xf32> to vector<1x32xf32>
    %174 = vector.broadcast %173 : vector<1x32xf32> to vector<10x32xf32>
    %175 = arith.addf %171, %174 : vector<10x32xf32>
    %cst_165 = arith.constant 0.000000e+00 : f32
    %176 = vector.broadcast %cst_165 : f32 to vector<10x32xf32>
    %177 = arith.maximumf %175, %176 : vector<10x32xf32>
    %c2_166 = arith.constant 2 : index
    %c0_167 = arith.constant 0 : index
    %c0_168 = arith.constant 0 : index
    %178 = vector.load %arg21[%c2_166, %c0_167, %c0_168] : memref<3x32x32xf32, #tpu.memory_space<vmem>>, vector<1x32x32xf32>
    %179 = vector.shape_cast %178 : vector<1x32x32xf32> to vector<32x32xf32>
    %cst_169 = arith.constant dense<0.000000e+00> : vector<10x32xf32>
    %180 = tpu.matmul %168, %179, %cst_169 {dimension_numbers = #tpu.dot_dimension_numbers<[1], [0], [0], [1], [0, 0, 1, 1], [], []>} : vector<10x32xf32>, vector<32x32xf32>, vector<10x32xf32> -> vector<10x32xf32>
    %c2_170 = arith.constant 2 : index
    %c0_171 = arith.constant 0 : index
    %c0_172 = arith.constant 0 : index
    %181 = vector.load %arg22[%c2_170, %c0_171, %c0_172] : memref<3x1x32xf32, #tpu.memory_space<vmem>>, vector<1x1x32xf32>
    %182 = vector.shape_cast %181 : vector<1x1x32xf32> to vector<1x32xf32>
    %183 = vector.broadcast %182 : vector<1x32xf32> to vector<10x32xf32>
    %184 = arith.addf %180, %183 : vector<10x32xf32>
    %cst_173 = arith.constant 0.000000e+00 : f32
    %185 = vector.broadcast %cst_173 : f32 to vector<10x32xf32>
    %186 = arith.maximumf %184, %185 : vector<10x32xf32>
    %c2_174 = arith.constant 2 : index
    %c0_175 = arith.constant 0 : index
    %c0_176 = arith.constant 0 : index
    %187 = vector.load %arg23[%c2_174, %c0_175, %c0_176] : memref<3x32x32xf32, #tpu.memory_space<vmem>>, vector<1x32x32xf32>
    %188 = vector.shape_cast %187 : vector<1x32x32xf32> to vector<32x32xf32>
    %cst_177 = arith.constant dense<0.000000e+00> : vector<10x32xf32>
    %189 = tpu.matmul %168, %188, %cst_177 {dimension_numbers = #tpu.dot_dimension_numbers<[1], [0], [0], [1], [0, 0, 1, 1], [], []>} : vector<10x32xf32>, vector<32x32xf32>, vector<10x32xf32> -> vector<10x32xf32>
    %c2_178 = arith.constant 2 : index
    %c0_179 = arith.constant 0 : index
    %c0_180 = arith.constant 0 : index
    %190 = vector.load %arg24[%c2_178, %c0_179, %c0_180] : memref<3x1x32xf32, #tpu.memory_space<vmem>>, vector<1x1x32xf32>
    %191 = vector.shape_cast %190 : vector<1x1x32xf32> to vector<1x32xf32>
    %192 = vector.broadcast %191 : vector<1x32xf32> to vector<10x32xf32>
    %193 = arith.addf %189, %192 : vector<10x32xf32>
    %cst_181 = arith.constant 0.000000e+00 : f32
    %194 = vector.broadcast %cst_181 : f32 to vector<10x32xf32>
    %195 = arith.maximumf %193, %194 : vector<10x32xf32>
    %cst_182 = arith.constant dense<0.000000e+00> : vector<10x32xf32>
    %196 = tpu.matmul %13, %177, %cst_182 {dimension_numbers = #tpu.dot_dimension_numbers<[1], [0], [0], [1], [0, 0, 1, 1], [], []>} : vector<10x10xf32>, vector<10x32xf32>, vector<10x32xf32> -> vector<10x32xf32>
    %cst_183 = arith.constant dense<0.000000e+00> : vector<10x32xf32>
    %197 = tpu.matmul %15, %195, %cst_183 {dimension_numbers = #tpu.dot_dimension_numbers<[1], [0], [0], [1], [0, 0, 1, 1], [], []>} : vector<10x10xf32>, vector<10x32xf32>, vector<10x32xf32> -> vector<10x32xf32>
    %198 = arith.addf %196, %197 : vector<10x32xf32>
    %c2_184 = arith.constant 2 : index
    %c0_185 = arith.constant 0 : index
    %c0_186 = arith.constant 0 : index
    %199 = vector.load %arg25[%c2_184, %c0_185, %c0_186] : memref<3x32x32xf32, #tpu.memory_space<vmem>>, vector<1x32x32xf32>
    %200 = vector.shape_cast %199 : vector<1x32x32xf32> to vector<32x32xf32>
    %cst_187 = arith.constant dense<0.000000e+00> : vector<10x32xf32>
    %201 = tpu.matmul %198, %200, %cst_187 {dimension_numbers = #tpu.dot_dimension_numbers<[1], [0], [0], [1], [0, 0, 1, 1], [], []>} : vector<10x32xf32>, vector<32x32xf32>, vector<10x32xf32> -> vector<10x32xf32>
    %c2_188 = arith.constant 2 : index
    %c0_189 = arith.constant 0 : index
    %c0_190 = arith.constant 0 : index
    %202 = vector.load %arg26[%c2_188, %c0_189, %c0_190] : memref<3x1x32xf32, #tpu.memory_space<vmem>>, vector<1x1x32xf32>
    %203 = vector.shape_cast %202 : vector<1x1x32xf32> to vector<1x32xf32>
    %204 = vector.broadcast %203 : vector<1x32xf32> to vector<10x32xf32>
    %205 = arith.addf %201, %204 : vector<10x32xf32>
    %cst_191 = arith.constant 0.000000e+00 : f32
    %206 = vector.broadcast %cst_191 : f32 to vector<10x32xf32>
    %207 = arith.maximumf %205, %206 : vector<10x32xf32>
    %c2_192 = arith.constant 2 : index
    %c0_193 = arith.constant 0 : index
    %c0_194 = arith.constant 0 : index
    %208 = vector.load %arg27[%c2_192, %c0_193, %c0_194] : memref<3x32x32xf32, #tpu.memory_space<vmem>>, vector<1x32x32xf32>
    %209 = vector.shape_cast %208 : vector<1x32x32xf32> to vector<32x32xf32>
    %cst_195 = arith.constant dense<0.000000e+00> : vector<10x32xf32>
    %210 = tpu.matmul %207, %209, %cst_195 {dimension_numbers = #tpu.dot_dimension_numbers<[1], [0], [0], [1], [0, 0, 1, 1], [], []>} : vector<10x32xf32>, vector<32x32xf32>, vector<10x32xf32> -> vector<10x32xf32>
    %c2_196 = arith.constant 2 : index
    %c0_197 = arith.constant 0 : index
    %c0_198 = arith.constant 0 : index
    %211 = vector.load %arg28[%c2_196, %c0_197, %c0_198] : memref<3x1x32xf32, #tpu.memory_space<vmem>>, vector<1x1x32xf32>
    %212 = vector.shape_cast %211 : vector<1x1x32xf32> to vector<1x32xf32>
    %213 = vector.broadcast %212 : vector<1x32xf32> to vector<10x32xf32>
    %214 = arith.addf %210, %213 : vector<10x32xf32>
    %cst_199 = arith.constant 0.000000e+00 : f32
    %215 = vector.broadcast %cst_199 : f32 to vector<10x32xf32>
    %216 = arith.maximumf %214, %215 : vector<10x32xf32>
    %217 = arith.mulf %216, %216 : vector<10x32xf32>
    %cst_200 = arith.constant dense<0.000000e+00> : vector<10xf32>
    %218 = vector.multi_reduction <add>, %217, %cst_200 [1] : vector<10x32xf32> to vector<10xf32>
    %219 = vector.shape_cast %218 : vector<10xf32> to vector<10x1xf32>
    %cst_201 = arith.constant 1.000000e-24 : f32
    %220 = vector.broadcast %cst_201 : f32 to vector<10x1xf32>
    %221 = arith.maximumf %219, %220 : vector<10x1xf32>
    %222 = math.rsqrt %221 : vector<10x1xf32>
    %223 = vector.broadcast %222 : vector<10x1xf32> to vector<10x32xf32>
    %224 = arith.mulf %216, %223 : vector<10x32xf32>
    %225 = arith.mulf %186, %186 : vector<10x32xf32>
    %cst_202 = arith.constant dense<0.000000e+00> : vector<10xf32>
    %226 = vector.multi_reduction <add>, %225, %cst_202 [1] : vector<10x32xf32> to vector<10xf32>
    %227 = vector.shape_cast %226 : vector<10xf32> to vector<10x1xf32>
    %cst_203 = arith.constant 1.000000e-24 : f32
    %228 = vector.broadcast %cst_203 : f32 to vector<10x1xf32>
    %229 = arith.maximumf %227, %228 : vector<10x1xf32>
    %230 = math.rsqrt %229 : vector<10x1xf32>
    %231 = vector.broadcast %230 : vector<10x1xf32> to vector<10x32xf32>
    %232 = arith.mulf %186, %231 : vector<10x32xf32>
    %c0_204 = arith.constant 0 : index
    %c0_205 = arith.constant 0 : index
    %233 = vector.load %arg14[%c0_204, %c0_205] : memref<32x128xf32, #tpu.memory_space<vmem>>, vector<32x128xf32>
    %cst_206 = arith.constant dense<0.000000e+00> : vector<10x128xf32>
    %234 = tpu.matmul %224, %233, %cst_206 {dimension_numbers = #tpu.dot_dimension_numbers<[1], [0], [0], [1], [0, 0, 1, 1], [], []>} : vector<10x32xf32>, vector<32x128xf32>, vector<10x128xf32> -> vector<10x128xf32>
    %c0_207 = arith.constant 0 : index
    %c0_208 = arith.constant 0 : index
    %235 = vector.load %arg14[%c0_207, %c0_208] : memref<32x128xf32, #tpu.memory_space<vmem>>, vector<32x128xf32>
    %cst_209 = arith.constant dense<0.000000e+00> : vector<10x128xf32>
    %236 = tpu.matmul %232, %235, %cst_209 {dimension_numbers = #tpu.dot_dimension_numbers<[1], [0], [0], [1], [0, 0, 1, 1], [], []>} : vector<10x32xf32>, vector<32x128xf32>, vector<10x128xf32> -> vector<10x128xf32>
    %c0_210 = arith.constant 0 : index
    %c0_211 = arith.constant 0 : index
    %c0_212 = arith.constant 0 : index
    %237 = vector.load %arg7[%c0_210, %c0_211, %c0_212] : memref<1x20x10xf32, #tpu.memory_space<vmem>>, vector<1x20x10xf32>
    %238 = vector.shape_cast %237 : vector<1x20x10xf32> to vector<20x10xf32>
    %cst_213 = arith.constant dense<0.000000e+00> : vector<20x128xf32>
    %239 = tpu.matmul %238, %234, %cst_213 {dimension_numbers = #tpu.dot_dimension_numbers<[1], [0], [0], [1], [0, 0, 1, 1], [], []>} : vector<20x10xf32>, vector<10x128xf32>, vector<20x128xf32> -> vector<20x128xf32>
    %c0_214 = arith.constant 0 : index
    %c0_215 = arith.constant 0 : index
    %c0_216 = arith.constant 0 : index
    %240 = vector.load %arg8[%c0_214, %c0_215, %c0_216] : memref<1x20x10xf32, #tpu.memory_space<vmem>>, vector<1x20x10xf32>
    %241 = vector.shape_cast %240 : vector<1x20x10xf32> to vector<20x10xf32>
    %cst_217 = arith.constant dense<0.000000e+00> : vector<20x128xf32>
    %242 = tpu.matmul %241, %236, %cst_217 {dimension_numbers = #tpu.dot_dimension_numbers<[1], [0], [0], [1], [0, 0, 1, 1], [], []>} : vector<20x10xf32>, vector<10x128xf32>, vector<20x128xf32> -> vector<20x128xf32>
    %243 = arith.addf %239, %242 : vector<20x128xf32>
    %c0_218 = arith.constant 0 : index
    %c0_219 = arith.constant 0 : index
    %c0_220 = arith.constant 0 : index
    %244 = vector.load %arg9[%c0_218, %c0_219, %c0_220] : memref<1x20x128xf32, #tpu.memory_space<vmem>>, vector<1x20x128xf32>
    %245 = vector.shape_cast %244 : vector<1x20x128xf32> to vector<20x128xf32>
    %c0_221 = arith.constant 0 : index
    %c0_222 = arith.constant 0 : index
    %246 = vector.load %arg12[%c0_221, %c0_222] : memref<1x1xf32, #tpu.memory_space<vmem>>, vector<1x1xf32>
    %247 = vector.broadcast %246 : vector<1x1xf32> to vector<20x128xf32>
    %248 = arith.mulf %247, %243 : vector<20x128xf32>
    %249 = arith.addf %245, %248 : vector<20x128xf32>
    %c0_223 = arith.constant 0 : index
    %c0_224 = arith.constant 0 : index
    %c0_225 = arith.constant 0 : index
    %250 = vector.load %arg10[%c0_223, %c0_224, %c0_225] : memref<1x1x128xf32, #tpu.memory_space<vmem>>, vector<1x1x128xf32>
    %251 = vector.shape_cast %250 : vector<1x1x128xf32> to vector<1x128xf32>
    %c0_226 = arith.constant 0 : index
    %c0_227 = arith.constant 0 : index
    %c0_228 = arith.constant 0 : index
    %252 = vector.load %arg11[%c0_226, %c0_227, %c0_228] : memref<1x1x128xf32, #tpu.memory_space<vmem>>, vector<1x1x128xf32>
    %253 = vector.shape_cast %252 : vector<1x1x128xf32> to vector<1x128xf32>
    %254 = vector.shape_cast %253 : vector<1x128xf32> to vector<1x128xf32>
    %255 = vector.broadcast %254 : vector<1x128xf32> to vector<56x128xf32>
    %256 = tpu.concatenate %251, %249, %255 in 0 : vector<1x128xf32>, vector<20x128xf32>, vector<56x128xf32> -> vector<77x128xf32>
    %c0_229 = arith.constant 0 : index
    %c0_230 = arith.constant 0 : index
    %c0_231 = arith.constant 0 : index
    %257 = vector.load %arg29[%c0_229, %c0_230, %c0_231] : memref<1x77x128xf32, #tpu.memory_space<vmem>>, vector<1x77x128xf32>
    %258 = vector.shape_cast %257 : vector<1x77x128xf32> to vector<77x128xf32>
    %259 = vector.shape_cast %256 : vector<77x128xf32> to vector<1x77x128xf32>
    tpu.vector_store %arg29[%c0_229, %c0_230, %c0_231], %259 {strides = array<i32>} : memref<1x77x128xf32, #tpu.memory_space<vmem>>, vector<1x77x128xf32>,
    return
  }
  func.func @transform_0(%arg0: i32) -> (i32, i32, i32) {
    %c0_i32 = arith.constant 0 : i32
    %c0_i32_0 = arith.constant 0 : i32
    %c0_i32_1 = arith.constant 0 : i32
    return %arg0, %c0_i32, %c0_i32_0 : i32, i32, i32
  }
  func.func @transform_1(%arg0: i32) -> (i32, i32, i32) {
    %c0_i32 = arith.constant 0 : i32
    %c0_i32_0 = arith.constant 0 : i32
    %c0_i32_1 = arith.constant 0 : i32
    return %arg0, %c0_i32, %c0_i32_0 : i32, i32, i32
  }
  func.func @transform_2(%arg0: i32) -> (i32, i32, i32) {
    %c0_i32 = arith.constant 0 : i32
    %c0_i32_0 = arith.constant 0 : i32
    %c0_i32_1 = arith.constant 0 : i32
    return %arg0, %c0_i32, %c0_i32_0 : i32, i32, i32
  }
  func.func @transform_3(%arg0: i32) -> (i32, i32, i32) {
    %c0_i32 = arith.constant 0 : i32
    %c0_i32_0 = arith.constant 0 : i32
    %c0_i32_1 = arith.constant 0 : i32
    return %arg0, %c0_i32, %c0_i32_0 : i32, i32, i32
  }
  func.func @transform_4(%arg0: i32) -> (i32, i32, i32) {
    %c0_i32 = arith.constant 0 : i32
    %c0_i32_0 = arith.constant 0 : i32
    %c0_i32_1 = arith.constant 0 : i32
    return %arg0, %c0_i32, %c0_i32_0 : i32, i32, i32
  }
  func.func @transform_5(%arg0: i32) -> (i32, i32, i32) {
    %c0_i32 = arith.constant 0 : i32
    %c0_i32_0 = arith.constant 0 : i32
    %c0_i32_1 = arith.constant 0 : i32
    return %arg0, %c0_i32, %c0_i32_0 : i32, i32, i32
  }
  func.func @transform_6(%arg0: i32) -> (i32, i32, i32) {
    %c0_i32 = arith.constant 0 : i32
    %c0_i32_0 = arith.constant 0 : i32
    %c0_i32_1 = arith.constant 0 : i32
    return %arg0, %c0_i32, %c0_i32_0 : i32, i32, i32
  }
  func.func @transform_7(%arg0: i32) -> (i32, i32, i32) {
    %c0_i32 = arith.constant 0 : i32
    %c0_i32_0 = arith.constant 0 : i32
    %c0_i32_1 = arith.constant 0 : i32
    return %arg0, %c0_i32, %c0_i32_0 : i32, i32, i32
  }
  func.func @transform_8(%arg0: i32) -> (i32, i32, i32) {
    %c0_i32 = arith.constant 0 : i32
    %c0_i32_0 = arith.constant 0 : i32
    %c0_i32_1 = arith.constant 0 : i32
    return %arg0, %c0_i32, %c0_i32_0 : i32, i32, i32
  }
  func.func @transform_9(%arg0: i32) -> (i32, i32, i32) {
    %c0_i32 = arith.constant 0 : i32
    %c0_i32_0 = arith.constant 0 : i32
    %c0_i32_1 = arith.constant 0 : i32
    return %arg0, %c0_i32, %c0_i32_0 : i32, i32, i32
  }
  func.func @transform_10(%arg0: i32) -> (i32, i32, i32) {
    %c0_i32 = arith.constant 0 : i32
    %c0_i32_0 = arith.constant 0 : i32
    %c0_i32_1 = arith.constant 0 : i32
    return %arg0, %c0_i32, %c0_i32_0 : i32, i32, i32
  }
  func.func @transform_11(%arg0: i32) -> (i32, i32) {
    %c0_i32 = arith.constant 0 : i32
    %c0_i32_0 = arith.constant 0 : i32
    %c0_i32_1 = arith.constant 0 : i32
    return %c0_i32, %c0_i32_0 : i32, i32
  }
  func.func @transform_12(%arg0: i32) -> (i32, i32) {
    %c0_i32 = arith.constant 0 : i32
    %c0_i32_0 = arith.constant 0 : i32
    %c0_i32_1 = arith.constant 0 : i32
    return %c0_i32, %c0_i32_0 : i32, i32
  }
  func.func @transform_13(%arg0: i32) -> (i32, i32) {
    %c0_i32 = arith.constant 0 : i32
    %c0_i32_0 = arith.constant 0 : i32
    %c0_i32_1 = arith.constant 0 : i32
    return %c0_i32, %c0_i32_0 : i32, i32
  }
  func.func @transform_14(%arg0: i32) -> (i32, i32, i32) {
    %c0_i32 = arith.constant 0 : i32
    %c0_i32_0 = arith.constant 0 : i32
    %c0_i32_1 = arith.constant 0 : i32
    %c0_i32_2 = arith.constant 0 : i32
    return %c0_i32, %c0_i32_0, %c0_i32_1 : i32, i32, i32
  }
  func.func @transform_15(%arg0: i32) -> (i32, i32, i32) {
    %c0_i32 = arith.constant 0 : i32
    %c0_i32_0 = arith.constant 0 : i32
    %c0_i32_1 = arith.constant 0 : i32
    %c0_i32_2 = arith.constant 0 : i32
    return %c0_i32, %c0_i32_0, %c0_i32_1 : i32, i32, i32
  }
  func.func @transform_16(%arg0: i32) -> (i32, i32, i32) {
    %c0_i32 = arith.constant 0 : i32
    %c0_i32_0 = arith.constant 0 : i32
    %c0_i32_1 = arith.constant 0 : i32
    %c0_i32_2 = arith.constant 0 : i32
    return %c0_i32, %c0_i32_0, %c0_i32_1 : i32, i32, i32
  }
  func.func @transform_17(%arg0: i32) -> (i32, i32, i32) {
    %c0_i32 = arith.constant 0 : i32
    %c0_i32_0 = arith.constant 0 : i32
    %c0_i32_1 = arith.constant 0 : i32
    %c0_i32_2 = arith.constant 0 : i32
    return %c0_i32, %c0_i32_0, %c0_i32_1 : i32, i32, i32
  }
  func.func @transform_18(%arg0: i32) -> (i32, i32, i32) {
    %c0_i32 = arith.constant 0 : i32
    %c0_i32_0 = arith.constant 0 : i32
    %c0_i32_1 = arith.constant 0 : i32
    %c0_i32_2 = arith.constant 0 : i32
    return %c0_i32, %c0_i32_0, %c0_i32_1 : i32, i32, i32
  }
  func.func @transform_19(%arg0: i32) -> (i32, i32, i32) {
    %c0_i32 = arith.constant 0 : i32
    %c0_i32_0 = arith.constant 0 : i32
    %c0_i32_1 = arith.constant 0 : i32
    %c0_i32_2 = arith.constant 0 : i32
    return %c0_i32, %c0_i32_0, %c0_i32_1 : i32, i32, i32
  }
  func.func @transform_20(%arg0: i32) -> (i32, i32, i32) {
    %c0_i32 = arith.constant 0 : i32
    %c0_i32_0 = arith.constant 0 : i32
    %c0_i32_1 = arith.constant 0 : i32
    %c0_i32_2 = arith.constant 0 : i32
    return %c0_i32, %c0_i32_0, %c0_i32_1 : i32, i32, i32
  }
  func.func @transform_21(%arg0: i32) -> (i32, i32, i32) {
    %c0_i32 = arith.constant 0 : i32
    %c0_i32_0 = arith.constant 0 : i32
    %c0_i32_1 = arith.constant 0 : i32
    %c0_i32_2 = arith.constant 0 : i32
    return %c0_i32, %c0_i32_0, %c0_i32_1 : i32, i32, i32
  }
  func.func @transform_22(%arg0: i32) -> (i32, i32, i32) {
    %c0_i32 = arith.constant 0 : i32
    %c0_i32_0 = arith.constant 0 : i32
    %c0_i32_1 = arith.constant 0 : i32
    %c0_i32_2 = arith.constant 0 : i32
    return %c0_i32, %c0_i32_0, %c0_i32_1 : i32, i32, i32
  }
  func.func @transform_23(%arg0: i32) -> (i32, i32, i32) {
    %c0_i32 = arith.constant 0 : i32
    %c0_i32_0 = arith.constant 0 : i32
    %c0_i32_1 = arith.constant 0 : i32
    %c0_i32_2 = arith.constant 0 : i32
    return %c0_i32, %c0_i32_0, %c0_i32_1 : i32, i32, i32
  }
  func.func @transform_24(%arg0: i32) -> (i32, i32, i32) {
    %c0_i32 = arith.constant 0 : i32
    %c0_i32_0 = arith.constant 0 : i32
    %c0_i32_1 = arith.constant 0 : i32
    %c0_i32_2 = arith.constant 0 : i32
    return %c0_i32, %c0_i32_0, %c0_i32_1 : i32, i32, i32
  }
  func.func @transform_25(%arg0: i32) -> (i32, i32, i32) {
    %c0_i32 = arith.constant 0 : i32
    %c0_i32_0 = arith.constant 0 : i32
    %c0_i32_1 = arith.constant 0 : i32
    %c0_i32_2 = arith.constant 0 : i32
    return %c0_i32, %c0_i32_0, %c0_i32_1 : i32, i32, i32
  }
  func.func @transform_26(%arg0: i32) -> (i32, i32, i32) {
    %c0_i32 = arith.constant 0 : i32
    %c0_i32_0 = arith.constant 0 : i32
    %c0_i32_1 = arith.constant 0 : i32
    %c0_i32_2 = arith.constant 0 : i32
    return %c0_i32, %c0_i32_0, %c0_i32_1 : i32, i32, i32
  }
  func.func @transform_27(%arg0: i32) -> (i32, i32, i32) {
    %c0_i32 = arith.constant 0 : i32
    %c0_i32_0 = arith.constant 0 : i32
    %c0_i32_1 = arith.constant 0 : i32
    %c0_i32_2 = arith.constant 0 : i32
    return %c0_i32, %c0_i32_0, %c0_i32_1 : i32, i32, i32
  }
  func.func @transform_28(%arg0: i32) -> (i32, i32, i32) {
    %c0_i32 = arith.constant 0 : i32
    %c0_i32_0 = arith.constant 0 : i32
    %c0_i32_1 = arith.constant 0 : i32
    return %arg0, %c0_i32, %c0_i32_0 : i32, i32, i32
  }
}

</mosaic_0001>

<llo_original>
// kernel: tpu_custom_call.1
$region0: #{tpu_custom_call.1}
  #allocation0 [shape = 'u32[]', space=smem, size = 0x4, offset = 0x4, fixed_abs, tag = 'smem constant byte address 0x4 - core index']
  #allocation1 [shape = 'u32[144,128]{1,0:T(1,128)}', space=vmem, size = 0x12000, scoped, tag = 'internal scratch']
  #allocation2 [shape = 'f32[1,1]{1,0:T(1,128)S(1)}', space=vmem, size = 0x200, scoped, tag = 'scoped memory for tpu_custom_call.1']
  %s0 = inlined_call_operand.vmem [shape: f32[2,10,128], index: 0, kind: input, shape index: {}]
  %s1 = inlined_call_operand.vmem [shape: f32[2,10,128], index: 1, kind: input, shape index: {}]
  %s2 = inlined_call_operand.vmem [shape: f32[2,10,10], index: 2, kind: input, shape index: {}]
  %s3 = inlined_call_operand.vmem [shape: f32[2,10,10], index: 3, kind: input, shape index: {}]
  %s4 = inlined_call_operand.vmem [shape: f32[2,10,10], index: 4, kind: input, shape index: {}]
  %s5 = inlined_call_operand.vmem [shape: f32[2,10,10], index: 5, kind: input, shape index: {}]
  %s6 = inlined_call_operand.vmem [shape: f32[2,20,10], index: 6, kind: input, shape index: {}]
  %s7 = inlined_call_operand.vmem [shape: f32[2,20,10], index: 7, kind: input, shape index: {}]
  %s8 = inlined_call_operand.vmem [shape: f32[2,20,128], index: 8, kind: input, shape index: {}]
  %s9 = inlined_call_operand.hbm [shape: f32[2,1,128], index: 9, kind: input, shape index: {}]
  %s10 = inlined_call_operand.hbm [shape: f32[2,1,128], index: 10, kind: input, shape index: {}]
  %s11 = inlined_call_operand.<no memory space> [shape: f32[1,1], index: 11, kind: input, shape index: {}]
  %s12 = inlined_call_operand.vmem [shape: f32[128,32], index: 12, kind: input, shape index: {}]
  %s13 = inlined_call_operand.hbm [shape: f32[32,128], index: 13, kind: input, shape index: {}]
  %s14 = inlined_call_operand.vmem [shape: f32[3,32,32], index: 14, kind: input, shape index: {}]
  %s15 = inlined_call_operand.vmem [shape: f32[3,32,32], index: 15, kind: input, shape index: {}]
  %s16 = inlined_call_operand.vmem [shape: f32[3,32,32], index: 16, kind: input, shape index: {}]
  %s17 = inlined_call_operand.vmem [shape: f32[3,1,32], index: 17, kind: input, shape index: {}]
  %s18 = inlined_call_operand.vmem [shape: f32[3,32,32], index: 18, kind: input, shape index: {}]
  %s19 = inlined_call_operand.vmem [shape: f32[3,1,32], index: 19, kind: input, shape index: {}]
  %s20 = inlined_call_operand.vmem [shape: f32[3,32,32], index: 20, kind: input, shape index: {}]
  %s21 = inlined_call_operand.vmem [shape: f32[3,1,32], index: 21, kind: input, shape index: {}]
  %s22 = inlined_call_operand.vmem [shape: f32[3,32,32], index: 22, kind: input, shape index: {}]
  %s23 = inlined_call_operand.vmem [shape: f32[3,1,32], index: 23, kind: input, shape index: {}]
  %s24 = inlined_call_operand.vmem [shape: f32[3,32,32], index: 24, kind: input, shape index: {}]
  %s25 = inlined_call_operand.vmem [shape: f32[3,1,32], index: 25, kind: input, shape index: {}]
  %s26 = inlined_call_operand.hbm [shape: f32[3,32,32], index: 26, kind: input, shape index: {}]
  %s27 = inlined_call_operand.vmem [shape: f32[3,1,32], index: 27, kind: input, shape index: {}]
  %s28 = inlined_call_operand.vmem [shape: f32[2,77,128], index: 28, kind: output, shape index: {}]
  %s29 = sld [smem:[#allocation0]]
  $region161: #{tpu_custom_call.1} parent=0
    _
  %s31 = ssub.s32 1, %s29
  %s32 = scalar_select 0, %s31, %s29
  %v33 = vstv %s11
  %34 = vst [vmem:[#allocation2] sm:$0x1] %v33
  $region1: #{tpu_custom_call.1} parent=0
    #allocation3 [shape = 'u8[1024]{0}', space=vmem, size = 0x400, scoped, tag = 'input window, operand 9']
    #allocation4 [shape = 's32[2]{0}', space=sflag, size = 0x8, scoped, tag = 'scoped memory for tpu_custom_call.1']
    #allocation5 [shape = 'u8[1024]{0}', space=vmem, size = 0x400, scoped, tag = 'input window, operand 10']
    #allocation6 [shape = 's32[2]{0}', space=sflag, size = 0x8, scoped, tag = 'scoped memory for tpu_custom_call.1']
    #allocation7 [shape = 'u8[16384]{0}', space=vmem, size = 0x4000, scoped, tag = 'input window, operand 13, single buffered']
    #allocation8 [shape = 'u8[49152]{0}', space=vmem, size = 0xc000, scoped, tag = 'input window, operand 26, single buffered']
    #allocation9 [shape = 's32[1]{0}', space=sflag, size = 0x4, scoped, tag = 'scoped memory for tpu_custom_call.1']
    %35 = vsyncpa [#allocation4], 0
    %s36 = scalar_lea.sflag [#allocation4], 1
    %37 = vsyncpa %s36, 0
    %38 = vsyncpa [#allocation6], 0
    %s39 = scalar_lea.sflag [#allocation6], 1
    %40 = vsyncpa %s39, 0
    %41 = vsyncpa [#allocation9], 0
    loop: start=0, step=1, limit=4
    $region2: #{tpu_custom_call.1} parent=1 // loop_pre_header
      _
    $region3: #{tpu_custom_call.1} parent=1 // loop_header
      %s43 = sphi 0, %s47
      %p44 = scmp.ge.s32.totalorder %s43, 4
      %s53 = sphi 0, %s55
      %s56 = sphi 0, %s53
      %s57 = sphi 0, %s56
      %s73 = sphi 0, %s57
      %s79 = sphi 0, %s81
      %s82 = sphi 0, %s79
      %s83 = sphi 0, %s82
      %s99 = sphi 0, %s83
      %s105 = sphi 0, %s107
      %s108 = sphi 0, %s105
      %s109 = sphi 0, %s108
      %s125 = sphi 0, %s109
      %s131 = sphi 0, %s133
      %s134 = sphi 0, %s131
      %s135 = sphi 0, %s134
      %s151 = sphi 0, %s135
      %s157 = sphi 0, %s159
      %s160 = sphi 0, %s157
      %s161 = sphi 0, %s160
      %s177 = sphi 0, %s161
      %s183 = sphi 0, %s185
      %s186 = sphi 0, %s183
      %s187 = sphi 0, %s186
      %s203 = sphi 0, %s187
      %s209 = sphi 0, %s211
      %s212 = sphi 0, %s209
      %s213 = sphi 0, %s212
      %s229 = sphi 0, %s213
      %s235 = sphi 0, %s237
      %s238 = sphi 0, %s235
      %s239 = sphi 0, %s238
      %s255 = sphi 0, %s239
      %s261 = sphi 0, %s263
      %s264 = sphi 0, %s261
      %s265 = sphi 0, %s264
      %s281 = sphi 0, %s265
      %s287 = sphi 0, %s289
      %s290 = sphi 0, %s287
      %s291 = sphi 0, %s290
      %s307 = sphi 0, %s291
      %s313 = sphi 0, %s315
      %s316 = sphi 0, %s313
      %s317 = sphi 0, %s316
      %s333 = sphi 0, %s317
      %s337 = sphi 0, %s337
      %s339 = sphi 0, %s337
      %s340 = sphi 0, %s339
      %s354 = sphi 0, %s340
      %s358 = sphi 0, %s358
      %s360 = sphi 0, %s358
      %s361 = sphi 0, %s360
      %s375 = sphi 0, %s361
      %s379 = sphi 0, %s379
      %s381 = sphi 0, %s379
      %s382 = sphi 0, %s381
      %s396 = sphi 0, %s382
      %s400 = sphi 0, %s400
      %s402 = sphi 0, %s400
      %s403 = sphi 0, %s402
      %s417 = sphi 0, %s403
      %s421 = sphi 0, %s421
      %s423 = sphi 0, %s421
      %s424 = sphi 0, %s423
      %s438 = sphi 0, %s424
      %s442 = sphi 0, %s442
      %s444 = sphi 0, %s442
      %s445 = sphi 0, %s444
      %s459 = sphi 0, %s445
      %s463 = sphi 0, %s463
      %s465 = sphi 0, %s463
      %s466 = sphi 0, %s465
      %s480 = sphi 0, %s466
      %s484 = sphi 0, %s484
      %s486 = sphi 0, %s484
      %s487 = sphi 0, %s486
      %s501 = sphi 0, %s487
      %s505 = sphi 0, %s505
      %s507 = sphi 0, %s505
      %s508 = sphi 0, %s507
      %s522 = sphi 0, %s508
      %s526 = sphi 0, %s526
      %s528 = sphi 0, %s526
      %s529 = sphi 0, %s528
      %s543 = sphi 0, %s529
      %s547 = sphi 0, %s547
      %s549 = sphi 0, %s547
      %s550 = sphi 0, %s549
      %s564 = sphi 0, %s550
      %s568 = sphi 0, %s568
      %s570 = sphi 0, %s568
      %s571 = sphi 0, %s570
      %s585 = sphi 0, %s571
      %s589 = sphi 0, %s589
      %s591 = sphi 0, %s589
      %s592 = sphi 0, %s591
      %s606 = sphi 0, %s592
      %s610 = sphi 0, %s610
      %s612 = sphi 0, %s610
      %s613 = sphi 0, %s612
      %s627 = sphi 0, %s613
      %s631 = sphi 0, %s631
      %s633 = sphi 0, %s631
      %s634 = sphi 0, %s633
      %s648 = sphi 0, %s634
      %s652 = sphi 0, %s652
      %s654 = sphi 0, %s652
      %s655 = sphi 0, %s654
      %s669 = sphi 0, %s655
      %s673 = sphi 0, %s673
      %s675 = sphi 0, %s673
      %s676 = sphi 0, %s675
      %s690 = sphi 0, %s676
      %s696 = sphi 0, %s698
      %s699 = sphi 0, %s696
      %s700 = sphi 0, %s699
      %s716 = sphi 0, %s700
    $region4: #{tpu_custom_call.1} parent=1 // loop_header_branch
      %46 = sbr.rel (%p44) target = $region8
    $region5: #{tpu_custom_call.1} parent=1 // loop_body
      %s48 = ssub.s32 %s43, 1
      %s49 = ssub.s32 %s43, 2
      %s50 = sadd.s32 %s43, 1
      %s51 = ssub.s32 %s43, %s50
      %p52 = scmp.eq.s32.totalorder %s51, 0
      %s54 = sadd.s32 %s53, 1
      %s55 = scalar_select %p52, %s53, %s54
      %p58 = pneg %p52
      %p59 = scmp.eq.s32.totalorder %s43, 1
      %p60 = por %p58, %p59
      %p61 = scmp.ne.s32.totalorder %s53, %s56
      %p62 = scmp.eq.s32.totalorder %s43, 0
      %p63 = por %p61, %p62
      %p64 = scmp.ne.s32.totalorder %s53, %s56
      %p65 = scmp.eq.s32.totalorder %s48, 1
      %p66 = por %p64, %p65
      %p67 = scmp.ne.s32.totalorder %s56, %s57
      %p68 = scmp.eq.s32.totalorder %s48, 0
      %p69 = por %p67, %p68
      %p70 = scmp.ne.s32.totalorder %s56, %s57
      %p71 = scmp.eq.s32.totalorder %s49, 1
      %p72 = por %p70, %p71
      %p74 = scmp.ne.s32.totalorder %s57, %s73
      %p75 = scmp.eq.s32.totalorder %s49, 0
      %p76 = por %p74, %p75
      %s77 = ssub.s32 %s43, %s50
      %p78 = scmp.eq.s32.totalorder %s77, 0
      %s80 = sadd.s32 %s79, 1
      %s81 = scalar_select %p78, %s79, %s80
      %p84 = pneg %p78
      %p85 = scmp.eq.s32.totalorder %s43, 1
      %p86 = por %p84, %p85
      %p87 = scmp.ne.s32.totalorder %s79, %s82
      %p88 = scmp.eq.s32.totalorder %s43, 0
      %p89 = por %p87, %p88
      %p90 = scmp.ne.s32.totalorder %s79, %s82
      %p91 = scmp.eq.s32.totalorder %s48, 1
      %p92 = por %p90, %p91
      %p93 = scmp.ne.s32.totalorder %s82, %s83
      %p94 = scmp.eq.s32.totalorder %s48, 0
      %p95 = por %p93, %p94
      %p96 = scmp.ne.s32.totalorder %s82, %s83
      %p97 = scmp.eq.s32.totalorder %s49, 1
      %p98 = por %p96, %p97
      %p100 = scmp.ne.s32.totalorder %s83, %s99
      %p101 = scmp.eq.s32.totalorder %s49, 0
      %p102 = por %p100, %p101
      %s103 = ssub.s32 %s43, %s50
      %p104 = scmp.eq.s32.totalorder %s103, 0
      %s106 = sadd.s32 %s105, 1
      %s107 = scalar_select %p104, %s105, %s106
      %p110 = pneg %p104
      %p111 = scmp.eq.s32.totalorder %s43, 1
      %p112 = por %p110, %p111
      %p113 = scmp.ne.s32.totalorder %s105, %s108
      %p114 = scmp.eq.s32.totalorder %s43, 0
      %p115 = por %p113, %p114
      %p116 = scmp.ne.s32.totalorder %s105, %s108
      %p117 = scmp.eq.s32.totalorder %s48, 1
      %p118 = por %p116, %p117
      %p119 = scmp.ne.s32.totalorder %s108, %s109
      %p120 = scmp.eq.s32.totalorder %s48, 0
      %p121 = por %p119, %p120
      %p122 = scmp.ne.s32.totalorder %s108, %s109
      %p123 = scmp.eq.s32.totalorder %s49, 1
      %p124 = por %p122, %p123
      %p126 = scmp.ne.s32.totalorder %s109, %s125
      %p127 = scmp.eq.s32.totalorder %s49, 0
      %p128 = por %p126, %p127
      %s129 = ssub.s32 %s43, %s50
      %p130 = scmp.eq.s32.totalorder %s129, 0
      %s132 = sadd.s32 %s131, 1
      %s133 = scalar_select %p130, %s131, %s132
      %p136 = pneg %p130
      %p137 = scmp.eq.s32.totalorder %s43, 1
      %p138 = por %p136, %p137
      %p139 = scmp.ne.s32.totalorder %s131, %s134
      %p140 = scmp.eq.s32.totalorder %s43, 0
      %p141 = por %p139, %p140
      %p142 = scmp.ne.s32.totalorder %s131, %s134
      %p143 = scmp.eq.s32.totalorder %s48, 1
      %p144 = por %p142, %p143
      %p145 = scmp.ne.s32.totalorder %s134, %s135
      %p146 = scmp.eq.s32.totalorder %s48, 0
      %p147 = por %p145, %p146
      %p148 = scmp.ne.s32.totalorder %s134, %s135
      %p149 = scmp.eq.s32.totalorder %s49, 1
      %p150 = por %p148, %p149
      %p152 = scmp.ne.s32.totalorder %s135, %s151
      %p153 = scmp.eq.s32.totalorder %s49, 0
      %p154 = por %p152, %p153
      %s155 = ssub.s32 %s43, %s50
      %p156 = scmp.eq.s32.totalorder %s155, 0
      %s158 = sadd.s32 %s157, 1
      %s159 = scalar_select %p156, %s157, %s158
      %p162 = pneg %p156
      %p163 = scmp.eq.s32.totalorder %s43, 1
      %p164 = por %p162, %p163
      %p165 = scmp.ne.s32.totalorder %s157, %s160
      %p166 = scmp.eq.s32.totalorder %s43, 0
      %p167 = por %p165, %p166
      %p168 = scmp.ne.s32.totalorder %s157, %s160
      %p169 = scmp.eq.s32.totalorder %s48, 1
      %p170 = por %p168, %p169
      %p171 = scmp.ne.s32.totalorder %s160, %s161
      %p172 = scmp.eq.s32.totalorder %s48, 0
      %p173 = por %p171, %p172
      %p174 = scmp.ne.s32.totalorder %s160, %s161
      %p175 = scmp.eq.s32.totalorder %s49, 1
      %p176 = por %p174, %p175
      %p178 = scmp.ne.s32.totalorder %s161, %s177
      %p179 = scmp.eq.s32.totalorder %s49, 0
      %p180 = por %p178, %p179
      %s181 = ssub.s32 %s43, %s50
      %p182 = scmp.eq.s32.totalorder %s181, 0
      %s184 = sadd.s32 %s183, 1
      %s185 = scalar_select %p182, %s183, %s184
      %p188 = pneg %p182
      %p189 = scmp.eq.s32.totalorder %s43, 1
      %p190 = por %p188, %p189
      %p191 = scmp.ne.s32.totalorder %s183, %s186
      %p192 = scmp.eq.s32.totalorder %s43, 0
      %p193 = por %p191, %p192
      %p194 = scmp.ne.s32.totalorder %s183, %s186
      %p195 = scmp.eq.s32.totalorder %s48, 1
      %p196 = por %p194, %p195
      %p197 = scmp.ne.s32.totalorder %s186, %s187
      %p198 = scmp.eq.s32.totalorder %s48, 0
      %p199 = por %p197, %p198
      %p200 = scmp.ne.s32.totalorder %s186, %s187
      %p201 = scmp.eq.s32.totalorder %s49, 1
      %p202 = por %p200, %p201
      %p204 = scmp.ne.s32.totalorder %s187, %s203
      %p205 = scmp.eq.s32.totalorder %s49, 0
      %p206 = por %p204, %p205
      %s207 = ssub.s32 %s43, %s50
      %p208 = scmp.eq.s32.totalorder %s207, 0
      %s210 = sadd.s32 %s209, 1
      %s211 = scalar_select %p208, %s209, %s210
      %p214 = pneg %p208
      %p215 = scmp.eq.s32.totalorder %s43, 1
      %p216 = por %p214, %p215
      %p217 = scmp.ne.s32.totalorder %s209, %s212
      %p218 = scmp.eq.s32.totalorder %s43, 0
      %p219 = por %p217, %p218
      %p220 = scmp.ne.s32.totalorder %s209, %s212
      %p221 = scmp.eq.s32.totalorder %s48, 1
      %p222 = por %p220, %p221
      %p223 = scmp.ne.s32.totalorder %s212, %s213
      %p224 = scmp.eq.s32.totalorder %s48, 0
      %p225 = por %p223, %p224
      %p226 = scmp.ne.s32.totalorder %s212, %s213
      %p227 = scmp.eq.s32.totalorder %s49, 1
      %p228 = por %p226, %p227
      %p230 = scmp.ne.s32.totalorder %s213, %s229
      %p231 = scmp.eq.s32.totalorder %s49, 0
      %p232 = por %p230, %p231
      %s233 = ssub.s32 %s43, %s50
      %p234 = scmp.eq.s32.totalorder %s233, 0
      %s236 = sadd.s32 %s235, 1
      %s237 = scalar_select %p234, %s235, %s236
      %p240 = pneg %p234
      %p241 = scmp.eq.s32.totalorder %s43, 1
      %p242 = por %p240, %p241
      %p243 = scmp.ne.s32.totalorder %s235, %s238
      %p244 = scmp.eq.s32.totalorder %s43, 0
      %p245 = por %p243, %p244
      %p246 = scmp.ne.s32.totalorder %s235, %s238
      %p247 = scmp.eq.s32.totalorder %s48, 1
      %p248 = por %p246, %p247
      %p249 = scmp.ne.s32.totalorder %s238, %s239
      %p250 = scmp.eq.s32.totalorder %s48, 0
      %p251 = por %p249, %p250
      %p252 = scmp.ne.s32.totalorder %s238, %s239
      %p253 = scmp.eq.s32.totalorder %s49, 1
      %p254 = por %p252, %p253
      %p256 = scmp.ne.s32.totalorder %s239, %s255
      %p257 = scmp.eq.s32.totalorder %s49, 0
      %p258 = por %p256, %p257
      %s259 = ssub.s32 %s43, %s50
      %p260 = scmp.eq.s32.totalorder %s259, 0
      %s262 = sadd.s32 %s261, 1
      %s263 = scalar_select %p260, %s261, %s262
      %p266 = pneg %p260
      %p267 = scmp.eq.s32.totalorder %s43, 1
      %p268 = por %p266, %p267
      %p269 = scmp.ne.s32.totalorder %s261, %s264
      %p270 = scmp.eq.s32.totalorder %s43, 0
      %p271 = por %p269, %p270
      %p272 = scmp.ne.s32.totalorder %s261, %s264
      %p273 = scmp.eq.s32.totalorder %s48, 1
      %p274 = por %p272, %p273
      %p275 = scmp.ne.s32.totalorder %s264, %s265
      %p276 = scmp.eq.s32.totalorder %s48, 0
      %p277 = por %p275, %p276
      %p278 = scmp.ne.s32.totalorder %s264, %s265
      %p279 = scmp.eq.s32.totalorder %s49, 1
      %p280 = por %p278, %p279
      %p282 = scmp.ne.s32.totalorder %s265, %s281
      %p283 = scmp.eq.s32.totalorder %s49, 0
      %p284 = por %p282, %p283
      %s285 = ssub.s32 %s43, %s50
      %p286 = scmp.eq.s32.totalorder %s285, 0
      %s288 = sadd.s32 %s287, 1
      %s289 = scalar_select %p286, %s287, %s288
      %p292 = pneg %p286
      %p293 = scmp.eq.s32.totalorder %s43, 1
      %p294 = por %p292, %p293
      %p295 = scmp.ne.s32.totalorder %s287, %s290
      %p296 = scmp.eq.s32.totalorder %s43, 0
      %p297 = por %p295, %p296
      %p298 = scmp.ne.s32.totalorder %s287, %s290
      %p299 = scmp.eq.s32.totalorder %s48, 1
      %p300 = por %p298, %p299
      %p301 = scmp.ne.s32.totalorder %s290, %s291
      %p302 = scmp.eq.s32.totalorder %s48, 0
      %p303 = por %p301, %p302
      %p304 = scmp.ne.s32.totalorder %s290, %s291
      %p305 = scmp.eq.s32.totalorder %s49, 1
      %p306 = por %p304, %p305
      %p308 = scmp.ne.s32.totalorder %s291, %s307
      %p309 = scmp.eq.s32.totalorder %s49, 0
      %p310 = por %p308, %p309
      %s311 = ssub.s32 %s43, %s50
      %p312 = scmp.eq.s32.totalorder %s311, 0
      %s314 = sadd.s32 %s313, 1
      %s315 = scalar_select %p312, %s313, %s314
      %p318 = pneg %p312
      %p319 = scmp.eq.s32.totalorder %s43, 1
      %p320 = por %p318, %p319
      %p321 = scmp.ne.s32.totalorder %s313, %s316
      %p322 = scmp.eq.s32.totalorder %s43, 0
      %p323 = por %p321, %p322
      %p324 = scmp.ne.s32.totalorder %s313, %s316
      %p325 = scmp.eq.s32.totalorder %s48, 1
      %p326 = por %p324, %p325
      %p327 = scmp.ne.s32.totalorder %s316, %s317
      %p328 = scmp.eq.s32.totalorder %s48, 0
      %p329 = por %p327, %p328
      %p330 = scmp.ne.s32.totalorder %s316, %s317
      %p331 = scmp.eq.s32.totalorder %s49, 1
      %p332 = por %p330, %p331
      %p334 = scmp.ne.s32.totalorder %s317, %s333
      %p335 = scmp.eq.s32.totalorder %s49, 0
      %p336 = por %p334, %p335
      %s338 = sadd.s32 %s337, 1
      %p341 = scmp.eq.s32.totalorder %s43, 1
      %p342 = scmp.ne.s32.totalorder %s337, %s339
      %p343 = scmp.eq.s32.totalorder %s43, 0
      %p344 = por %p342, %p343
      %p345 = scmp.ne.s32.totalorder %s337, %s339
      %p346 = scmp.eq.s32.totalorder %s48, 1
      %p347 = por %p345, %p346
      %p348 = scmp.ne.s32.totalorder %s339, %s340
      %p349 = scmp.eq.s32.totalorder %s48, 0
      %p350 = por %p348, %p349
      %p351 = scmp.ne.s32.totalorder %s339, %s340
      %p352 = scmp.eq.s32.totalorder %s49, 1
      %p353 = por %p351, %p352
      %p355 = scmp.ne.s32.totalorder %s340, %s354
      %p356 = scmp.eq.s32.totalorder %s49, 0
      %p357 = por %p355, %p356
      %s359 = sadd.s32 %s358, 1
      %p362 = scmp.eq.s32.totalorder %s43, 1
      %p363 = scmp.ne.s32.totalorder %s358, %s360
      %p364 = scmp.eq.s32.totalorder %s43, 0
      %p365 = por %p363, %p364
      %p366 = scmp.ne.s32.totalorder %s358, %s360
      %p367 = scmp.eq.s32.totalorder %s48, 1
      %p368 = por %p366, %p367
      %p369 = scmp.ne.s32.totalorder %s360, %s361
      %p370 = scmp.eq.s32.totalorder %s48, 0
      %p371 = por %p369, %p370
      %p372 = scmp.ne.s32.totalorder %s360, %s361
      %p373 = scmp.eq.s32.totalorder %s49, 1
      %p374 = por %p372, %p373
      %p376 = scmp.ne.s32.totalorder %s361, %s375
      %p377 = scmp.eq.s32.totalorder %s49, 0
      %p378 = por %p376, %p377
      %s380 = sadd.s32 %s379, 1
      %p383 = scmp.eq.s32.totalorder %s43, 1
      %p384 = scmp.ne.s32.totalorder %s379, %s381
      %p385 = scmp.eq.s32.totalorder %s43, 0
      %p386 = por %p384, %p385
      %p387 = scmp.ne.s32.totalorder %s379, %s381
      %p388 = scmp.eq.s32.totalorder %s48, 1
      %p389 = por %p387, %p388
      %p390 = scmp.ne.s32.totalorder %s381, %s382
      %p391 = scmp.eq.s32.totalorder %s48, 0
      %p392 = por %p390, %p391
      %p393 = scmp.ne.s32.totalorder %s381, %s382
      %p394 = scmp.eq.s32.totalorder %s49, 1
      %p395 = por %p393, %p394
      %p397 = scmp.ne.s32.totalorder %s382, %s396
      %p398 = scmp.eq.s32.totalorder %s49, 0
      %p399 = por %p397, %p398
      %s401 = sadd.s32 %s400, 1
      %p404 = scmp.eq.s32.totalorder %s43, 1
      %p405 = scmp.ne.s32.totalorder %s400, %s402
      %p406 = scmp.eq.s32.totalorder %s43, 0
      %p407 = por %p405, %p406
      %p408 = scmp.ne.s32.totalorder %s400, %s402
      %p409 = scmp.eq.s32.totalorder %s48, 1
      %p410 = por %p408, %p409
      %p411 = scmp.ne.s32.totalorder %s402, %s403
      %p412 = scmp.eq.s32.totalorder %s48, 0
      %p413 = por %p411, %p412
      %p414 = scmp.ne.s32.totalorder %s402, %s403
      %p415 = scmp.eq.s32.totalorder %s49, 1
      %p416 = por %p414, %p415
      %p418 = scmp.ne.s32.totalorder %s403, %s417
      %p419 = scmp.eq.s32.totalorder %s49, 0
      %p420 = por %p418, %p419
      %s422 = sadd.s32 %s421, 1
      %p425 = scmp.eq.s32.totalorder %s43, 1
      %p426 = scmp.ne.s32.totalorder %s421, %s423
      %p427 = scmp.eq.s32.totalorder %s43, 0
      %p428 = por %p426, %p427
      %p429 = scmp.ne.s32.totalorder %s421, %s423
      %p430 = scmp.eq.s32.totalorder %s48, 1
      %p431 = por %p429, %p430
      %p432 = scmp.ne.s32.totalorder %s423, %s424
      %p433 = scmp.eq.s32.totalorder %s48, 0
      %p434 = por %p432, %p433
      %p435 = scmp.ne.s32.totalorder %s423, %s424
      %p436 = scmp.eq.s32.totalorder %s49, 1
      %p437 = por %p435, %p436
      %p439 = scmp.ne.s32.totalorder %s424, %s438
      %p440 = scmp.eq.s32.totalorder %s49, 0
      %p441 = por %p439, %p440
      %s443 = sadd.s32 %s442, 1
      %p446 = scmp.eq.s32.totalorder %s43, 1
      %p447 = scmp.ne.s32.totalorder %s442, %s444
      %p448 = scmp.eq.s32.totalorder %s43, 0
      %p449 = por %p447, %p448
      %p450 = scmp.ne.s32.totalorder %s442, %s444
      %p451 = scmp.eq.s32.totalorder %s48, 1
      %p452 = por %p450, %p451
      %p453 = scmp.ne.s32.totalorder %s444, %s445
      %p454 = scmp.eq.s32.totalorder %s48, 0
      %p455 = por %p453, %p454
      %p456 = scmp.ne.s32.totalorder %s444, %s445
      %p457 = scmp.eq.s32.totalorder %s49, 1
      %p458 = por %p456, %p457
      %p460 = scmp.ne.s32.totalorder %s445, %s459
      %p461 = scmp.eq.s32.totalorder %s49, 0
      %p462 = por %p460, %p461
      %s464 = sadd.s32 %s463, 1
      %p467 = scmp.eq.s32.totalorder %s43, 1
      %p468 = scmp.ne.s32.totalorder %s463, %s465
      %p469 = scmp.eq.s32.totalorder %s43, 0
      %p470 = por %p468, %p469
      %p471 = scmp.ne.s32.totalorder %s463, %s465
      %p472 = scmp.eq.s32.totalorder %s48, 1
      %p473 = por %p471, %p472
      %p474 = scmp.ne.s32.totalorder %s465, %s466
      %p475 = scmp.eq.s32.totalorder %s48, 0
      %p476 = por %p474, %p475
      %p477 = scmp.ne.s32.totalorder %s465, %s466
      %p478 = scmp.eq.s32.totalorder %s49, 1
      %p479 = por %p477, %p478
      %p481 = scmp.ne.s32.totalorder %s466, %s480
      %p482 = scmp.eq.s32.totalorder %s49, 0
      %p483 = por %p481, %p482
      %s485 = sadd.s32 %s484, 1
      %p488 = scmp.eq.s32.totalorder %s43, 1
      %p489 = scmp.ne.s32.totalorder %s484, %s486
      %p490 = scmp.eq.s32.totalorder %s43, 0
      %p491 = por %p489, %p490
      %p492 = scmp.ne.s32.totalorder %s484, %s486
      %p493 = scmp.eq.s32.totalorder %s48, 1
      %p494 = por %p492, %p493
      %p495 = scmp.ne.s32.totalorder %s486, %s487
      %p496 = scmp.eq.s32.totalorder %s48, 0
      %p497 = por %p495, %p496
      %p498 = scmp.ne.s32.totalorder %s486, %s487
      %p499 = scmp.eq.s32.totalorder %s49, 1
      %p500 = por %p498, %p499
      %p502 = scmp.ne.s32.totalorder %s487, %s501
      %p503 = scmp.eq.s32.totalorder %s49, 0
      %p504 = por %p502, %p503
      %s506 = sadd.s32 %s505, 1
      %p509 = scmp.eq.s32.totalorder %s43, 1
      %p510 = scmp.ne.s32.totalorder %s505, %s507
      %p511 = scmp.eq.s32.totalorder %s43, 0
      %p512 = por %p510, %p511
      %p513 = scmp.ne.s32.totalorder %s505, %s507
      %p514 = scmp.eq.s32.totalorder %s48, 1
      %p515 = por %p513, %p514
      %p516 = scmp.ne.s32.totalorder %s507, %s508
      %p517 = scmp.eq.s32.totalorder %s48, 0
      %p518 = por %p516, %p517
      %p519 = scmp.ne.s32.totalorder %s507, %s508
      %p520 = scmp.eq.s32.totalorder %s49, 1
      %p521 = por %p519, %p520
      %p523 = scmp.ne.s32.totalorder %s508, %s522
      %p524 = scmp.eq.s32.totalorder %s49, 0
      %p525 = por %p523, %p524
      %s527 = sadd.s32 %s526, 1
      %p530 = scmp.eq.s32.totalorder %s43, 1
      %p531 = scmp.ne.s32.totalorder %s526, %s528
      %p532 = scmp.eq.s32.totalorder %s43, 0
      %p533 = por %p531, %p532
      %p534 = scmp.ne.s32.totalorder %s526, %s528
      %p535 = scmp.eq.s32.totalorder %s48, 1
      %p536 = por %p534, %p535
      %p537 = scmp.ne.s32.totalorder %s528, %s529
      %p538 = scmp.eq.s32.totalorder %s48, 0
      %p539 = por %p537, %p538
      %p540 = scmp.ne.s32.totalorder %s528, %s529
      %p541 = scmp.eq.s32.totalorder %s49, 1
      %p542 = por %p540, %p541
      %p544 = scmp.ne.s32.totalorder %s529, %s543
      %p545 = scmp.eq.s32.totalorder %s49, 0
      %p546 = por %p544, %p545
      %s548 = sadd.s32 %s547, 1
      %p551 = scmp.eq.s32.totalorder %s43, 1
      %p552 = scmp.ne.s32.totalorder %s547, %s549
      %p553 = scmp.eq.s32.totalorder %s43, 0
      %p554 = por %p552, %p553
      %p555 = scmp.ne.s32.totalorder %s547, %s549
      %p556 = scmp.eq.s32.totalorder %s48, 1
      %p557 = por %p555, %p556
      %p558 = scmp.ne.s32.totalorder %s549, %s550
      %p559 = scmp.eq.s32.totalorder %s48, 0
      %p560 = por %p558, %p559
      %p561 = scmp.ne.s32.totalorder %s549, %s550
      %p562 = scmp.eq.s32.totalorder %s49, 1
      %p563 = por %p561, %p562
      %p565 = scmp.ne.s32.totalorder %s550, %s564
      %p566 = scmp.eq.s32.totalorder %s49, 0
      %p567 = por %p565, %p566
      %s569 = sadd.s32 %s568, 1
      %p572 = scmp.eq.s32.totalorder %s43, 1
      %p573 = scmp.ne.s32.totalorder %s568, %s570
      %p574 = scmp.eq.s32.totalorder %s43, 0
      %p575 = por %p573, %p574
      %p576 = scmp.ne.s32.totalorder %s568, %s570
      %p577 = scmp.eq.s32.totalorder %s48, 1
      %p578 = por %p576, %p577
      %p579 = scmp.ne.s32.totalorder %s570, %s571
      %p580 = scmp.eq.s32.totalorder %s48, 0
      %p581 = por %p579, %p580
      %p582 = scmp.ne.s32.totalorder %s570, %s571
      %p583 = scmp.eq.s32.totalorder %s49, 1
      %p584 = por %p582, %p583
      %p586 = scmp.ne.s32.totalorder %s571, %s585
      %p587 = scmp.eq.s32.totalorder %s49, 0
      %p588 = por %p586, %p587
      %s590 = sadd.s32 %s589, 1
      %p593 = scmp.eq.s32.totalorder %s43, 1
      %p594 = scmp.ne.s32.totalorder %s589, %s591
      %p595 = scmp.eq.s32.totalorder %s43, 0
      %p596 = por %p594, %p595
      %p597 = scmp.ne.s32.totalorder %s589, %s591
      %p598 = scmp.eq.s32.totalorder %s48, 1
      %p599 = por %p597, %p598
      %p600 = scmp.ne.s32.totalorder %s591, %s592
      %p601 = scmp.eq.s32.totalorder %s48, 0
      %p602 = por %p600, %p601
      %p603 = scmp.ne.s32.totalorder %s591, %s592
      %p604 = scmp.eq.s32.totalorder %s49, 1
      %p605 = por %p603, %p604
      %p607 = scmp.ne.s32.totalorder %s592, %s606
      %p608 = scmp.eq.s32.totalorder %s49, 0
      %p609 = por %p607, %p608
      %s611 = sadd.s32 %s610, 1
      %p614 = scmp.eq.s32.totalorder %s43, 1
      %p615 = scmp.ne.s32.totalorder %s610, %s612
      %p616 = scmp.eq.s32.totalorder %s43, 0
      %p617 = por %p615, %p616
      %p618 = scmp.ne.s32.totalorder %s610, %s612
      %p619 = scmp.eq.s32.totalorder %s48, 1
      %p620 = por %p618, %p619
      %p621 = scmp.ne.s32.totalorder %s612, %s613
      %p622 = scmp.eq.s32.totalorder %s48, 0
      %p623 = por %p621, %p622
      %p624 = scmp.ne.s32.totalorder %s612, %s613
      %p625 = scmp.eq.s32.totalorder %s49, 1
      %p626 = por %p624, %p625
      %p628 = scmp.ne.s32.totalorder %s613, %s627
      %p629 = scmp.eq.s32.totalorder %s49, 0
      %p630 = por %p628, %p629
      %s632 = sadd.s32 %s631, 1
      %p635 = scmp.eq.s32.totalorder %s43, 1
      %p636 = scmp.ne.s32.totalorder %s631, %s633
      %p637 = scmp.eq.s32.totalorder %s43, 0
      %p638 = por %p636, %p637
      %p639 = scmp.ne.s32.totalorder %s631, %s633
      %p640 = scmp.eq.s32.totalorder %s48, 1
      %p641 = por %p639, %p640
      %p642 = scmp.ne.s32.totalorder %s633, %s634
      %p643 = scmp.eq.s32.totalorder %s48, 0
      %p644 = por %p642, %p643
      %p645 = scmp.ne.s32.totalorder %s633, %s634
      %p646 = scmp.eq.s32.totalorder %s49, 1
      %p647 = por %p645, %p646
      %p649 = scmp.ne.s32.totalorder %s634, %s648
      %p650 = scmp.eq.s32.totalorder %s49, 0
      %p651 = por %p649, %p650
      %s653 = sadd.s32 %s652, 1
      %p656 = scmp.eq.s32.totalorder %s43, 1
      %p657 = scmp.ne.s32.totalorder %s652, %s654
      %p658 = scmp.eq.s32.totalorder %s43, 0
      %p659 = por %p657, %p658
      %p660 = scmp.ne.s32.totalorder %s652, %s654
      %p661 = scmp.eq.s32.totalorder %s48, 1
      %p662 = por %p660, %p661
      %p663 = scmp.ne.s32.totalorder %s654, %s655
      %p664 = scmp.eq.s32.totalorder %s48, 0
      %p665 = por %p663, %p664
      %p666 = scmp.ne.s32.totalorder %s654, %s655
      %p667 = scmp.eq.s32.totalorder %s49, 1
      %p668 = por %p666, %p667
      %p670 = scmp.ne.s32.totalorder %s655, %s669
      %p671 = scmp.eq.s32.totalorder %s49, 0
      %p672 = por %p670, %p671
      %s674 = sadd.s32 %s673, 1
      %p677 = scmp.eq.s32.totalorder %s43, 1
      %p678 = scmp.ne.s32.totalorder %s673, %s675
      %p679 = scmp.eq.s32.totalorder %s43, 0
      %p680 = por %p678, %p679
      %p681 = scmp.ne.s32.totalorder %s673, %s675
      %p682 = scmp.eq.s32.totalorder %s48, 1
      %p683 = por %p681, %p682
      %p684 = scmp.ne.s32.totalorder %s675, %s676
      %p685 = scmp.eq.s32.totalorder %s48, 0
      %p686 = por %p684, %p685
      %p687 = scmp.ne.s32.totalorder %s675, %s676
      %p688 = scmp.eq.s32.totalorder %s49, 1
      %p689 = por %p687, %p688
      %p691 = scmp.ne.s32.totalorder %s676, %s690
      %p692 = scmp.eq.s32.totalorder %s49, 0
      %p693 = por %p691, %p692
      %s694 = ssub.s32 %s43, %s50
      %p695 = scmp.eq.s32.totalorder %s694, 0
      %s697 = sadd.s32 %s696, 1
      %s698 = scalar_select %p695, %s696, %s697
      %p701 = pneg %p695
      %p702 = scmp.eq.s32.totalorder %s43, 1
      %p703 = por %p701, %p702
      %p704 = scmp.ne.s32.totalorder %s696, %s699
      %p705 = scmp.eq.s32.totalorder %s43, 0
      %p706 = por %p704, %p705
      %p707 = scmp.ne.s32.totalorder %s696, %s699
      %p708 = scmp.eq.s32.totalorder %s48, 1
      %p709 = por %p707, %p708
      %p710 = scmp.ne.s32.totalorder %s699, %s700
      %p711 = scmp.eq.s32.totalorder %s48, 0
      %p712 = por %p710, %p711
      %p713 = scmp.ne.s32.totalorder %s699, %s700
      %p714 = scmp.eq.s32.totalorder %s49, 1
      %p715 = por %p713, %p714
      %p717 = scmp.ne.s32.totalorder %s700, %s716
      %p718 = scmp.eq.s32.totalorder %s49, 0
      %p719 = por %p717, %p718
      %p720 = scmp.le.s32.totalorder 1, %s43
      %p721 = scmp.lt.s32.totalorder %s43, 3
      %p722 = pnand %p720, %p721
      %p723 = pneg %p722
      // Predicated region
      $region9: #{tpu_custom_call.1} parent=5 // pred_check
        _
      $region10: #{tpu_custom_call.1} parent=5 // pred_check_branch
        %725 = sbr.rel (%p722) target = $region12
      $region11: #{tpu_custom_call.1} parent=5 // pred_region
        %s726 = ssub.s32 %s43, 1
        // Predicated region
        $region13: #{tpu_custom_call.1} parent=11 // pred_check
          %p727 = pneg %p350
        $region14: #{tpu_custom_call.1} parent=11 // pred_check_branch
          %729 = sbr.rel (%p727) target = $region16
        $region15: #{tpu_custom_call.1} parent=11 // pred_region
          _
        $region16: #{tpu_custom_call.1} parent=11 // pred_fallthru
          _
        // Predicated region
        $region17: #{tpu_custom_call.1} parent=11 // pred_check
          %p730 = pneg %p371
        $region18: #{tpu_custom_call.1} parent=11 // pred_check_branch
          %732 = sbr.rel (%p730) target = $region20
        $region19: #{tpu_custom_call.1} parent=11 // pred_region
          _
        $region20: #{tpu_custom_call.1} parent=11 // pred_fallthru
          _
        // Predicated region
        $region21: #{tpu_custom_call.1} parent=11 // pred_check
          %p733 = pneg %p392
        $region22: #{tpu_custom_call.1} parent=11 // pred_check_branch
          %735 = sbr.rel (%p733) target = $region24
        $region23: #{tpu_custom_call.1} parent=11 // pred_region
          %s737 = ssub.s32 512, 512
          %738 = vsyncadd [#allocation6], %s737
          %s739 = sshll.u32 [#allocation7], 4
          %s740 = int_to_ptr.vmem [resolvable:$true] %s739
          %745 = dma.hbm_to_vmem [thread:$0]  %s13, 512, %s740, [#allocation6], 128, 128, 8
        $region24: #{tpu_custom_call.1} parent=11 // pred_fallthru
          _
        // Predicated region
        $region25: #{tpu_custom_call.1} parent=11 // pred_check
          %p746 = pneg %p413
        $region26: #{tpu_custom_call.1} parent=11 // pred_check_branch
          %748 = sbr.rel (%p746) target = $region28
        $region27: #{tpu_custom_call.1} parent=11 // pred_region
          _
        $region28: #{tpu_custom_call.1} parent=11 // pred_fallthru
          _
        // Predicated region
        $region29: #{tpu_custom_call.1} parent=11 // pred_check
          %p749 = pneg %p434
        $region30: #{tpu_custom_call.1} parent=11 // pred_check_branch
          %751 = sbr.rel (%p749) target = $region32
        $region31: #{tpu_custom_call.1} parent=11 // pred_region
          _
        $region32: #{tpu_custom_call.1} parent=11 // pred_fallthru
          _
        // Predicated region
        $region33: #{tpu_custom_call.1} parent=11 // pred_check
          %p752 = pneg %p455
        $region34: #{tpu_custom_call.1} parent=11 // pred_check_branch
          %754 = sbr.rel (%p752) target = $region36
        $region35: #{tpu_custom_call.1} parent=11 // pred_region
          _
        $region36: #{tpu_custom_call.1} parent=11 // pred_fallthru
          _
        // Predicated region
        $region37: #{tpu_custom_call.1} parent=11 // pred_check
          %p755 = pneg %p476
        $region38: #{tpu_custom_call.1} parent=11 // pred_check_branch
          %757 = sbr.rel (%p755) target = $region40
        $region39: #{tpu_custom_call.1} parent=11 // pred_region
          _
        $region40: #{tpu_custom_call.1} parent=11 // pred_fallthru
          _
        // Predicated region
        $region41: #{tpu_custom_call.1} parent=11 // pred_check
          %p758 = pneg %p497
        $region42: #{tpu_custom_call.1} parent=11 // pred_check_branch
          %760 = sbr.rel (%p758) target = $region44
        $region43: #{tpu_custom_call.1} parent=11 // pred_region
          _
        $region44: #{tpu_custom_call.1} parent=11 // pred_fallthru
          _
        // Predicated region
        $region45: #{tpu_custom_call.1} parent=11 // pred_check
          %p761 = pneg %p518
        $region46: #{tpu_custom_call.1} parent=11 // pred_check_branch
          %763 = sbr.rel (%p761) target = $region48
        $region47: #{tpu_custom_call.1} parent=11 // pred_region
          _
        $region48: #{tpu_custom_call.1} parent=11 // pred_fallthru
          _
        // Predicated region
        $region49: #{tpu_custom_call.1} parent=11 // pred_check
          %p764 = pneg %p539
        $region50: #{tpu_custom_call.1} parent=11 // pred_check_branch
          %766 = sbr.rel (%p764) target = $region52
        $region51: #{tpu_custom_call.1} parent=11 // pred_region
          _
        $region52: #{tpu_custom_call.1} parent=11 // pred_fallthru
          _
        // Predicated region
        $region53: #{tpu_custom_call.1} parent=11 // pred_check
          %p767 = pneg %p560
        $region54: #{tpu_custom_call.1} parent=11 // pred_check_branch
          %769 = sbr.rel (%p767) target = $region56
        $region55: #{tpu_custom_call.1} parent=11 // pred_region
          _
        $region56: #{tpu_custom_call.1} parent=11 // pred_fallthru
          _
        // Predicated region
        $region57: #{tpu_custom_call.1} parent=11 // pred_check
          %p770 = pneg %p581
        $region58: #{tpu_custom_call.1} parent=11 // pred_check_branch
          %772 = sbr.rel (%p770) target = $region60
        $region59: #{tpu_custom_call.1} parent=11 // pred_region
          _
        $region60: #{tpu_custom_call.1} parent=11 // pred_fallthru
          _
        // Predicated region
        $region61: #{tpu_custom_call.1} parent=11 // pred_check
          %p773 = pneg %p602
        $region62: #{tpu_custom_call.1} parent=11 // pred_check_branch
          %775 = sbr.rel (%p773) target = $region64
        $region63: #{tpu_custom_call.1} parent=11 // pred_region
          _
        $region64: #{tpu_custom_call.1} parent=11 // pred_fallthru
          _
        // Predicated region
        $region65: #{tpu_custom_call.1} parent=11 // pred_check
          %p776 = pneg %p623
        $region66: #{tpu_custom_call.1} parent=11 // pred_check_branch
          %778 = sbr.rel (%p776) target = $region68
        $region67: #{tpu_custom_call.1} parent=11 // pred_region
          _
        $region68: #{tpu_custom_call.1} parent=11 // pred_fallthru
          _
        // Predicated region
        $region69: #{tpu_custom_call.1} parent=11 // pred_check
          %p779 = pneg %p644
        $region70: #{tpu_custom_call.1} parent=11 // pred_check_branch
          %781 = sbr.rel (%p779) target = $region72
        $region71: #{tpu_custom_call.1} parent=11 // pred_region
          _
        $region72: #{tpu_custom_call.1} parent=11 // pred_fallthru
          _
        // Predicated region
        $region73: #{tpu_custom_call.1} parent=11 // pred_check
          %p782 = pneg %p665
        $region74: #{tpu_custom_call.1} parent=11 // pred_check_branch
          %784 = sbr.rel (%p782) target = $region76
        $region75: #{tpu_custom_call.1} parent=11 // pred_region
          %s786 = ssub.s32 1536, 1536
          %787 = vsyncadd [#allocation9], %s786
          %s788 = sshll.u32 [#allocation8], 4
          %s789 = int_to_ptr.vmem [resolvable:$true] %s788
          %794 = dma.hbm_to_vmem [thread:$0]  %s26, 1536, %s789, [#allocation9], 128, 128, 8
        $region76: #{tpu_custom_call.1} parent=11 // pred_fallthru
          _
        // Predicated region
        $region77: #{tpu_custom_call.1} parent=11 // pred_check
          %p795 = pneg %p686
        $region78: #{tpu_custom_call.1} parent=11 // pred_check_branch
          %797 = sbr.rel (%p795) target = $region80
        $region79: #{tpu_custom_call.1} parent=11 // pred_region
          _
        $region80: #{tpu_custom_call.1} parent=11 // pred_fallthru
          _
      $region12: #{tpu_custom_call.1} parent=5 // pred_fallthru
        _
      %p798 = scmp.lt.s32.totalorder %s43, 2
      // Predicated region
      $region81: #{tpu_custom_call.1} parent=5 // pred_check
        %p799 = pneg %p798
      $region82: #{tpu_custom_call.1} parent=5 // pred_check_branch
        %801 = sbr.rel (%p799) target = $region84
      $region83: #{tpu_custom_call.1} parent=5 // pred_region
        // Predicated region
        $region85: #{tpu_custom_call.1} parent=83 // pred_check
          %p802 = pneg %p63
        $region86: #{tpu_custom_call.1} parent=83 // pred_check_branch
          %804 = sbr.rel (%p802) target = $region88
        $region87: #{tpu_custom_call.1} parent=83 // pred_region
          %p805 = scmp.lt.s32.totalorder %s43, 1
          %s806 = scalar_select %p805, %s43, 1
          %s807 = smul.addr %s806, 2
          %s808 = smul.addr %s807, 8
          %s809 = scalar_lea.vmem %s0, %s808
        $region88: #{tpu_custom_call.1} parent=83 // pred_fallthru
          _
        // Predicated region
        $region89: #{tpu_custom_call.1} parent=83 // pred_check
          %p810 = pneg %p89
        $region90: #{tpu_custom_call.1} parent=83 // pred_check_branch
          %812 = sbr.rel (%p810) target = $region92
        $region91: #{tpu_custom_call.1} parent=83 // pred_region
          %p813 = scmp.lt.s32.totalorder %s43, 1
          %s814 = scalar_select %p813, %s43, 1
          %s815 = smul.addr %s814, 2
          %s816 = smul.addr %s815, 8
          %s817 = scalar_lea.vmem %s1, %s816
        $region92: #{tpu_custom_call.1} parent=83 // pred_fallthru
          _
        // Predicated region
        $region93: #{tpu_custom_call.1} parent=83 // pred_check
          %p818 = pneg %p115
        $region94: #{tpu_custom_call.1} parent=83 // pred_check_branch
          %820 = sbr.rel (%p818) target = $region96
        $region95: #{tpu_custom_call.1} parent=83 // pred_region
          %p821 = scmp.lt.s32.totalorder %s43, 1
          %s822 = scalar_select %p821, %s43, 1
          %s823 = smul.addr %s822, 2
          %s824 = smul.addr %s823, 8
          %s825 = scalar_lea.vmem %s2, %s824
        $region96: #{tpu_custom_call.1} parent=83 // pred_fallthru
          _
        // Predicated region
        $region97: #{tpu_custom_call.1} parent=83 // pred_check
          %p826 = pneg %p141
        $region98: #{tpu_custom_call.1} parent=83 // pred_check_branch
          %828 = sbr.rel (%p826) target = $region100
        $region99: #{tpu_custom_call.1} parent=83 // pred_region
          %p829 = scmp.lt.s32.totalorder %s43, 1
          %s830 = scalar_select %p829, %s43, 1
          %s831 = smul.addr %s830, 2
          %s832 = smul.addr %s831, 8
          %s833 = scalar_lea.vmem %s3, %s832
        $region100: #{tpu_custom_call.1} parent=83 // pred_fallthru
          _
        // Predicated region
        $region101: #{tpu_custom_call.1} parent=83 // pred_check
          %p834 = pneg %p167
        $region102: #{tpu_custom_call.1} parent=83 // pred_check_branch
          %836 = sbr.rel (%p834) target = $region104
        $region103: #{tpu_custom_call.1} parent=83 // pred_region
          %p837 = scmp.lt.s32.totalorder %s43, 1
          %s838 = scalar_select %p837, %s43, 1
          %s839 = smul.addr %s838, 2
          %s840 = smul.addr %s839, 8
          %s841 = scalar_lea.vmem %s4, %s840
        $region104: #{tpu_custom_call.1} parent=83 // pred_fallthru
          _
        // Predicated region
        $region105: #{tpu_custom_call.1} parent=83 // pred_check
          %p842 = pneg %p193
        $region106: #{tpu_custom_call.1} parent=83 // pred_check_branch
          %844 = sbr.rel (%p842) target = $region108
        $region107: #{tpu_custom_call.1} parent=83 // pred_region
          %p845 = scmp.lt.s32.totalorder %s43, 1
          %s846 = scalar_select %p845, %s43, 1
          %s847 = smul.addr %s846, 2
          %s848 = smul.addr %s847, 8
          %s849 = scalar_lea.vmem %s5, %s848
        $region108: #{tpu_custom_call.1} parent=83 // pred_fallthru
          _
        // Predicated region
        $region109: #{tpu_custom_call.1} parent=83 // pred_check
          %p850 = pneg %p219
        $region110: #{tpu_custom_call.1} parent=83 // pred_check_branch
          %852 = sbr.rel (%p850) target = $region112
        $region111: #{tpu_custom_call.1} parent=83 // pred_region
          %p853 = scmp.lt.s32.totalorder %s43, 1
          %s854 = scalar_select %p853, %s43, 1
          %s855 = smul.addr %s854, 3
          %s856 = smul.addr %s855, 8
          %s857 = scalar_lea.vmem %s6, %s856
        $region112: #{tpu_custom_call.1} parent=83 // pred_fallthru
          _
        // Predicated region
        $region113: #{tpu_custom_call.1} parent=83 // pred_check
          %p858 = pneg %p245
        $region114: #{tpu_custom_call.1} parent=83 // pred_check_branch
          %860 = sbr.rel (%p858) target = $region116
        $region115: #{tpu_custom_call.1} parent=83 // pred_region
          %p861 = scmp.lt.s32.totalorder %s43, 1
          %s862 = scalar_select %p861, %s43, 1
          %s863 = smul.addr %s862, 3
          %s864 = smul.addr %s863, 8
          %s865 = scalar_lea.vmem %s7, %s864
        $region116: #{tpu_custom_call.1} parent=83 // pred_fallthru
          _
        // Predicated region
        $region117: #{tpu_custom_call.1} parent=83 // pred_check
          %p866 = pneg %p271
        $region118: #{tpu_custom_call.1} parent=83 // pred_check_branch
          %868 = sbr.rel (%p866) target = $region120
        $region119: #{tpu_custom_call.1} parent=83 // pred_region
          %p869 = scmp.lt.s32.totalorder %s43, 1
          %s870 = scalar_select %p869, %s43, 1
          %s871 = smul.addr %s870, 3
          %s872 = smul.addr %s871, 8
          %s873 = scalar_lea.vmem %s8, %s872
        $region120: #{tpu_custom_call.1} parent=83 // pred_fallthru
          _
        // Predicated region
        $region121: #{tpu_custom_call.1} parent=83 // pred_check
          %p874 = pneg %p297
        $region122: #{tpu_custom_call.1} parent=83 // pred_check_branch
          %876 = sbr.rel (%p874) target = $region124
        $region123: #{tpu_custom_call.1} parent=83 // pred_region
          %s877 = sand.u32 %s287, 1
          %s878 = scalar_lea.sflag [#allocation4], %s877
          %s879 = sand.u32 %s287, 1
          %s880 = scalar_lea.vmem [#allocation3], %s879
          %s882 = ssub.s32 16, 16
          %883 = vsyncadd %s878, %s882
          %s884 = smul.addr %s43, 16
          %s885 = scalar_lea.hbm %s9, %s884
          %s887 = sshll.u32 %s880, 4
          %s888 = int_to_ptr.vmem [resolvable:$true] %s887
          %890 = dma.hbm_to_vmem [thread:$0]  %s885, 16, %s888, %s878
        $region124: #{tpu_custom_call.1} parent=83 // pred_fallthru
          _
        // Predicated region
        $region125: #{tpu_custom_call.1} parent=83 // pred_check
          %p891 = pneg %p323
        $region126: #{tpu_custom_call.1} parent=83 // pred_check_branch
          %893 = sbr.rel (%p891) target = $region128
        $region127: #{tpu_custom_call.1} parent=83 // pred_region
          %s894 = sand.u32 %s43, 1
          %s895 = scalar_lea.sflag [#allocation6], %s894
          %s896 = sand.u32 %s313, 1
          %s897 = scalar_lea.vmem [#allocation5], %s896
          %s899 = ssub.s32 16, 16
          %900 = vsyncadd %s895, %s899
          %s901 = smul.addr %s43, 16
          %s902 = scalar_lea.hbm %s10, %s901
          %s904 = sshll.u32 %s897, 4
          %s905 = int_to_ptr.vmem [resolvable:$true] %s904
          %907 = dma.hbm_to_vmem [thread:$0]  %s902, 16, %s905, %s895
        $region128: #{tpu_custom_call.1} parent=83 // pred_fallthru
          _
      $region84: #{tpu_custom_call.1} parent=5 // pred_fallthru
        _
      %p908 = scmp.le.s32.totalorder 1, %s43
      %p909 = scmp.lt.s32.totalorder %s43, 3
      %p910 = pnand %p908, %p909
      %p911 = pneg %p910
      // Predicated region
      $region129: #{tpu_custom_call.1} parent=5 // pred_check
        _
      $region130: #{tpu_custom_call.1} parent=5 // pred_check_branch
        %913 = sbr.rel (%p910) target = $region132
      $region131: #{tpu_custom_call.1} parent=5 // pred_region
        %s914 = ssub.s32 %s43, 1
        %s915 = sand.u32 %s290, 1
        %s916 = scalar_lea.sflag [#allocation4], %s915
        %s917 = sand.u32 %s290, 1
        %s918 = scalar_lea.vmem [#allocation3], %s917
        // Predicated region
        $region133: #{tpu_custom_call.1} parent=131 // pred_check
          %p919 = pneg %p303
        $region134: #{tpu_custom_call.1} parent=131 // pred_check_branch
          %921 = sbr.rel (%p919) target = $region136
        $region135: #{tpu_custom_call.1} parent=131 // pred_region
          %922 = dma.done %s916, 16
        $region136: #{tpu_custom_call.1} parent=131 // pred_fallthru
          _
        %s923 = sand.u32 %s48, 1
        %s924 = scalar_lea.sflag [#allocation6], %s923
        %s925 = sand.u32 %s316, 1
        %s926 = scalar_lea.vmem [#allocation5], %s925
        // Predicated region
        $region137: #{tpu_custom_call.1} parent=131 // pred_check
          %p927 = pneg %p329
        $region138: #{tpu_custom_call.1} parent=131 // pred_check_branch
          %929 = sbr.rel (%p927) target = $region140
        $region139: #{tpu_custom_call.1} parent=131 // pred_region
          %930 = dma.done %s924, 16
        $region140: #{tpu_custom_call.1} parent=131 // pred_fallthru
          _
        // Predicated region
        $region141: #{tpu_custom_call.1} parent=131 // pred_check
          %p931 = pneg %p392
        $region142: #{tpu_custom_call.1} parent=131 // pred_check_branch
          %933 = sbr.rel (%p931) target = $region144
        $region143: #{tpu_custom_call.1} parent=131 // pred_region
          %934 = dma.done [#allocation6], 512
        $region144: #{tpu_custom_call.1} parent=131 // pred_fallthru
          _
        // Predicated region
        $region145: #{tpu_custom_call.1} parent=131 // pred_check
          %p935 = pneg %p665
        $region146: #{tpu_custom_call.1} parent=131 // pred_check_branch
          %937 = sbr.rel (%p935) target = $region148
        $region147: #{tpu_custom_call.1} parent=131 // pred_region
          %938 = dma.done [#allocation9], 1536
        $region148: #{tpu_custom_call.1} parent=131 // pred_fallthru
          _
        %p939 = scmp.lt.s32.totalorder %s48, 1
        %s940 = scalar_select %p939, %s48, 1
        %s941 = smul.addr %s940, 2
        %s942 = smul.addr %s941, 8
        %s943 = scalar_lea.vmem %s0, %s942
        %p944 = pneg %p69
        %p945 = pneg %p66
        %p946 = scmp.lt.s32.totalorder %s48, 1
        %s947 = scalar_select %p946, %s48, 1
        %s948 = smul.addr %s947, 2
        %s949 = smul.addr %s948, 8
        %s950 = scalar_lea.vmem %s1, %s949
        %p951 = pneg %p95
        %p952 = pneg %p92
        %p953 = scmp.lt.s32.totalorder %s48, 1
        %s954 = scalar_select %p953, %s48, 1
        %s955 = smul.addr %s954, 2
        %s956 = smul.addr %s955, 8
        %s957 = scalar_lea.vmem %s2, %s956
        %p958 = pneg %p121
        %p959 = pneg %p118
        %p960 = scmp.lt.s32.totalorder %s48, 1
        %s961 = scalar_select %p960, %s48, 1
        %s962 = smul.addr %s961, 2
        %s963 = smul.addr %s962, 8
        %s964 = scalar_lea.vmem %s3, %s963
        %p965 = pneg %p147
        %p966 = pneg %p144
        %p967 = scmp.lt.s32.totalorder %s48, 1
        %s968 = scalar_select %p967, %s48, 1
        %s969 = smul.addr %s968, 2
        %s970 = smul.addr %s969, 8
        %s971 = scalar_lea.vmem %s4, %s970
        %p972 = pneg %p173
        %p973 = pneg %p170
        %p974 = scmp.lt.s32.totalorder %s48, 1
        %s975 = scalar_select %p974, %s48, 1
        %s976 = smul.addr %s975, 2
        %s977 = smul.addr %s976, 8
        %s978 = scalar_lea.vmem %s5, %s977
        %p979 = pneg %p199
        %p980 = pneg %p196
        %p981 = scmp.lt.s32.totalorder %s48, 1
        %s982 = scalar_select %p981, %s48, 1
        %s983 = smul.addr %s982, 3
        %s984 = smul.addr %s983, 8
        %s985 = scalar_lea.vmem %s6, %s984
        %p986 = pneg %p225
        %p987 = pneg %p222
        %p988 = scmp.lt.s32.totalorder %s48, 1
        %s989 = scalar_select %p988, %s48, 1
        %s990 = smul.addr %s989, 3
        %s991 = smul.addr %s990, 8
        %s992 = scalar_lea.vmem %s7, %s991
        %p993 = pneg %p251
        %p994 = pneg %p248
        %p995 = scmp.lt.s32.totalorder %s48, 1
        %s996 = scalar_select %p995, %s48, 1
        %s997 = smul.addr %s996, 3
        %s998 = smul.addr %s997, 8
        %s999 = scalar_lea.vmem %s8, %s998
        %p1000 = pneg %p277
        %p1001 = pneg %p274
        %s1002 = sand.u32 %s290, 1
        %s1003 = scalar_lea.sflag [#allocation4], %s1002
        %s1004 = sand.u32 %s290, 1
        %s1005 = scalar_lea.vmem [#allocation3], %s1004
        %p1006 = pneg %p303
        %p1007 = pneg %p300
        %s1008 = sand.u32 %s48, 1
        %s1009 = scalar_lea.sflag [#allocation6], %s1008
        %s1010 = sand.u32 %s316, 1
        %s1011 = scalar_lea.vmem [#allocation5], %s1010
        %p1012 = pneg %p329
        %p1013 = pneg %p326
        %p1014 = pneg %p350
        %p1015 = pneg %p347
        %p1016 = pneg %p371
        %p1017 = pneg %p368
        %p1018 = pneg %p392
        %p1019 = pneg %p389
        %p1020 = pneg %p413
        %p1021 = pneg %p410
        %p1022 = pneg %p434
        %p1023 = pneg %p431
        %p1024 = pneg %p455
        %p1025 = pneg %p452
        %p1026 = pneg %p476
        %p1027 = pneg %p473
        %p1028 = pneg %p497
        %p1029 = pneg %p494
        %p1030 = pneg %p518
        %p1031 = pneg %p515
        %p1032 = pneg %p539
        %p1033 = pneg %p536
        %p1034 = pneg %p560
        %p1035 = pneg %p557
        %p1036 = pneg %p581
        %p1037 = pneg %p578
        %p1038 = pneg %p602
        %p1039 = pneg %p599
        %p1040 = pneg %p623
        %p1041 = pneg %p620
        %p1042 = pneg %p644
        %p1043 = pneg %p641
        %p1044 = pneg %p665
        %p1045 = pneg %p662
        %p1046 = pneg %p686
        %p1047 = pneg %p683
        %p1048 = pneg %p712
        %p1049 = pneg %p709
        %p1050 = scmp.lt.s32.totalorder %s48, 1
        %s1051 = scalar_select %p1050, %s48, 1
        %s1052 = smul.addr %s1051, 10
        %s1053 = smul.addr %s1052, 8
        %s1054 = scalar_lea.vmem %s28, %s1053
        %p1055 = scmp.lt.s32.totalorder %s48, 1
        %s1056 = scalar_select %p1055, %s48, 1
        %s1057 = smul.addr %s1056, 2
        %s1058 = smul.addr %s1057, 8
        %s1059 = scalar_lea.vmem %s0, %s1058
        %p1060 = scmp.lt.s32.totalorder %s48, 1
        %s1061 = scalar_select %p1060, %s48, 1
        %s1062 = smul.addr %s1061, 2
        %s1063 = smul.addr %s1062, 8
        %s1064 = scalar_lea.vmem %s1, %s1063
        %p1065 = scmp.lt.s32.totalorder %s48, 1
        %s1066 = scalar_select %p1065, %s48, 1
        %s1067 = smul.addr %s1066, 2
        %s1068 = smul.addr %s1067, 8
        %s1069 = scalar_lea.vmem %s2, %s1068
        %p1070 = scmp.lt.s32.totalorder %s48, 1
        %s1071 = scalar_select %p1070, %s48, 1
        %s1072 = smul.addr %s1071, 2
        %s1073 = smul.addr %s1072, 8
        %s1074 = scalar_lea.vmem %s3, %s1073
        %p1075 = scmp.lt.s32.totalorder %s48, 1
        %s1076 = scalar_select %p1075, %s48, 1
        %s1077 = smul.addr %s1076, 2
        %s1078 = smul.addr %s1077, 8
        %s1079 = scalar_lea.vmem %s4, %s1078
        %p1080 = scmp.lt.s32.totalorder %s48, 1
        %s1081 = scalar_select %p1080, %s48, 1
        %s1082 = smul.addr %s1081, 2
        %s1083 = smul.addr %s1082, 8
        %s1084 = scalar_lea.vmem %s5, %s1083
        %p1085 = scmp.lt.s32.totalorder %s48, 1
        %s1086 = scalar_select %p1085, %s48, 1
        %s1087 = smul.addr %s1086, 3
        %s1088 = smul.addr %s1087, 8
        %s1089 = scalar_lea.vmem %s6, %s1088
        %p1090 = scmp.lt.s32.totalorder %s48, 1
        %s1091 = scalar_select %p1090, %s48, 1
        %s1092 = smul.addr %s1091, 3
        %s1093 = smul.addr %s1092, 8
        %s1094 = scalar_lea.vmem %s7, %s1093
        %p1095 = scmp.lt.s32.totalorder %s48, 1
        %s1096 = scalar_select %p1095, %s48, 1
        %s1097 = smul.addr %s1096, 3
        %s1098 = smul.addr %s1097, 8
        %s1099 = scalar_lea.vmem %s8, %s1098
        %p1100 = scmp.lt.s32.totalorder %s48, 1
        %s1101 = scalar_select %p1100, %s48, 1
        %s1102 = smul.addr %s1101, 10
        %s1103 = smul.addr %s1102, 8
        %s1104 = scalar_lea.vmem %s28, %s1103
        %v1105 = vld [vmem:[%s1059] sm:$0xff]
        %v1106 = vld [vmem:[%s1059 + $0x8] sm:$0x3]
        %v1107 = vld [vmem:[%s12] sm:$0xff]
        %v1108 = vld [vmem:[%s12 + $0x8] sm:$0xff]
        %v1109 = vld [vmem:[%s12 + $0x10] sm:$0xff]
        %v1110 = vld [vmem:[%s12 + $0x18] sm:$0xff]
        %v1111 = vld [vmem:[%s12 + $0x20] sm:$0xff]
        %v1112 = vld [vmem:[%s12 + $0x28] sm:$0xff]
        %v1113 = vld [vmem:[%s12 + $0x30] sm:$0xff]
        %v1114 = vld [vmem:[%s12 + $0x38] sm:$0xff]
        %v1115 = vld [vmem:[%s12 + $0x40] sm:$0xff]
        %v1116 = vld [vmem:[%s12 + $0x48] sm:$0xff]
        %v1117 = vld [vmem:[%s12 + $0x50] sm:$0xff]
        %v1118 = vld [vmem:[%s12 + $0x58] sm:$0xff]
        %v1119 = vld [vmem:[%s12 + $0x60] sm:$0xff]
        %v1120 = vld [vmem:[%s12 + $0x68] sm:$0xff]
        %v1121 = vld [vmem:[%s12 + $0x70] sm:$0xff]
        %v1122 = vld [vmem:[%s12 + $0x78] sm:$0xff]
        %1123 = vmatprep.subr.mxu0 0.0
        %1124 = vmatpush1.msra.mxu0 %v1122
        %1125 = vmatprep.subr.mxu0 0.0
        %1126 = vmatpush1.msra.mxu0 %v1121
        %1127 = vmatprep.subr.mxu0 0.0
        %1128 = vmatpush1.msra.mxu0 %v1120
        %1129 = vmatprep.subr.mxu0 0.0
        %1130 = vmatpush1.msra.mxu0 %v1119
        %1131 = vmatprep.subr.mxu0 0.0
        %1132 = vmatpush1.msra.mxu0 %v1118
        %1133 = vmatprep.subr.mxu0 0.0
        %1134 = vmatpush1.msra.mxu0 %v1117
        %1135 = vmatprep.subr.mxu0 0.0
        %1136 = vmatpush1.msra.mxu0 %v1116
        %1137 = vmatprep.subr.mxu0 0.0
        %1138 = vmatpush1.msra.mxu0 %v1115
        %1139 = vmatprep.subr.mxu0 0.0
        %1140 = vmatpush1.msra.mxu0 %v1114
        %1141 = vmatprep.subr.mxu0 0.0
        %1142 = vmatpush1.msra.mxu0 %v1113
        %1143 = vmatprep.subr.mxu0 0.0
        %1144 = vmatpush1.msra.mxu0 %v1112
        %1145 = vmatprep.subr.mxu0 0.0
        %1146 = vmatpush1.msra.mxu0 %v1111
        %1147 = vmatprep.subr.mxu0 0.0
        %1148 = vmatpush1.msra.mxu0 %v1110
        %1149 = vmatprep.subr.mxu0 0.0
        %1150 = vmatpush1.msra.mxu0 %v1109
        %1151 = vmatprep.subr.mxu0 0.0
        %1152 = vmatpush1.msra.mxu0 %v1108
        %1153 = vmatprep.subr.mxu0 0.0
        %1154 = vmatpush1.msra.mxu0 %v1107
        %1155 = vmatprep.subr.mxu0 0.0
        %1156 = vmatpush2.msra.mxu0 0.0
        %1157 = vmatprep.subr.mxu0 0.0
        %1158 = vmatpush2.msra.mxu0 0.0
        %1159 = vmatprep.subr.mxu0 0.0
        %1160 = vmatpush2.msra.mxu0 0.0
        %1161 = vmatprep.subr.mxu0 0.0
        %1162 = vmatpush2.msra.mxu0 0.0
        %1163 = vmatprep.subr.mxu0 0.0
        %1164 = vmatpush2.msra.mxu0 0.0
        %1165 = vmatprep.subr.mxu0 0.0
        %1166 = vmatpush2.msra.mxu0 0.0
        %1167 = vmatprep.subr.mxu0 0.0
        %1168 = vmatpush2.msra.mxu0 0.0
        %1169 = vmatprep.subr.mxu0 0.0
        %1170 = vmatpush2.msra.mxu0 0.0
        %1171 = vmatprep.subr.mxu0 0.0
        %1172 = vmatpush2.msra.mxu0 0.0
        %1173 = vmatprep.subr.mxu0 0.0
        %1174 = vmatpush2.msra.mxu0 0.0
        %1175 = vmatprep.subr.mxu0 0.0
        %1176 = vmatpush2.msra.mxu0 0.0
        %1177 = vmatprep.subr.mxu0 0.0
        %1178 = vmatpush2.msra.mxu0 0.0
        %1179 = vmatprep.subr.mxu0 0.0
        %1180 = vmatpush2.msra.mxu0 0.0
        %1181 = vmatprep.subr.mxu0 0.0
        %1182 = vmatpush2.msra.mxu0 0.0
        %1183 = vmatprep.subr.mxu0 0.0
        %1184 = vmatpush2.msra.mxu0 0.0
        %1185 = vmatprep.subr.mxu0 0.0
        %1186 = vmatpush2.msra.mxu0 0.0
        %1187 = vmatprep.mubr.f32.mxu0 0.0
        %1188 = vmatmul.mubr.f32.gmra.mxu0 %v1105
        %v1189 = vpop.f32.mrf.mxu0
        %v1190 = vadd.f32 0.0, %v1189
        %v1191 = vpop.f32.mrf.mxu0
        %1192 = vmatprep.mubr.f32.mxu0 0.0
        %1193 = vmatmul.mubr.f32.gmra.mxu0 %v1106
        %v1194 = vpop.f32.mrf.mxu0
        %v1195 = vadd.f32 0.0, %v1194
        %v1196 = vpop.f32.mrf.mxu0
        %1197 = vdwg.mxu0
        %v1198 = vld [vmem:[%s1064] sm:$0xff]
        %v1199 = vld [vmem:[%s1064 + $0x8] sm:$0x3]
        %1200 = vmatprep.subr.mxu0 0.0
        %1201 = vmatpush1.msra.mxu0 %v1122
        %1202 = vmatprep.subr.mxu0 0.0
        %1203 = vmatpush1.msra.mxu0 %v1121
        %1204 = vmatprep.subr.mxu0 0.0
        %1205 = vmatpush1.msra.mxu0 %v1120
        %1206 = vmatprep.subr.mxu0 0.0
        %1207 = vmatpush1.msra.mxu0 %v1119
        %1208 = vmatprep.subr.mxu0 0.0
        %1209 = vmatpush1.msra.mxu0 %v1118
        %1210 = vmatprep.subr.mxu0 0.0
        %1211 = vmatpush1.msra.mxu0 %v1117
        %1212 = vmatprep.subr.mxu0 0.0
        %1213 = vmatpush1.msra.mxu0 %v1116
        %1214 = vmatprep.subr.mxu0 0.0
        %1215 = vmatpush1.msra.mxu0 %v1115
        %1216 = vmatprep.subr.mxu0 0.0
        %1217 = vmatpush1.msra.mxu0 %v1114
        %1218 = vmatprep.subr.mxu0 0.0
        %1219 = vmatpush1.msra.mxu0 %v1113
        %1220 = vmatprep.subr.mxu0 0.0
        %1221 = vmatpush1.msra.mxu0 %v1112
        %1222 = vmatprep.subr.mxu0 0.0
        %1223 = vmatpush1.msra.mxu0 %v1111
        %1224 = vmatprep.subr.mxu0 0.0
        %1225 = vmatpush1.msra.mxu0 %v1110
        %1226 = vmatprep.subr.mxu0 0.0
        %1227 = vmatpush1.msra.mxu0 %v1109
        %1228 = vmatprep.subr.mxu0 0.0
        %1229 = vmatpush1.msra.mxu0 %v1108
        %1230 = vmatprep.subr.mxu0 0.0
        %1231 = vmatpush1.msra.mxu0 %v1107
        %1232 = vmatprep.subr.mxu0 0.0
        %1233 = vmatpush2.msra.mxu0 0.0
        %1234 = vmatprep.subr.mxu0 0.0
        %1235 = vmatpush2.msra.mxu0 0.0
        %1236 = vmatprep.subr.mxu0 0.0
        %1237 = vmatpush2.msra.mxu0 0.0
        %1238 = vmatprep.subr.mxu0 0.0
        %1239 = vmatpush2.msra.mxu0 0.0
        %1240 = vmatprep.subr.mxu0 0.0
        %1241 = vmatpush2.msra.mxu0 0.0
        %1242 = vmatprep.subr.mxu0 0.0
        %1243 = vmatpush2.msra.mxu0 0.0
        %1244 = vmatprep.subr.mxu0 0.0
        %1245 = vmatpush2.msra.mxu0 0.0
        %1246 = vmatprep.subr.mxu0 0.0
        %1247 = vmatpush2.msra.mxu0 0.0
        %1248 = vmatprep.subr.mxu0 0.0
        %1249 = vmatpush2.msra.mxu0 0.0
        %1250 = vmatprep.subr.mxu0 0.0
        %1251 = vmatpush2.msra.mxu0 0.0
        %1252 = vmatprep.subr.mxu0 0.0
        %1253 = vmatpush2.msra.mxu0 0.0
        %1254 = vmatprep.subr.mxu0 0.0
        %1255 = vmatpush2.msra.mxu0 0.0
        %1256 = vmatprep.subr.mxu0 0.0
        %1257 = vmatpush2.msra.mxu0 0.0
        %1258 = vmatprep.subr.mxu0 0.0
        %1259 = vmatpush2.msra.mxu0 0.0
        %1260 = vmatprep.subr.mxu0 0.0
        %1261 = vmatpush2.msra.mxu0 0.0
        %1262 = vmatprep.subr.mxu0 0.0
        %1263 = vmatpush2.msra.mxu0 0.0
        %1264 = vmatprep.mubr.f32.mxu0 0.0
        %1265 = vmatmul.mubr.f32.gmra.mxu0 %v1198
        %v1266 = vpop.f32.mrf.mxu0
        %v1267 = vadd.f32 0.0, %v1266
        %v1268 = vpop.f32.mrf.mxu0
        %1269 = vmatprep.mubr.f32.mxu0 0.0
        %1270 = vmatmul.mubr.f32.gmra.mxu0 %v1199
        %v1271 = vpop.f32.mrf.mxu0
        %v1272 = vadd.f32 0.0, %v1271
        %v1273 = vpop.f32.mrf.mxu0
        %1274 = vdwg.mxu0
        %v1275 = vld [vmem:[%s1069] sm:$0xff]
        %v1276 = vld [vmem:[%s1069 + $0x8] sm:$0x3]
        %v1277 = vld [vmem:[%s1074] sm:$0xff]
        %v1278 = vld [vmem:[%s1074 + $0x8] sm:$0x3]
        %v1279 = vld [vmem:[%s1079] sm:$0xff]
        %v1280 = vld [vmem:[%s1079 + $0x8] sm:$0x3]
        %v1281 = vld [vmem:[%s1084] sm:$0xff]
        %v1282 = vld [vmem:[%s1084 + $0x8] sm:$0x3]
        %vm1283 = vcmask 80896
        %v1285 = vsel %vm1283, %v1275, 0
        %v1288 = vsel %vm1283, %v1276, 0
        %vm1290 = vcmask 1041408
        %v1292 = vsel %vm1290, %v1195, 0
        %1294 = vmatprep.subr.mxu0 0.0
        %1295 = vmatpush1.msra.mxu0 0.0
        %1296 = vmatprep.subr.mxu0 0.0
        %1297 = vmatpush1.msra.mxu0 0.0
        %1298 = vmatprep.subr.mxu0 0.0
        %1299 = vmatpush1.msra.mxu0 0.0
        %1300 = vmatprep.subr.mxu0 0.0
        %1301 = vmatpush1.msra.mxu0 0.0
        %1302 = vmatprep.subr.mxu0 0.0
        %1303 = vmatpush1.msra.mxu0 0.0
        %1304 = vmatprep.subr.mxu0 0.0
        %1305 = vmatpush1.msra.mxu0 0.0
        %1306 = vmatprep.subr.mxu0 0.0
        %1307 = vmatpush1.msra.mxu0 0.0
        %1308 = vmatprep.subr.mxu0 0.0
        %1309 = vmatpush1.msra.mxu0 0.0
        %1310 = vmatprep.subr.mxu0 0.0
        %1311 = vmatpush1.msra.mxu0 0.0
        %1312 = vmatprep.subr.mxu0 0.0
        %1313 = vmatpush1.msra.mxu0 0.0
        %1314 = vmatprep.subr.mxu0 0.0
        %1315 = vmatpush1.msra.mxu0 0.0
        %1316 = vmatprep.subr.mxu0 0.0
        %1317 = vmatpush1.msra.mxu0 0.0
        %1318 = vmatprep.subr.mxu0 0.0
        %1319 = vmatpush1.msra.mxu0 0.0
        %1320 = vmatprep.subr.mxu0 0.0
        %1321 = vmatpush1.msra.mxu0 0.0
        %1322 = vmatprep.subr.mxu0 0.0
        %1323 = vmatpush1.msra.mxu0 %v1292
        %1324 = vmatprep.subr.mxu0 0.0
        %1325 = vmatpush1.msra.mxu0 %v1190
        %1326 = vmatprep.subr.mxu0 0.0
        %1327 = vmatpush2.msra.mxu0 0.0
        %1328 = vmatprep.subr.mxu0 0.0
        %1329 = vmatpush2.msra.mxu0 0.0
        %1330 = vmatprep.subr.mxu0 0.0
        %1331 = vmatpush2.msra.mxu0 0.0
        %1332 = vmatprep.subr.mxu0 0.0
        %1333 = vmatpush2.msra.mxu0 0.0
        %1334 = vmatprep.subr.mxu0 0.0
        %1335 = vmatpush2.msra.mxu0 0.0
        %1336 = vmatprep.subr.mxu0 0.0
        %1337 = vmatpush2.msra.mxu0 0.0
        %1338 = vmatprep.subr.mxu0 0.0
        %1339 = vmatpush2.msra.mxu0 0.0
        %1340 = vmatprep.subr.mxu0 0.0
        %1341 = vmatpush2.msra.mxu0 0.0
        %1342 = vmatprep.subr.mxu0 0.0
        %1343 = vmatpush2.msra.mxu0 0.0
        %1344 = vmatprep.subr.mxu0 0.0
        %1345 = vmatpush2.msra.mxu0 0.0
        %1346 = vmatprep.subr.mxu0 0.0
        %1347 = vmatpush2.msra.mxu0 0.0
        %1348 = vmatprep.subr.mxu0 0.0
        %1349 = vmatpush2.msra.mxu0 0.0
        %1350 = vmatprep.subr.mxu0 0.0
        %1351 = vmatpush2.msra.mxu0 0.0
        %1352 = vmatprep.subr.mxu0 0.0
        %1353 = vmatpush2.msra.mxu0 0.0
        %1354 = vmatprep.subr.mxu0 0.0
        %1355 = vmatpush2.msra.mxu0 0.0
        %1356 = vmatprep.subr.mxu0 0.0
        %1357 = vmatpush2.msra.mxu0 0.0
        %1358 = vmatprep.mubr.f32.mxu0 0.0
        %1359 = vmatmul.mubr.f32.gmra.mxu0 %v1285
        %v1360 = vpop.f32.mrf.mxu0
        %v1361 = vadd.f32 0.0, %v1360
        %v1362 = vpop.f32.mrf.mxu0
        %1363 = vmatprep.mubr.f32.mxu0 0.0
        %1364 = vmatmul.mubr.f32.gmra.mxu0 %v1288
        %v1365 = vpop.f32.mrf.mxu0
        %v1366 = vadd.f32 0.0, %v1365
        %v1367 = vpop.f32.mrf.mxu0
        %1368 = vdwg.mxu0
        %v1370 = vsel %vm1283, %v1277, 0
        %v1373 = vsel %vm1283, %v1278, 0
        %1375 = vmatprep.subr.mxu0 0.0
        %1376 = vmatpush1.msra.mxu0 0.0
        %1377 = vmatprep.subr.mxu0 0.0
        %1378 = vmatpush1.msra.mxu0 0.0
        %1379 = vmatprep.subr.mxu0 0.0
        %1380 = vmatpush1.msra.mxu0 0.0
        %1381 = vmatprep.subr.mxu0 0.0
        %1382 = vmatpush1.msra.mxu0 0.0
        %1383 = vmatprep.subr.mxu0 0.0
        %1384 = vmatpush1.msra.mxu0 0.0
        %1385 = vmatprep.subr.mxu0 0.0
        %1386 = vmatpush1.msra.mxu0 0.0
        %1387 = vmatprep.subr.mxu0 0.0
        %1388 = vmatpush1.msra.mxu0 0.0
        %1389 = vmatprep.subr.mxu0 0.0
        %1390 = vmatpush1.msra.mxu0 0.0
        %1391 = vmatprep.subr.mxu0 0.0
        %1392 = vmatpush1.msra.mxu0 0.0
        %1393 = vmatprep.subr.mxu0 0.0
        %1394 = vmatpush1.msra.mxu0 0.0
        %1395 = vmatprep.subr.mxu0 0.0
        %1396 = vmatpush1.msra.mxu0 0.0
        %1397 = vmatprep.subr.mxu0 0.0
        %1398 = vmatpush1.msra.mxu0 0.0
        %1399 = vmatprep.subr.mxu0 0.0
        %1400 = vmatpush1.msra.mxu0 0.0
        %1401 = vmatprep.subr.mxu0 0.0
        %1402 = vmatpush1.msra.mxu0 0.0
        %1403 = vmatprep.subr.mxu0 0.0
        %1404 = vmatpush1.msra.mxu0 %v1292
        %1405 = vmatprep.subr.mxu0 0.0
        %1406 = vmatpush1.msra.mxu0 %v1190
        %1407 = vmatprep.subr.mxu0 0.0
        %1408 = vmatpush2.msra.mxu0 0.0
        %1409 = vmatprep.subr.mxu0 0.0
        %1410 = vmatpush2.msra.mxu0 0.0
        %1411 = vmatprep.subr.mxu0 0.0
        %1412 = vmatpush2.msra.mxu0 0.0
        %1413 = vmatprep.subr.mxu0 0.0
        %1414 = vmatpush2.msra.mxu0 0.0
        %1415 = vmatprep.subr.mxu0 0.0
        %1416 = vmatpush2.msra.mxu0 0.0
        %1417 = vmatprep.subr.mxu0 0.0
        %1418 = vmatpush2.msra.mxu0 0.0
        %1419 = vmatprep.subr.mxu0 0.0
        %1420 = vmatpush2.msra.mxu0 0.0
        %1421 = vmatprep.subr.mxu0 0.0
        %1422 = vmatpush2.msra.mxu0 0.0
        %1423 = vmatprep.subr.mxu0 0.0
        %1424 = vmatpush2.msra.mxu0 0.0
        %1425 = vmatprep.subr.mxu0 0.0
        %1426 = vmatpush2.msra.mxu0 0.0
        %1427 = vmatprep.subr.mxu0 0.0
        %1428 = vmatpush2.msra.mxu0 0.0
        %1429 = vmatprep.subr.mxu0 0.0
        %1430 = vmatpush2.msra.mxu0 0.0
        %1431 = vmatprep.subr.mxu0 0.0
        %1432 = vmatpush2.msra.mxu0 0.0
        %1433 = vmatprep.subr.mxu0 0.0
        %1434 = vmatpush2.msra.mxu0 0.0
        %1435 = vmatprep.subr.mxu0 0.0
        %1436 = vmatpush2.msra.mxu0 0.0
        %1437 = vmatprep.subr.mxu0 0.0
        %1438 = vmatpush2.msra.mxu0 0.0
        %1439 = vmatprep.mubr.f32.mxu0 0.0
        %1440 = vmatmul.mubr.f32.gmra.mxu0 %v1370
        %v1441 = vpop.f32.mrf.mxu0
        %v1442 = vadd.f32 0.0, %v1441
        %v1443 = vpop.f32.mrf.mxu0
        %1444 = vmatprep.mubr.f32.mxu0 0.0
        %1445 = vmatmul.mubr.f32.gmra.mxu0 %v1373
        %v1446 = vpop.f32.mrf.mxu0
        %v1447 = vadd.f32 0.0, %v1446
        %v1448 = vpop.f32.mrf.mxu0
        %1449 = vdwg.mxu0
        %v1450 = vld [vmem:[%s14] sm:$0xff]
        %v1451 = vld [vmem:[%s14 + $0x8] sm:$0xff]
        %v1452 = vld [vmem:[%s14 + $0x10] sm:$0xff]
        %v1453 = vld [vmem:[%s14 + $0x18] sm:$0xff]
        %v1454 = vld [vmem:[%s15] sm:$0xff]
        %v1455 = vld [vmem:[%s15 + $0x8] sm:$0xff]
        %v1456 = vld [vmem:[%s15 + $0x10] sm:$0xff]
        %v1457 = vld [vmem:[%s15 + $0x18] sm:$0xff]
        %vm1458 = vcmask 261120
        %v1460 = vsel %vm1458, %v1267, 0
        %v1463 = vsel %vm1458, %v1272, 0
        %1465 = vmatprep.subr.mxu0 0.0
        %1466 = vmatpush1.msra.mxu0 0.0
        %1467 = vmatprep.subr.mxu0 0.0
        %1468 = vmatpush1.msra.mxu0 0.0
        %1469 = vmatprep.subr.mxu0 0.0
        %1470 = vmatpush1.msra.mxu0 0.0
        %1471 = vmatprep.subr.mxu0 0.0
        %1472 = vmatpush1.msra.mxu0 0.0
        %1473 = vmatprep.subr.mxu0 0.0
        %1474 = vmatpush1.msra.mxu0 0.0
        %1475 = vmatprep.subr.mxu0 0.0
        %1476 = vmatpush1.msra.mxu0 0.0
        %1477 = vmatprep.subr.mxu0 0.0
        %1478 = vmatpush1.msra.mxu0 0.0
        %1479 = vmatprep.subr.mxu0 0.0
        %1480 = vmatpush1.msra.mxu0 0.0
        %1481 = vmatprep.subr.mxu0 0.0
        %1482 = vmatpush1.msra.mxu0 0.0
        %1483 = vmatprep.subr.mxu0 0.0
        %1484 = vmatpush1.msra.mxu0 0.0
        %1485 = vmatprep.subr.mxu0 0.0
        %1486 = vmatpush1.msra.mxu0 0.0
        %1487 = vmatprep.subr.mxu0 0.0
        %1488 = vmatpush1.msra.mxu0 0.0
        %1489 = vmatprep.subr.mxu0 0.0
        %1490 = vmatpush1.msra.mxu0 %v1457
        %1491 = vmatprep.subr.mxu0 0.0
        %1492 = vmatpush1.msra.mxu0 %v1456
        %1493 = vmatprep.subr.mxu0 0.0
        %1494 = vmatpush1.msra.mxu0 %v1455
        %1495 = vmatprep.subr.mxu0 0.0
        %1496 = vmatpush1.msra.mxu0 %v1454
        %1497 = vmatprep.subr.mxu0 0.0
        %1498 = vmatpush2.msra.mxu0 0.0
        %1499 = vmatprep.subr.mxu0 0.0
        %1500 = vmatpush2.msra.mxu0 0.0
        %1501 = vmatprep.subr.mxu0 0.0
        %1502 = vmatpush2.msra.mxu0 0.0
        %1503 = vmatprep.subr.mxu0 0.0
        %1504 = vmatpush2.msra.mxu0 0.0
        %1505 = vmatprep.subr.mxu0 0.0
        %1506 = vmatpush2.msra.mxu0 0.0
        %1507 = vmatprep.subr.mxu0 0.0
        %1508 = vmatpush2.msra.mxu0 0.0
        %1509 = vmatprep.subr.mxu0 0.0
        %1510 = vmatpush2.msra.mxu0 0.0
        %1511 = vmatprep.subr.mxu0 0.0
        %1512 = vmatpush2.msra.mxu0 0.0
        %1513 = vmatprep.subr.mxu0 0.0
        %1514 = vmatpush2.msra.mxu0 0.0
        %1515 = vmatprep.subr.mxu0 0.0
        %1516 = vmatpush2.msra.mxu0 0.0
        %1517 = vmatprep.subr.mxu0 0.0
        %1518 = vmatpush2.msra.mxu0 0.0
        %1519 = vmatprep.subr.mxu0 0.0
        %1520 = vmatpush2.msra.mxu0 0.0
        %1521 = vmatprep.subr.mxu0 0.0
        %1522 = vmatpush2.msra.mxu0 0.0
        %1523 = vmatprep.subr.mxu0 0.0
        %1524 = vmatpush2.msra.mxu0 0.0
        %1525 = vmatprep.subr.mxu0 0.0
        %1526 = vmatpush2.msra.mxu0 0.0
        %1527 = vmatprep.subr.mxu0 0.0
        %1528 = vmatpush2.msra.mxu0 0.0
        %1529 = vmatprep.mubr.f32.mxu0 0.0
        %1530 = vmatmul.mubr.f32.gmra.mxu0 %v1460
        %v1531 = vpop.f32.mrf.mxu0
        %v1532 = vadd.f32 0.0, %v1531
        %v1533 = vpop.f32.mrf.mxu0
        %1534 = vmatprep.mubr.f32.mxu0 0.0
        %1535 = vmatmul.mubr.f32.gmra.mxu0 %v1463
        %v1536 = vpop.f32.mrf.mxu0
        %v1537 = vadd.f32 0.0, %v1536
        %v1538 = vpop.f32.mrf.mxu0
        %1539 = vdwg.mxu0
        %v1541 = vsel %vm1458, %v1361, 0
        %v1544 = vsel %vm1458, %v1366, 0
        %1546 = vmatprep.subr.mxu0 0.0
        %1547 = vmatpush1.msra.mxu0 0.0
        %1548 = vmatprep.subr.mxu0 0.0
        %1549 = vmatpush1.msra.mxu0 0.0
        %1550 = vmatprep.subr.mxu0 0.0
        %1551 = vmatpush1.msra.mxu0 0.0
        %1552 = vmatprep.subr.mxu0 0.0
        %1553 = vmatpush1.msra.mxu0 0.0
        %1554 = vmatprep.subr.mxu0 0.0
        %1555 = vmatpush1.msra.mxu0 0.0
        %1556 = vmatprep.subr.mxu0 0.0
        %1557 = vmatpush1.msra.mxu0 0.0
        %1558 = vmatprep.subr.mxu0 0.0
        %1559 = vmatpush1.msra.mxu0 0.0
        %1560 = vmatprep.subr.mxu0 0.0
        %1561 = vmatpush1.msra.mxu0 0.0
        %1562 = vmatprep.subr.mxu0 0.0
        %1563 = vmatpush1.msra.mxu0 0.0
        %1564 = vmatprep.subr.mxu0 0.0
        %1565 = vmatpush1.msra.mxu0 0.0
        %1566 = vmatprep.subr.mxu0 0.0
        %1567 = vmatpush1.msra.mxu0 0.0
        %1568 = vmatprep.subr.mxu0 0.0
        %1569 = vmatpush1.msra.mxu0 0.0
        %1570 = vmatprep.subr.mxu0 0.0
        %1571 = vmatpush1.msra.mxu0 %v1453
        %1572 = vmatprep.subr.mxu0 0.0
        %1573 = vmatpush1.msra.mxu0 %v1452
        %1574 = vmatprep.subr.mxu0 0.0
        %1575 = vmatpush1.msra.mxu0 %v1451
        %1576 = vmatprep.subr.mxu0 0.0
        %1577 = vmatpush1.msra.mxu0 %v1450
        %1578 = vmatprep.subr.mxu0 0.0
        %1579 = vmatpush2.msra.mxu0 0.0
        %1580 = vmatprep.subr.mxu0 0.0
        %1581 = vmatpush2.msra.mxu0 0.0
        %1582 = vmatprep.subr.mxu0 0.0
        %1583 = vmatpush2.msra.mxu0 0.0
        %1584 = vmatprep.subr.mxu0 0.0
        %1585 = vmatpush2.msra.mxu0 0.0
        %1586 = vmatprep.subr.mxu0 0.0
        %1587 = vmatpush2.msra.mxu0 0.0
        %1588 = vmatprep.subr.mxu0 0.0
        %1589 = vmatpush2.msra.mxu0 0.0
        %1590 = vmatprep.subr.mxu0 0.0
        %1591 = vmatpush2.msra.mxu0 0.0
        %1592 = vmatprep.subr.mxu0 0.0
        %1593 = vmatpush2.msra.mxu0 0.0
        %1594 = vmatprep.subr.mxu0 0.0
        %1595 = vmatpush2.msra.mxu0 0.0
        %1596 = vmatprep.subr.mxu0 0.0
        %1597 = vmatpush2.msra.mxu0 0.0
        %1598 = vmatprep.subr.mxu0 0.0
        %1599 = vmatpush2.msra.mxu0 0.0
        %1600 = vmatprep.subr.mxu0 0.0
        %1601 = vmatpush2.msra.mxu0 0.0
        %1602 = vmatprep.subr.mxu0 0.0
        %1603 = vmatpush2.msra.mxu0 0.0
        %1604 = vmatprep.subr.mxu0 0.0
        %1605 = vmatpush2.msra.mxu0 0.0
        %1606 = vmatprep.subr.mxu0 0.0
        %1607 = vmatpush2.msra.mxu0 0.0
        %1608 = vmatprep.subr.mxu0 0.0
        %1609 = vmatpush2.msra.mxu0 0.0
        %1610 = vmatprep.mubr.f32.mxu0 0.0
        %1611 = vmatmul.mubr.f32.gmra.mxu0 %v1541
        %v1612 = vpop.f32.mrf.mxu0
        %v1613 = vadd.f32 %v1532, %v1612
        %v1614 = vpop.f32.mrf.mxu0
        %1615 = vmatprep.mubr.f32.mxu0 0.0
        %1616 = vmatmul.mubr.f32.gmra.mxu0 %v1544
        %v1617 = vpop.f32.mrf.mxu0
        %v1618 = vadd.f32 %v1537, %v1617
        %v1619 = vpop.f32.mrf.mxu0
        %1620 = vdwg.mxu0
        %v1621 = vld [vmem:[%s16] sm:$0xff]
        %v1622 = vld [vmem:[%s16 + $0x8] sm:$0xff]
        %v1623 = vld [vmem:[%s16 + $0x10] sm:$0xff]
        %v1624 = vld [vmem:[%s16 + $0x18] sm:$0xff]
        %v1626 = vsel %vm1458, %v1442, 0
        %v1629 = vsel %vm1458, %v1447, 0
        %1631 = vmatprep.subr.mxu0 0.0
        %1632 = vmatpush1.msra.mxu0 0.0
        %1633 = vmatprep.subr.mxu0 0.0
        %1634 = vmatpush1.msra.mxu0 0.0
        %1635 = vmatprep.subr.mxu0 0.0
        %1636 = vmatpush1.msra.mxu0 0.0
        %1637 = vmatprep.subr.mxu0 0.0
        %1638 = vmatpush1.msra.mxu0 0.0
        %1639 = vmatprep.subr.mxu0 0.0
        %1640 = vmatpush1.msra.mxu0 0.0
        %1641 = vmatprep.subr.mxu0 0.0
        %1642 = vmatpush1.msra.mxu0 0.0
        %1643 = vmatprep.subr.mxu0 0.0
        %1644 = vmatpush1.msra.mxu0 0.0
        %1645 = vmatprep.subr.mxu0 0.0
        %1646 = vmatpush1.msra.mxu0 0.0
        %1647 = vmatprep.subr.mxu0 0.0
        %1648 = vmatpush1.msra.mxu0 0.0
        %1649 = vmatprep.subr.mxu0 0.0
        %1650 = vmatpush1.msra.mxu0 0.0
        %1651 = vmatprep.subr.mxu0 0.0
        %1652 = vmatpush1.msra.mxu0 0.0
        %1653 = vmatprep.subr.mxu0 0.0
        %1654 = vmatpush1.msra.mxu0 0.0
        %1655 = vmatprep.subr.mxu0 0.0
        %1656 = vmatpush1.msra.mxu0 %v1624
        %1657 = vmatprep.subr.mxu0 0.0
        %1658 = vmatpush1.msra.mxu0 %v1623
        %1659 = vmatprep.subr.mxu0 0.0
        %1660 = vmatpush1.msra.mxu0 %v1622
        %1661 = vmatprep.subr.mxu0 0.0
        %1662 = vmatpush1.msra.mxu0 %v1621
        %1663 = vmatprep.subr.mxu0 0.0
        %1664 = vmatpush2.msra.mxu0 0.0
        %1665 = vmatprep.subr.mxu0 0.0
        %1666 = vmatpush2.msra.mxu0 0.0
        %1667 = vmatprep.subr.mxu0 0.0
        %1668 = vmatpush2.msra.mxu0 0.0
        %1669 = vmatprep.subr.mxu0 0.0
        %1670 = vmatpush2.msra.mxu0 0.0
        %1671 = vmatprep.subr.mxu0 0.0
        %1672 = vmatpush2.msra.mxu0 0.0
        %1673 = vmatprep.subr.mxu0 0.0
        %1674 = vmatpush2.msra.mxu0 0.0
        %1675 = vmatprep.subr.mxu0 0.0
        %1676 = vmatpush2.msra.mxu0 0.0
        %1677 = vmatprep.subr.mxu0 0.0
        %1678 = vmatpush2.msra.mxu0 0.0
        %1679 = vmatprep.subr.mxu0 0.0
        %1680 = vmatpush2.msra.mxu0 0.0
        %1681 = vmatprep.subr.mxu0 0.0
        %1682 = vmatpush2.msra.mxu0 0.0
        %1683 = vmatprep.subr.mxu0 0.0
        %1684 = vmatpush2.msra.mxu0 0.0
        %1685 = vmatprep.subr.mxu0 0.0
        %1686 = vmatpush2.msra.mxu0 0.0
        %1687 = vmatprep.subr.mxu0 0.0
        %1688 = vmatpush2.msra.mxu0 0.0
        %1689 = vmatprep.subr.mxu0 0.0
        %1690 = vmatpush2.msra.mxu0 0.0
        %1691 = vmatprep.subr.mxu0 0.0
        %1692 = vmatpush2.msra.mxu0 0.0
        %1693 = vmatprep.subr.mxu0 0.0
        %1694 = vmatpush2.msra.mxu0 0.0
        %1695 = vmatprep.mubr.f32.mxu0 0.0
        %1696 = vmatmul.mubr.f32.gmra.mxu0 %v1626
        %v1697 = vpop.f32.mrf.mxu0
        %v1698 = vadd.f32 0.0, %v1697
        %v1699 = vpop.f32.mrf.mxu0
        %1700 = vmatprep.mubr.f32.mxu0 0.0
        %1701 = vmatmul.mubr.f32.gmra.mxu0 %v1629
        %v1702 = vpop.f32.mrf.mxu0
        %v1703 = vadd.f32 0.0, %v1702
        %v1704 = vpop.f32.mrf.mxu0
        %1705 = vdwg.mxu0
        %v1706 = vadd.f32 %v1613, %v1698
        %v1707 = vadd.f32 %v1618, %v1703
        %v1708 = vld [vmem:[%s17] sm:$0x1]
        %v1710 = vlaneseq
        %v1711 = vshrl.u32 %v1710, 7
        %v1712 = vsub.s32 0, %v1711
        %v1713 = vrot.slane %v1708, %v1712
        %v1715 = vadd.f32 %v1706, %v1713
        %v1716 = vadd.f32 %v1707, %v1713
        %v1717 = vmax.f32 %v1715, 0.0
        %v1718 = vmax.f32 %v1716, 0.0
        %v1719 = vld [vmem:[%s18] sm:$0xff]
        %v1720 = vld [vmem:[%s18 + $0x8] sm:$0xff]
        %v1721 = vld [vmem:[%s18 + $0x10] sm:$0xff]
        %v1722 = vld [vmem:[%s18 + $0x18] sm:$0xff]
        %v1723 = vld [vmem:[%s19] sm:$0x1]
        %v1725 = vlaneseq
        %v1726 = vshrl.u32 %v1725, 7
        %v1727 = vsub.s32 0, %v1726
        %v1728 = vrot.slane %v1723, %v1727
        %v1731 = vsel %vm1458, %v1717, 0
        %v1734 = vsel %vm1458, %v1718, 0
        %1736 = vmatprep.subr.mxu0 0.0
        %1737 = vmatpush1.msra.mxu0 0.0
        %1738 = vmatprep.subr.mxu0 0.0
        %1739 = vmatpush1.msra.mxu0 0.0
        %1740 = vmatprep.subr.mxu0 0.0
        %1741 = vmatpush1.msra.mxu0 0.0
        %1742 = vmatprep.subr.mxu0 0.0
        %1743 = vmatpush1.msra.mxu0 0.0
        %1744 = vmatprep.subr.mxu0 0.0
        %1745 = vmatpush1.msra.mxu0 0.0
        %1746 = vmatprep.subr.mxu0 0.0
        %1747 = vmatpush1.msra.mxu0 0.0
        %1748 = vmatprep.subr.mxu0 0.0
        %1749 = vmatpush1.msra.mxu0 0.0
        %1750 = vmatprep.subr.mxu0 0.0
        %1751 = vmatpush1.msra.mxu0 0.0
        %1752 = vmatprep.subr.mxu0 0.0
        %1753 = vmatpush1.msra.mxu0 0.0
        %1754 = vmatprep.subr.mxu0 0.0
        %1755 = vmatpush1.msra.mxu0 0.0
        %1756 = vmatprep.subr.mxu0 0.0
        %1757 = vmatpush1.msra.mxu0 0.0
        %1758 = vmatprep.subr.mxu0 0.0
        %1759 = vmatpush1.msra.mxu0 0.0
        %1760 = vmatprep.subr.mxu0 0.0
        %1761 = vmatpush1.msra.mxu0 %v1722
        %1762 = vmatprep.subr.mxu0 0.0
        %1763 = vmatpush1.msra.mxu0 %v1721
        %1764 = vmatprep.subr.mxu0 0.0
        %1765 = vmatpush1.msra.mxu0 %v1720
        %1766 = vmatprep.subr.mxu0 0.0
        %1767 = vmatpush1.msra.mxu0 %v1719
        %1768 = vmatprep.subr.mxu0 0.0
        %1769 = vmatpush2.msra.mxu0 0.0
        %1770 = vmatprep.subr.mxu0 0.0
        %1771 = vmatpush2.msra.mxu0 0.0
        %1772 = vmatprep.subr.mxu0 0.0
        %1773 = vmatpush2.msra.mxu0 0.0
        %1774 = vmatprep.subr.mxu0 0.0
        %1775 = vmatpush2.msra.mxu0 0.0
        %1776 = vmatprep.subr.mxu0 0.0
        %1777 = vmatpush2.msra.mxu0 0.0
        %1778 = vmatprep.subr.mxu0 0.0
        %1779 = vmatpush2.msra.mxu0 0.0
        %1780 = vmatprep.subr.mxu0 0.0
        %1781 = vmatpush2.msra.mxu0 0.0
        %1782 = vmatprep.subr.mxu0 0.0
        %1783 = vmatpush2.msra.mxu0 0.0
        %1784 = vmatprep.subr.mxu0 0.0
        %1785 = vmatpush2.msra.mxu0 0.0
        %1786 = vmatprep.subr.mxu0 0.0
        %1787 = vmatpush2.msra.mxu0 0.0
        %1788 = vmatprep.subr.mxu0 0.0
        %1789 = vmatpush2.msra.mxu0 0.0
        %1790 = vmatprep.subr.mxu0 0.0
        %1791 = vmatpush2.msra.mxu0 0.0
        %1792 = vmatprep.subr.mxu0 0.0
        %1793 = vmatpush2.msra.mxu0 0.0
        %1794 = vmatprep.subr.mxu0 0.0
        %1795 = vmatpush2.msra.mxu0 0.0
        %1796 = vmatprep.subr.mxu0 0.0
        %1797 = vmatpush2.msra.mxu0 0.0
        %1798 = vmatprep.subr.mxu0 0.0
        %1799 = vmatpush2.msra.mxu0 0.0
        %1800 = vmatprep.mubr.f32.mxu0 0.0
        %1801 = vmatmul.mubr.f32.gmra.mxu0 %v1731
        %v1802 = vpop.f32.mrf.mxu0
        %v1803 = vadd.f32 %v1728, %v1802
        %v1804 = vpop.f32.mrf.mxu0
        %1805 = vmatprep.mubr.f32.mxu0 0.0
        %1806 = vmatmul.mubr.f32.gmra.mxu0 %v1734
        %v1807 = vpop.f32.mrf.mxu0
        %v1808 = vadd.f32 %v1728, %v1807
        %v1809 = vpop.f32.mrf.mxu0
        %1810 = vdwg.mxu0
        %v1811 = vmax.f32 %v1803, 0.0
        %v1812 = vmax.f32 %v1808, 0.0
        %v1813 = vld [vmem:[%s20] sm:$0xff]
        %v1814 = vld [vmem:[%s20 + $0x8] sm:$0xff]
        %v1815 = vld [vmem:[%s20 + $0x10] sm:$0xff]
        %v1816 = vld [vmem:[%s20 + $0x18] sm:$0xff]
        %v1817 = vld [vmem:[%s21] sm:$0x1]
        %v1819 = vlaneseq
        %v1820 = vshrl.u32 %v1819, 7
        %v1821 = vsub.s32 0, %v1820
        %v1822 = vrot.slane %v1817, %v1821
        %1824 = vmatprep.subr.mxu0 0.0
        %1825 = vmatpush1.msra.mxu0 0.0
        %1826 = vmatprep.subr.mxu0 0.0
        %1827 = vmatpush1.msra.mxu0 0.0
        %1828 = vmatprep.subr.mxu0 0.0
        %1829 = vmatpush1.msra.mxu0 0.0
        %1830 = vmatprep.subr.mxu0 0.0
        %1831 = vmatpush1.msra.mxu0 0.0
        %1832 = vmatprep.subr.mxu0 0.0
        %1833 = vmatpush1.msra.mxu0 0.0
        %1834 = vmatprep.subr.mxu0 0.0
        %1835 = vmatpush1.msra.mxu0 0.0
        %1836 = vmatprep.subr.mxu0 0.0
        %1837 = vmatpush1.msra.mxu0 0.0
        %1838 = vmatprep.subr.mxu0 0.0
        %1839 = vmatpush1.msra.mxu0 0.0
        %1840 = vmatprep.subr.mxu0 0.0
        %1841 = vmatpush1.msra.mxu0 0.0
        %1842 = vmatprep.subr.mxu0 0.0
        %1843 = vmatpush1.msra.mxu0 0.0
        %1844 = vmatprep.subr.mxu0 0.0
        %1845 = vmatpush1.msra.mxu0 0.0
        %1846 = vmatprep.subr.mxu0 0.0
        %1847 = vmatpush1.msra.mxu0 0.0
        %1848 = vmatprep.subr.mxu0 0.0
        %1849 = vmatpush1.msra.mxu0 %v1816
        %1850 = vmatprep.subr.mxu0 0.0
        %1851 = vmatpush1.msra.mxu0 %v1815
        %1852 = vmatprep.subr.mxu0 0.0
        %1853 = vmatpush1.msra.mxu0 %v1814
        %1854 = vmatprep.subr.mxu0 0.0
        %1855 = vmatpush1.msra.mxu0 %v1813
        %1856 = vmatprep.subr.mxu0 0.0
        %1857 = vmatpush2.msra.mxu0 0.0
        %1858 = vmatprep.subr.mxu0 0.0
        %1859 = vmatpush2.msra.mxu0 0.0
        %1860 = vmatprep.subr.mxu0 0.0
        %1861 = vmatpush2.msra.mxu0 0.0
        %1862 = vmatprep.subr.mxu0 0.0
        %1863 = vmatpush2.msra.mxu0 0.0
        %1864 = vmatprep.subr.mxu0 0.0
        %1865 = vmatpush2.msra.mxu0 0.0
        %1866 = vmatprep.subr.mxu0 0.0
        %1867 = vmatpush2.msra.mxu0 0.0
        %1868 = vmatprep.subr.mxu0 0.0
        %1869 = vmatpush2.msra.mxu0 0.0
        %1870 = vmatprep.subr.mxu0 0.0
        %1871 = vmatpush2.msra.mxu0 0.0
        %1872 = vmatprep.subr.mxu0 0.0
        %1873 = vmatpush2.msra.mxu0 0.0
        %1874 = vmatprep.subr.mxu0 0.0
        %1875 = vmatpush2.msra.mxu0 0.0
        %1876 = vmatprep.subr.mxu0 0.0
        %1877 = vmatpush2.msra.mxu0 0.0
        %1878 = vmatprep.subr.mxu0 0.0
        %1879 = vmatpush2.msra.mxu0 0.0
        %1880 = vmatprep.subr.mxu0 0.0
        %1881 = vmatpush2.msra.mxu0 0.0
        %1882 = vmatprep.subr.mxu0 0.0
        %1883 = vmatpush2.msra.mxu0 0.0
        %1884 = vmatprep.subr.mxu0 0.0
        %1885 = vmatpush2.msra.mxu0 0.0
        %1886 = vmatprep.subr.mxu0 0.0
        %1887 = vmatpush2.msra.mxu0 0.0
        %1888 = vmatprep.mubr.f32.mxu0 0.0
        %1889 = vmatmul.mubr.f32.gmra.mxu0 %v1731
        %v1890 = vpop.f32.mrf.mxu0
        %v1891 = vadd.f32 %v1822, %v1890
        %v1892 = vpop.f32.mrf.mxu0
        %1893 = vmatprep.mubr.f32.mxu0 0.0
        %1894 = vmatmul.mubr.f32.gmra.mxu0 %v1734
        %v1895 = vpop.f32.mrf.mxu0
        %v1896 = vadd.f32 %v1822, %v1895
        %v1897 = vpop.f32.mrf.mxu0
        %1898 = vdwg.mxu0
        %v1899 = vmax.f32 %v1891, 0.0
        %v1900 = vmax.f32 %v1896, 0.0
        %v1901 = vld [vmem:[%s22] sm:$0xff]
        %v1902 = vld [vmem:[%s22 + $0x8] sm:$0xff]
        %v1903 = vld [vmem:[%s22 + $0x10] sm:$0xff]
        %v1904 = vld [vmem:[%s22 + $0x18] sm:$0xff]
        %v1905 = vld [vmem:[%s23] sm:$0x1]
        %v1907 = vlaneseq
        %v1908 = vshrl.u32 %v1907, 7
        %v1909 = vsub.s32 0, %v1908
        %v1910 = vrot.slane %v1905, %v1909
        %1912 = vmatprep.subr.mxu0 0.0
        %1913 = vmatpush1.msra.mxu0 0.0
        %1914 = vmatprep.subr.mxu0 0.0
        %1915 = vmatpush1.msra.mxu0 0.0
        %1916 = vmatprep.subr.mxu0 0.0
        %1917 = vmatpush1.msra.mxu0 0.0
        %1918 = vmatprep.subr.mxu0 0.0
        %1919 = vmatpush1.msra.mxu0 0.0
        %1920 = vmatprep.subr.mxu0 0.0
        %1921 = vmatpush1.msra.mxu0 0.0
        %1922 = vmatprep.subr.mxu0 0.0
        %1923 = vmatpush1.msra.mxu0 0.0
        %1924 = vmatprep.subr.mxu0 0.0
        %1925 = vmatpush1.msra.mxu0 0.0
        %1926 = vmatprep.subr.mxu0 0.0
        %1927 = vmatpush1.msra.mxu0 0.0
        %1928 = vmatprep.subr.mxu0 0.0
        %1929 = vmatpush1.msra.mxu0 0.0
        %1930 = vmatprep.subr.mxu0 0.0
        %1931 = vmatpush1.msra.mxu0 0.0
        %1932 = vmatprep.subr.mxu0 0.0
        %1933 = vmatpush1.msra.mxu0 0.0
        %1934 = vmatprep.subr.mxu0 0.0
        %1935 = vmatpush1.msra.mxu0 0.0
        %1936 = vmatprep.subr.mxu0 0.0
        %1937 = vmatpush1.msra.mxu0 %v1904
        %1938 = vmatprep.subr.mxu0 0.0
        %1939 = vmatpush1.msra.mxu0 %v1903
        %1940 = vmatprep.subr.mxu0 0.0
        %1941 = vmatpush1.msra.mxu0 %v1902
        %1942 = vmatprep.subr.mxu0 0.0
        %1943 = vmatpush1.msra.mxu0 %v1901
        %1944 = vmatprep.subr.mxu0 0.0
        %1945 = vmatpush2.msra.mxu0 0.0
        %1946 = vmatprep.subr.mxu0 0.0
        %1947 = vmatpush2.msra.mxu0 0.0
        %1948 = vmatprep.subr.mxu0 0.0
        %1949 = vmatpush2.msra.mxu0 0.0
        %1950 = vmatprep.subr.mxu0 0.0
        %1951 = vmatpush2.msra.mxu0 0.0
        %1952 = vmatprep.subr.mxu0 0.0
        %1953 = vmatpush2.msra.mxu0 0.0
        %1954 = vmatprep.subr.mxu0 0.0
        %1955 = vmatpush2.msra.mxu0 0.0
        %1956 = vmatprep.subr.mxu0 0.0
        %1957 = vmatpush2.msra.mxu0 0.0
        %1958 = vmatprep.subr.mxu0 0.0
        %1959 = vmatpush2.msra.mxu0 0.0
        %1960 = vmatprep.subr.mxu0 0.0
        %1961 = vmatpush2.msra.mxu0 0.0
        %1962 = vmatprep.subr.mxu0 0.0
        %1963 = vmatpush2.msra.mxu0 0.0
        %1964 = vmatprep.subr.mxu0 0.0
        %1965 = vmatpush2.msra.mxu0 0.0
        %1966 = vmatprep.subr.mxu0 0.0
        %1967 = vmatpush2.msra.mxu0 0.0
        %1968 = vmatprep.subr.mxu0 0.0
        %1969 = vmatpush2.msra.mxu0 0.0
        %1970 = vmatprep.subr.mxu0 0.0
        %1971 = vmatpush2.msra.mxu0 0.0
        %1972 = vmatprep.subr.mxu0 0.0
        %1973 = vmatpush2.msra.mxu0 0.0
        %1974 = vmatprep.subr.mxu0 0.0
        %1975 = vmatpush2.msra.mxu0 0.0
        %1976 = vmatprep.mubr.f32.mxu0 0.0
        %1977 = vmatmul.mubr.f32.gmra.mxu0 %v1731
        %v1978 = vpop.f32.mrf.mxu0
        %v1979 = vadd.f32 %v1910, %v1978
        %v1980 = vpop.f32.mrf.mxu0
        %1981 = vmatprep.mubr.f32.mxu0 0.0
        %1982 = vmatmul.mubr.f32.gmra.mxu0 %v1734
        %v1983 = vpop.f32.mrf.mxu0
        %v1984 = vadd.f32 %v1910, %v1983
        %v1985 = vpop.f32.mrf.mxu0
        %1986 = vdwg.mxu0
        %v1987 = vmax.f32 %v1979, 0.0
        %v1988 = vmax.f32 %v1984, 0.0
        %v1990 = vsel %vm1283, %v1281, 0
        %v1993 = vsel %vm1283, %v1282, 0
        %v1996 = vsel %vm1290, %v1988, 0
        %1998 = vmatprep.subr.mxu0 0.0
        %1999 = vmatpush1.msra.mxu0 0.0
        %2000 = vmatprep.subr.mxu0 0.0
        %2001 = vmatpush1.msra.mxu0 0.0
        %2002 = vmatprep.subr.mxu0 0.0
        %2003 = vmatpush1.msra.mxu0 0.0
        %2004 = vmatprep.subr.mxu0 0.0
        %2005 = vmatpush1.msra.mxu0 0.0
        %2006 = vmatprep.subr.mxu0 0.0
        %2007 = vmatpush1.msra.mxu0 0.0
        %2008 = vmatprep.subr.mxu0 0.0
        %2009 = vmatpush1.msra.mxu0 0.0
        %2010 = vmatprep.subr.mxu0 0.0
        %2011 = vmatpush1.msra.mxu0 0.0
        %2012 = vmatprep.subr.mxu0 0.0
        %2013 = vmatpush1.msra.mxu0 0.0
        %2014 = vmatprep.subr.mxu0 0.0
        %2015 = vmatpush1.msra.mxu0 0.0
        %2016 = vmatprep.subr.mxu0 0.0
        %2017 = vmatpush1.msra.mxu0 0.0
        %2018 = vmatprep.subr.mxu0 0.0
        %2019 = vmatpush1.msra.mxu0 0.0
        %2020 = vmatprep.subr.mxu0 0.0
        %2021 = vmatpush1.msra.mxu0 0.0
        %2022 = vmatprep.subr.mxu0 0.0
        %2023 = vmatpush1.msra.mxu0 0.0
        %2024 = vmatprep.subr.mxu0 0.0
        %2025 = vmatpush1.msra.mxu0 0.0
        %2026 = vmatprep.subr.mxu0 0.0
        %2027 = vmatpush1.msra.mxu0 %v1996
        %2028 = vmatprep.subr.mxu0 0.0
        %2029 = vmatpush1.msra.mxu0 %v1987
        %2030 = vmatprep.subr.mxu0 0.0
        %2031 = vmatpush2.msra.mxu0 0.0
        %2032 = vmatprep.subr.mxu0 0.0
        %2033 = vmatpush2.msra.mxu0 0.0
        %2034 = vmatprep.subr.mxu0 0.0
        %2035 = vmatpush2.msra.mxu0 0.0
        %2036 = vmatprep.subr.mxu0 0.0
        %2037 = vmatpush2.msra.mxu0 0.0
        %2038 = vmatprep.subr.mxu0 0.0
        %2039 = vmatpush2.msra.mxu0 0.0
        %2040 = vmatprep.subr.mxu0 0.0
        %2041 = vmatpush2.msra.mxu0 0.0
        %2042 = vmatprep.subr.mxu0 0.0
        %2043 = vmatpush2.msra.mxu0 0.0
        %2044 = vmatprep.subr.mxu0 0.0
        %2045 = vmatpush2.msra.mxu0 0.0
        %2046 = vmatprep.subr.mxu0 0.0
        %2047 = vmatpush2.msra.mxu0 0.0
        %2048 = vmatprep.subr.mxu0 0.0
        %2049 = vmatpush2.msra.mxu0 0.0
        %2050 = vmatprep.subr.mxu0 0.0
        %2051 = vmatpush2.msra.mxu0 0.0
        %2052 = vmatprep.subr.mxu0 0.0
        %2053 = vmatpush2.msra.mxu0 0.0
        %2054 = vmatprep.subr.mxu0 0.0
        %2055 = vmatpush2.msra.mxu0 0.0
        %2056 = vmatprep.subr.mxu0 0.0
        %2057 = vmatpush2.msra.mxu0 0.0
        %2058 = vmatprep.subr.mxu0 0.0
        %2059 = vmatpush2.msra.mxu0 0.0
        %2060 = vmatprep.subr.mxu0 0.0
        %2061 = vmatpush2.msra.mxu0 0.0
        %2062 = vmatprep.mubr.f32.mxu0 0.0
        %2063 = vmatmul.mubr.f32.gmra.mxu0 %v1990
        %v2064 = vpop.f32.mrf.mxu0
        %v2065 = vadd.f32 0.0, %v2064
        %v2066 = vpop.f32.mrf.mxu0
        %2067 = vmatprep.mubr.f32.mxu0 0.0
        %2068 = vmatmul.mubr.f32.gmra.mxu0 %v1993
        %v2069 = vpop.f32.mrf.mxu0
        %v2070 = vadd.f32 0.0, %v2069
        %v2071 = vpop.f32.mrf.mxu0
        %2072 = vdwg.mxu0
        %v2074 = vsel %vm1283, %v1279, 0
        %v2077 = vsel %vm1283, %v1280, 0
        %v2080 = vsel %vm1290, %v1812, 0
        %2082 = vmatprep.subr.mxu0 0.0
        %2083 = vmatpush1.msra.mxu0 0.0
        %2084 = vmatprep.subr.mxu0 0.0
        %2085 = vmatpush1.msra.mxu0 0.0
        %2086 = vmatprep.subr.mxu0 0.0
        %2087 = vmatpush1.msra.mxu0 0.0
        %2088 = vmatprep.subr.mxu0 0.0
        %2089 = vmatpush1.msra.mxu0 0.0
        %2090 = vmatprep.subr.mxu0 0.0
        %2091 = vmatpush1.msra.mxu0 0.0
        %2092 = vmatprep.subr.mxu0 0.0
        %2093 = vmatpush1.msra.mxu0 0.0
        %2094 = vmatprep.subr.mxu0 0.0
        %2095 = vmatpush1.msra.mxu0 0.0
        %2096 = vmatprep.subr.mxu0 0.0
        %2097 = vmatpush1.msra.mxu0 0.0
        %2098 = vmatprep.subr.mxu0 0.0
        %2099 = vmatpush1.msra.mxu0 0.0
        %2100 = vmatprep.subr.mxu0 0.0
        %2101 = vmatpush1.msra.mxu0 0.0
        %2102 = vmatprep.subr.mxu0 0.0
        %2103 = vmatpush1.msra.mxu0 0.0
        %2104 = vmatprep.subr.mxu0 0.0
        %2105 = vmatpush1.msra.mxu0 0.0
        %2106 = vmatprep.subr.mxu0 0.0
        %2107 = vmatpush1.msra.mxu0 0.0
        %2108 = vmatprep.subr.mxu0 0.0
        %2109 = vmatpush1.msra.mxu0 0.0
        %2110 = vmatprep.subr.mxu0 0.0
        %2111 = vmatpush1.msra.mxu0 %v2080
        %2112 = vmatprep.subr.mxu0 0.0
        %2113 = vmatpush1.msra.mxu0 %v1811
        %2114 = vmatprep.subr.mxu0 0.0
        %2115 = vmatpush2.msra.mxu0 0.0
        %2116 = vmatprep.subr.mxu0 0.0
        %2117 = vmatpush2.msra.mxu0 0.0
        %2118 = vmatprep.subr.mxu0 0.0
        %2119 = vmatpush2.msra.mxu0 0.0
        %2120 = vmatprep.subr.mxu0 0.0
        %2121 = vmatpush2.msra.mxu0 0.0
        %2122 = vmatprep.subr.mxu0 0.0
        %2123 = vmatpush2.msra.mxu0 0.0
        %2124 = vmatprep.subr.mxu0 0.0
        %2125 = vmatpush2.msra.mxu0 0.0
        %2126 = vmatprep.subr.mxu0 0.0
        %2127 = vmatpush2.msra.mxu0 0.0
        %2128 = vmatprep.subr.mxu0 0.0
        %2129 = vmatpush2.msra.mxu0 0.0
        %2130 = vmatprep.subr.mxu0 0.0
        %2131 = vmatpush2.msra.mxu0 0.0
        %2132 = vmatprep.subr.mxu0 0.0
        %2133 = vmatpush2.msra.mxu0 0.0
        %2134 = vmatprep.subr.mxu0 0.0
        %2135 = vmatpush2.msra.mxu0 0.0
        %2136 = vmatprep.subr.mxu0 0.0
        %2137 = vmatpush2.msra.mxu0 0.0
        %2138 = vmatprep.subr.mxu0 0.0
        %2139 = vmatpush2.msra.mxu0 0.0
        %2140 = vmatprep.subr.mxu0 0.0
        %2141 = vmatpush2.msra.mxu0 0.0
        %2142 = vmatprep.subr.mxu0 0.0
        %2143 = vmatpush2.msra.mxu0 0.0
        %2144 = vmatprep.subr.mxu0 0.0
        %2145 = vmatpush2.msra.mxu0 0.0
        %2146 = vmatprep.mubr.f32.mxu0 0.0
        %2147 = vmatmul.mubr.f32.gmra.mxu0 %v2074
        %v2148 = vpop.f32.mrf.mxu0
        %v2149 = vadd.f32 %v2065, %v2148
        %v2150 = vpop.f32.mrf.mxu0
        %2151 = vmatprep.mubr.f32.mxu0 0.0
        %2152 = vmatmul.mubr.f32.gmra.mxu0 %v2077
        %v2153 = vpop.f32.mrf.mxu0
        %v2154 = vadd.f32 %v2070, %v2153
        %v2155 = vpop.f32.mrf.mxu0
        %2156 = vdwg.mxu0
        %v2157 = vld [vmem:[%s24] sm:$0xff]
        %v2158 = vld [vmem:[%s24 + $0x8] sm:$0xff]
        %v2159 = vld [vmem:[%s24 + $0x10] sm:$0xff]
        %v2160 = vld [vmem:[%s24 + $0x18] sm:$0xff]
        %v2161 = vld [vmem:[%s25] sm:$0x1]
        %v2163 = vlaneseq
        %v2164 = vshrl.u32 %v2163, 7
        %v2165 = vsub.s32 0, %v2164
        %v2166 = vrot.slane %v2161, %v2165
        %v2169 = vsel %vm1458, %v2149, 0
        %v2172 = vsel %vm1458, %v2154, 0
        %2174 = vmatprep.subr.mxu0 0.0
        %2175 = vmatpush1.msra.mxu0 0.0
        %2176 = vmatprep.subr.mxu0 0.0
        %2177 = vmatpush1.msra.mxu0 0.0
        %2178 = vmatprep.subr.mxu0 0.0
        %2179 = vmatpush1.msra.mxu0 0.0
        %2180 = vmatprep.subr.mxu0 0.0
        %2181 = vmatpush1.msra.mxu0 0.0
        %2182 = vmatprep.subr.mxu0 0.0
        %2183 = vmatpush1.msra.mxu0 0.0
        %2184 = vmatprep.subr.mxu0 0.0
        %2185 = vmatpush1.msra.mxu0 0.0
        %2186 = vmatprep.subr.mxu0 0.0
        %2187 = vmatpush1.msra.mxu0 0.0
        %2188 = vmatprep.subr.mxu0 0.0
        %2189 = vmatpush1.msra.mxu0 0.0
        %2190 = vmatprep.subr.mxu0 0.0
        %2191 = vmatpush1.msra.mxu0 0.0
        %2192 = vmatprep.subr.mxu0 0.0
        %2193 = vmatpush1.msra.mxu0 0.0
        %2194 = vmatprep.subr.mxu0 0.0
        %2195 = vmatpush1.msra.mxu0 0.0
        %2196 = vmatprep.subr.mxu0 0.0
        %2197 = vmatpush1.msra.mxu0 0.0
        %2198 = vmatprep.subr.mxu0 0.0
        %2199 = vmatpush1.msra.mxu0 %v2160
        %2200 = vmatprep.subr.mxu0 0.0
        %2201 = vmatpush1.msra.mxu0 %v2159
        %2202 = vmatprep.subr.mxu0 0.0
        %2203 = vmatpush1.msra.mxu0 %v2158
        %2204 = vmatprep.subr.mxu0 0.0
        %2205 = vmatpush1.msra.mxu0 %v2157
        %2206 = vmatprep.subr.mxu0 0.0
        %2207 = vmatpush2.msra.mxu0 0.0
        %2208 = vmatprep.subr.mxu0 0.0
        %2209 = vmatpush2.msra.mxu0 0.0
        %2210 = vmatprep.subr.mxu0 0.0
        %2211 = vmatpush2.msra.mxu0 0.0
        %2212 = vmatprep.subr.mxu0 0.0
        %2213 = vmatpush2.msra.mxu0 0.0
        %2214 = vmatprep.subr.mxu0 0.0
        %2215 = vmatpush2.msra.mxu0 0.0
        %2216 = vmatprep.subr.mxu0 0.0
        %2217 = vmatpush2.msra.mxu0 0.0
        %2218 = vmatprep.subr.mxu0 0.0
        %2219 = vmatpush2.msra.mxu0 0.0
        %2220 = vmatprep.subr.mxu0 0.0
        %2221 = vmatpush2.msra.mxu0 0.0
        %2222 = vmatprep.subr.mxu0 0.0
        %2223 = vmatpush2.msra.mxu0 0.0
        %2224 = vmatprep.subr.mxu0 0.0
        %2225 = vmatpush2.msra.mxu0 0.0
        %2226 = vmatprep.subr.mxu0 0.0
        %2227 = vmatpush2.msra.mxu0 0.0
        %2228 = vmatprep.subr.mxu0 0.0
        %2229 = vmatpush2.msra.mxu0 0.0
        %2230 = vmatprep.subr.mxu0 0.0
        %2231 = vmatpush2.msra.mxu0 0.0
        %2232 = vmatprep.subr.mxu0 0.0
        %2233 = vmatpush2.msra.mxu0 0.0
        %2234 = vmatprep.subr.mxu0 0.0
        %2235 = vmatpush2.msra.mxu0 0.0
        %2236 = vmatprep.subr.mxu0 0.0
        %2237 = vmatpush2.msra.mxu0 0.0
        %2238 = vmatprep.mubr.f32.mxu0 0.0
        %2239 = vmatmul.mubr.f32.gmra.mxu0 %v2169
        %v2240 = vpop.f32.mrf.mxu0
        %v2241 = vadd.f32 %v2166, %v2240
        %v2242 = vpop.f32.mrf.mxu0
        %2243 = vmatprep.mubr.f32.mxu0 0.0
        %2244 = vmatmul.mubr.f32.gmra.mxu0 %v2172
        %v2245 = vpop.f32.mrf.mxu0
        %v2246 = vadd.f32 %v2166, %v2245
        %v2247 = vpop.f32.mrf.mxu0
        %2248 = vdwg.mxu0
        %v2249 = vmax.f32 %v2241, 0.0
        %v2250 = vmax.f32 %v2246, 0.0
        %v2251 = vld [vmem:[#allocation8] sm:$0xff]
        %v2252 = vld [vmem:[#allocation8 + $0x8] sm:$0xff]
        %v2253 = vld [vmem:[#allocation8 + $0x10] sm:$0xff]
        %v2254 = vld [vmem:[#allocation8 + $0x18] sm:$0xff]
        %v2255 = vld [vmem:[%s27] sm:$0x1]
        %v2257 = vlaneseq
        %v2258 = vshrl.u32 %v2257, 7
        %v2259 = vsub.s32 0, %v2258
        %v2260 = vrot.slane %v2255, %v2259
        %v2263 = vsel %vm1458, %v2249, 0
        %v2266 = vsel %vm1458, %v2250, 0
        %2268 = vmatprep.subr.mxu0 0.0
        %2269 = vmatpush1.msra.mxu0 0.0
        %2270 = vmatprep.subr.mxu0 0.0
        %2271 = vmatpush1.msra.mxu0 0.0
        %2272 = vmatprep.subr.mxu0 0.0
        %2273 = vmatpush1.msra.mxu0 0.0
        %2274 = vmatprep.subr.mxu0 0.0
        %2275 = vmatpush1.msra.mxu0 0.0
        %2276 = vmatprep.subr.mxu0 0.0
        %2277 = vmatpush1.msra.mxu0 0.0
        %2278 = vmatprep.subr.mxu0 0.0
        %2279 = vmatpush1.msra.mxu0 0.0
        %2280 = vmatprep.subr.mxu0 0.0
        %2281 = vmatpush1.msra.mxu0 0.0
        %2282 = vmatprep.subr.mxu0 0.0
        %2283 = vmatpush1.msra.mxu0 0.0
        %2284 = vmatprep.subr.mxu0 0.0
        %2285 = vmatpush1.msra.mxu0 0.0
        %2286 = vmatprep.subr.mxu0 0.0
        %2287 = vmatpush1.msra.mxu0 0.0
        %2288 = vmatprep.subr.mxu0 0.0
        %2289 = vmatpush1.msra.mxu0 0.0
        %2290 = vmatprep.subr.mxu0 0.0
        %2291 = vmatpush1.msra.mxu0 0.0
        %2292 = vmatprep.subr.mxu0 0.0
        %2293 = vmatpush1.msra.mxu0 %v2254
        %2294 = vmatprep.subr.mxu0 0.0
        %2295 = vmatpush1.msra.mxu0 %v2253
        %2296 = vmatprep.subr.mxu0 0.0
        %2297 = vmatpush1.msra.mxu0 %v2252
        %2298 = vmatprep.subr.mxu0 0.0
        %2299 = vmatpush1.msra.mxu0 %v2251
        %2300 = vmatprep.subr.mxu0 0.0
        %2301 = vmatpush2.msra.mxu0 0.0
        %2302 = vmatprep.subr.mxu0 0.0
        %2303 = vmatpush2.msra.mxu0 0.0
        %2304 = vmatprep.subr.mxu0 0.0
        %2305 = vmatpush2.msra.mxu0 0.0
        %2306 = vmatprep.subr.mxu0 0.0
        %2307 = vmatpush2.msra.mxu0 0.0
        %2308 = vmatprep.subr.mxu0 0.0
        %2309 = vmatpush2.msra.mxu0 0.0
        %2310 = vmatprep.subr.mxu0 0.0
        %2311 = vmatpush2.msra.mxu0 0.0
        %2312 = vmatprep.subr.mxu0 0.0
        %2313 = vmatpush2.msra.mxu0 0.0
        %2314 = vmatprep.subr.mxu0 0.0
        %2315 = vmatpush2.msra.mxu0 0.0
        %2316 = vmatprep.subr.mxu0 0.0
        %2317 = vmatpush2.msra.mxu0 0.0
        %2318 = vmatprep.subr.mxu0 0.0
        %2319 = vmatpush2.msra.mxu0 0.0
        %2320 = vmatprep.subr.mxu0 0.0
        %2321 = vmatpush2.msra.mxu0 0.0
        %2322 = vmatprep.subr.mxu0 0.0
        %2323 = vmatpush2.msra.mxu0 0.0
        %2324 = vmatprep.subr.mxu0 0.0
        %2325 = vmatpush2.msra.mxu0 0.0
        %2326 = vmatprep.subr.mxu0 0.0
        %2327 = vmatpush2.msra.mxu0 0.0
        %2328 = vmatprep.subr.mxu0 0.0
        %2329 = vmatpush2.msra.mxu0 0.0
        %2330 = vmatprep.subr.mxu0 0.0
        %2331 = vmatpush2.msra.mxu0 0.0
        %2332 = vmatprep.mubr.f32.mxu0 0.0
        %2333 = vmatmul.mubr.f32.gmra.mxu0 %v2263
        %v2334 = vpop.f32.mrf.mxu0
        %v2335 = vadd.f32 %v2260, %v2334
        %v2336 = vpop.f32.mrf.mxu0
        %2337 = vmatprep.mubr.f32.mxu0 0.0
        %2338 = vmatmul.mubr.f32.gmra.mxu0 %v2266
        %v2339 = vpop.f32.mrf.mxu0
        %v2340 = vadd.f32 %v2260, %v2339
        %v2341 = vpop.f32.mrf.mxu0
        %2342 = vdwg.mxu0
        %v2343 = vmax.f32 %v2335, 0.0
        %v2344 = vmax.f32 %v2340, 0.0
        %v2346 = vsel %vm1290, %v2344, 0
        %2348 = vmatprep.subr.mxu0 0.0
        %2349 = vmatpush1.msra.mxu0 0.0
        %2350 = vmatprep.subr.mxu0 0.0
        %2351 = vmatpush1.msra.mxu0 0.0
        %2352 = vmatprep.subr.mxu0 0.0
        %2353 = vmatpush1.msra.mxu0 0.0
        %2354 = vmatprep.subr.mxu0 0.0
        %2355 = vmatpush1.msra.mxu0 0.0
        %2356 = vmatprep.subr.mxu0 0.0
        %2357 = vmatpush1.msra.mxu0 0.0
        %2358 = vmatprep.subr.mxu0 0.0
        %2359 = vmatpush1.msra.mxu0 0.0
        %2360 = vmatprep.subr.mxu0 0.0
        %2361 = vmatpush1.msra.mxu0 0.0
        %2362 = vmatprep.subr.mxu0 0.0
        %2363 = vmatpush1.msra.mxu0 0.0
        %2364 = vmatprep.subr.mxu0 0.0
        %2365 = vmatpush1.msra.mxu0 0.0
        %2366 = vmatprep.subr.mxu0 0.0
        %2367 = vmatpush1.msra.mxu0 0.0
        %2368 = vmatprep.subr.mxu0 0.0
        %2369 = vmatpush1.msra.mxu0 0.0
        %2370 = vmatprep.subr.mxu0 0.0
        %2371 = vmatpush1.msra.mxu0 0.0
        %2372 = vmatprep.subr.mxu0 0.0
        %2373 = vmatpush1.msra.mxu0 0.0
        %2374 = vmatprep.subr.mxu0 0.0
        %2375 = vmatpush1.msra.mxu0 0.0
        %2376 = vmatprep.subr.mxu0 0.0
        %2377 = vmatpush1.msra.mxu0 %v2346
        %2378 = vmatprep.subr.mxu0 0.0
        %2379 = vmatpush1.msra.mxu0 %v2343
        %2380 = vmatprep.subr.mxu0 0.0
        %2381 = vmatpush2.msra.mxu0 0.0
        %2382 = vmatprep.subr.mxu0 0.0
        %2383 = vmatpush2.msra.mxu0 0.0
        %2384 = vmatprep.subr.mxu0 0.0
        %2385 = vmatpush2.msra.mxu0 0.0
        %2386 = vmatprep.subr.mxu0 0.0
        %2387 = vmatpush2.msra.mxu0 0.0
        %2388 = vmatprep.subr.mxu0 0.0
        %2389 = vmatpush2.msra.mxu0 0.0
        %2390 = vmatprep.subr.mxu0 0.0
        %2391 = vmatpush2.msra.mxu0 0.0
        %2392 = vmatprep.subr.mxu0 0.0
        %2393 = vmatpush2.msra.mxu0 0.0
        %2394 = vmatprep.subr.mxu0 0.0
        %2395 = vmatpush2.msra.mxu0 0.0
        %2396 = vmatprep.subr.mxu0 0.0
        %2397 = vmatpush2.msra.mxu0 0.0
        %2398 = vmatprep.subr.mxu0 0.0
        %2399 = vmatpush2.msra.mxu0 0.0
        %2400 = vmatprep.subr.mxu0 0.0
        %2401 = vmatpush2.msra.mxu0 0.0
        %2402 = vmatprep.subr.mxu0 0.0
        %2403 = vmatpush2.msra.mxu0 0.0
        %2404 = vmatprep.subr.mxu0 0.0
        %2405 = vmatpush2.msra.mxu0 0.0
        %2406 = vmatprep.subr.mxu0 0.0
        %2407 = vmatpush2.msra.mxu0 0.0
        %2408 = vmatprep.subr.mxu0 0.0
        %2409 = vmatpush2.msra.mxu0 0.0
        %2410 = vmatprep.subr.mxu0 0.0
        %2411 = vmatpush2.msra.mxu0 0.0
        %2412 = vmatprep.mubr.f32.mxu0 0.0
        %2413 = vmatmul.mubr.f32.gmra.mxu0 %v1285
        %v2414 = vpop.f32.mrf.mxu0
        %v2415 = vadd.f32 0.0, %v2414
        %v2416 = vpop.f32.mrf.mxu0
        %2417 = vmatprep.mubr.f32.mxu0 0.0
        %2418 = vmatmul.mubr.f32.gmra.mxu0 %v1288
        %v2419 = vpop.f32.mrf.mxu0
        %v2420 = vadd.f32 0.0, %v2419
        %v2421 = vpop.f32.mrf.mxu0
        %2422 = vdwg.mxu0
        %2423 = vmatprep.subr.mxu0 0.0
        %2424 = vmatpush1.msra.mxu0 0.0
        %2425 = vmatprep.subr.mxu0 0.0
        %2426 = vmatpush1.msra.mxu0 0.0
        %2427 = vmatprep.subr.mxu0 0.0
        %2428 = vmatpush1.msra.mxu0 0.0
        %2429 = vmatprep.subr.mxu0 0.0
        %2430 = vmatpush1.msra.mxu0 0.0
        %2431 = vmatprep.subr.mxu0 0.0
        %2432 = vmatpush1.msra.mxu0 0.0
        %2433 = vmatprep.subr.mxu0 0.0
        %2434 = vmatpush1.msra.mxu0 0.0
        %2435 = vmatprep.subr.mxu0 0.0
        %2436 = vmatpush1.msra.mxu0 0.0
        %2437 = vmatprep.subr.mxu0 0.0
        %2438 = vmatpush1.msra.mxu0 0.0
        %2439 = vmatprep.subr.mxu0 0.0
        %2440 = vmatpush1.msra.mxu0 0.0
        %2441 = vmatprep.subr.mxu0 0.0
        %2442 = vmatpush1.msra.mxu0 0.0
        %2443 = vmatprep.subr.mxu0 0.0
        %2444 = vmatpush1.msra.mxu0 0.0
        %2445 = vmatprep.subr.mxu0 0.0
        %2446 = vmatpush1.msra.mxu0 0.0
        %2447 = vmatprep.subr.mxu0 0.0
        %2448 = vmatpush1.msra.mxu0 0.0
        %2449 = vmatprep.subr.mxu0 0.0
        %2450 = vmatpush1.msra.mxu0 0.0
        %2451 = vmatprep.subr.mxu0 0.0
        %2452 = vmatpush1.msra.mxu0 %v2346
        %2453 = vmatprep.subr.mxu0 0.0
        %2454 = vmatpush1.msra.mxu0 %v2343
        %2455 = vmatprep.subr.mxu0 0.0
        %2456 = vmatpush2.msra.mxu0 0.0
        %2457 = vmatprep.subr.mxu0 0.0
        %2458 = vmatpush2.msra.mxu0 0.0
        %2459 = vmatprep.subr.mxu0 0.0
        %2460 = vmatpush2.msra.mxu0 0.0
        %2461 = vmatprep.subr.mxu0 0.0
        %2462 = vmatpush2.msra.mxu0 0.0
        %2463 = vmatprep.subr.mxu0 0.0
        %2464 = vmatpush2.msra.mxu0 0.0
        %2465 = vmatprep.subr.mxu0 0.0
        %2466 = vmatpush2.msra.mxu0 0.0
        %2467 = vmatprep.subr.mxu0 0.0
        %2468 = vmatpush2.msra.mxu0 0.0
        %2469 = vmatprep.subr.mxu0 0.0
        %2470 = vmatpush2.msra.mxu0 0.0
        %2471 = vmatprep.subr.mxu0 0.0
        %2472 = vmatpush2.msra.mxu0 0.0
        %2473 = vmatprep.subr.mxu0 0.0
        %2474 = vmatpush2.msra.mxu0 0.0
        %2475 = vmatprep.subr.mxu0 0.0
        %2476 = vmatpush2.msra.mxu0 0.0
        %2477 = vmatprep.subr.mxu0 0.0
        %2478 = vmatpush2.msra.mxu0 0.0
        %2479 = vmatprep.subr.mxu0 0.0
        %2480 = vmatpush2.msra.mxu0 0.0
        %2481 = vmatprep.subr.mxu0 0.0
        %2482 = vmatpush2.msra.mxu0 0.0
        %2483 = vmatprep.subr.mxu0 0.0
        %2484 = vmatpush2.msra.mxu0 0.0
        %2485 = vmatprep.subr.mxu0 0.0
        %2486 = vmatpush2.msra.mxu0 0.0
        %2487 = vmatprep.mubr.f32.mxu0 0.0
        %2488 = vmatmul.mubr.f32.gmra.mxu0 %v1370
        %v2489 = vpop.f32.mrf.mxu0
        %v2490 = vadd.f32 0.0, %v2489
        %v2491 = vpop.f32.mrf.mxu0
        %2492 = vmatprep.mubr.f32.mxu0 0.0
        %2493 = vmatmul.mubr.f32.gmra.mxu0 %v1373
        %v2494 = vpop.f32.mrf.mxu0
        %v2495 = vadd.f32 0.0, %v2494
        %v2496 = vpop.f32.mrf.mxu0
        %2497 = vdwg.mxu0
        %s2498 = scalar_lea.vmem %s14, 32
        %v2499 = vld [vmem:[%s2498] sm:$0xff]
        %v2500 = vld [vmem:[%s2498 + $0x8] sm:$0xff]
        %v2501 = vld [vmem:[%s2498 + $0x10] sm:$0xff]
        %v2502 = vld [vmem:[%s2498 + $0x18] sm:$0xff]
        %s2503 = scalar_lea.vmem %s15, 32
        %v2504 = vld [vmem:[%s2503] sm:$0xff]
        %v2505 = vld [vmem:[%s2503 + $0x8] sm:$0xff]
        %v2506 = vld [vmem:[%s2503 + $0x10] sm:$0xff]
        %v2507 = vld [vmem:[%s2503 + $0x18] sm:$0xff]
        %v2509 = vsel %vm1458, %v1899, 0
        %v2512 = vsel %vm1458, %v1900, 0
        %2514 = vmatprep.subr.mxu0 0.0
        %2515 = vmatpush1.msra.mxu0 0.0
        %2516 = vmatprep.subr.mxu0 0.0
        %2517 = vmatpush1.msra.mxu0 0.0
        %2518 = vmatprep.subr.mxu0 0.0
        %2519 = vmatpush1.msra.mxu0 0.0
        %2520 = vmatprep.subr.mxu0 0.0
        %2521 = vmatpush1.msra.mxu0 0.0
        %2522 = vmatprep.subr.mxu0 0.0
        %2523 = vmatpush1.msra.mxu0 0.0
        %2524 = vmatprep.subr.mxu0 0.0
        %2525 = vmatpush1.msra.mxu0 0.0
        %2526 = vmatprep.subr.mxu0 0.0
        %2527 = vmatpush1.msra.mxu0 0.0
        %2528 = vmatprep.subr.mxu0 0.0
        %2529 = vmatpush1.msra.mxu0 0.0
        %2530 = vmatprep.subr.mxu0 0.0
        %2531 = vmatpush1.msra.mxu0 0.0
        %2532 = vmatprep.subr.mxu0 0.0
        %2533 = vmatpush1.msra.mxu0 0.0
        %2534 = vmatprep.subr.mxu0 0.0
        %2535 = vmatpush1.msra.mxu0 0.0
        %2536 = vmatprep.subr.mxu0 0.0
        %2537 = vmatpush1.msra.mxu0 0.0
        %2538 = vmatprep.subr.mxu0 0.0
        %2539 = vmatpush1.msra.mxu0 %v2507
        %2540 = vmatprep.subr.mxu0 0.0
        %2541 = vmatpush1.msra.mxu0 %v2506
        %2542 = vmatprep.subr.mxu0 0.0
        %2543 = vmatpush1.msra.mxu0 %v2505
        %2544 = vmatprep.subr.mxu0 0.0
        %2545 = vmatpush1.msra.mxu0 %v2504
        %2546 = vmatprep.subr.mxu0 0.0
        %2547 = vmatpush2.msra.mxu0 0.0
        %2548 = vmatprep.subr.mxu0 0.0
        %2549 = vmatpush2.msra.mxu0 0.0
        %2550 = vmatprep.subr.mxu0 0.0
        %2551 = vmatpush2.msra.mxu0 0.0
        %2552 = vmatprep.subr.mxu0 0.0
        %2553 = vmatpush2.msra.mxu0 0.0
        %2554 = vmatprep.subr.mxu0 0.0
        %2555 = vmatpush2.msra.mxu0 0.0
        %2556 = vmatprep.subr.mxu0 0.0
        %2557 = vmatpush2.msra.mxu0 0.0
        %2558 = vmatprep.subr.mxu0 0.0
        %2559 = vmatpush2.msra.mxu0 0.0
        %2560 = vmatprep.subr.mxu0 0.0
        %2561 = vmatpush2.msra.mxu0 0.0
        %2562 = vmatprep.subr.mxu0 0.0
        %2563 = vmatpush2.msra.mxu0 0.0
        %2564 = vmatprep.subr.mxu0 0.0
        %2565 = vmatpush2.msra.mxu0 0.0
        %2566 = vmatprep.subr.mxu0 0.0
        %2567 = vmatpush2.msra.mxu0 0.0
        %2568 = vmatprep.subr.mxu0 0.0
        %2569 = vmatpush2.msra.mxu0 0.0
        %2570 = vmatprep.subr.mxu0 0.0
        %2571 = vmatpush2.msra.mxu0 0.0
        %2572 = vmatprep.subr.mxu0 0.0
        %2573 = vmatpush2.msra.mxu0 0.0
        %2574 = vmatprep.subr.mxu0 0.0
        %2575 = vmatpush2.msra.mxu0 0.0
        %2576 = vmatprep.subr.mxu0 0.0
        %2577 = vmatpush2.msra.mxu0 0.0
        %2578 = vmatprep.mubr.f32.mxu0 0.0
        %2579 = vmatmul.mubr.f32.gmra.mxu0 %v2509
        %v2580 = vpop.f32.mrf.mxu0
        %v2581 = vadd.f32 0.0, %v2580
        %v2582 = vpop.f32.mrf.mxu0
        %2583 = vmatprep.mubr.f32.mxu0 0.0
        %2584 = vmatmul.mubr.f32.gmra.mxu0 %v2512
        %v2585 = vpop.f32.mrf.mxu0
        %v2586 = vadd.f32 0.0, %v2585
        %v2587 = vpop.f32.mrf.mxu0
        %2588 = vdwg.mxu0
        %v2590 = vsel %vm1458, %v2415, 0
        %v2593 = vsel %vm1458, %v2420, 0
        %2595 = vmatprep.subr.mxu0 0.0
        %2596 = vmatpush1.msra.mxu0 0.0
        %2597 = vmatprep.subr.mxu0 0.0
        %2598 = vmatpush1.msra.mxu0 0.0
        %2599 = vmatprep.subr.mxu0 0.0
        %2600 = vmatpush1.msra.mxu0 0.0
        %2601 = vmatprep.subr.mxu0 0.0
        %2602 = vmatpush1.msra.mxu0 0.0
        %2603 = vmatprep.subr.mxu0 0.0
        %2604 = vmatpush1.msra.mxu0 0.0
        %2605 = vmatprep.subr.mxu0 0.0
        %2606 = vmatpush1.msra.mxu0 0.0
        %2607 = vmatprep.subr.mxu0 0.0
        %2608 = vmatpush1.msra.mxu0 0.0
        %2609 = vmatprep.subr.mxu0 0.0
        %2610 = vmatpush1.msra.mxu0 0.0
        %2611 = vmatprep.subr.mxu0 0.0
        %2612 = vmatpush1.msra.mxu0 0.0
        %2613 = vmatprep.subr.mxu0 0.0
        %2614 = vmatpush1.msra.mxu0 0.0
        %2615 = vmatprep.subr.mxu0 0.0
        %2616 = vmatpush1.msra.mxu0 0.0
        %2617 = vmatprep.subr.mxu0 0.0
        %2618 = vmatpush1.msra.mxu0 0.0
        %2619 = vmatprep.subr.mxu0 0.0
        %2620 = vmatpush1.msra.mxu0 %v2502
        %2621 = vmatprep.subr.mxu0 0.0
        %2622 = vmatpush1.msra.mxu0 %v2501
        %2623 = vmatprep.subr.mxu0 0.0
        %2624 = vmatpush1.msra.mxu0 %v2500
        %2625 = vmatprep.subr.mxu0 0.0
        %2626 = vmatpush1.msra.mxu0 %v2499
        %2627 = vmatprep.subr.mxu0 0.0
        %2628 = vmatpush2.msra.mxu0 0.0
        %2629 = vmatprep.subr.mxu0 0.0
        %2630 = vmatpush2.msra.mxu0 0.0
        %2631 = vmatprep.subr.mxu0 0.0
        %2632 = vmatpush2.msra.mxu0 0.0
        %2633 = vmatprep.subr.mxu0 0.0
        %2634 = vmatpush2.msra.mxu0 0.0
        %2635 = vmatprep.subr.mxu0 0.0
        %2636 = vmatpush2.msra.mxu0 0.0
        %2637 = vmatprep.subr.mxu0 0.0
        %2638 = vmatpush2.msra.mxu0 0.0
        %2639 = vmatprep.subr.mxu0 0.0
        %2640 = vmatpush2.msra.mxu0 0.0
        %2641 = vmatprep.subr.mxu0 0.0
        %2642 = vmatpush2.msra.mxu0 0.0
        %2643 = vmatprep.subr.mxu0 0.0
        %2644 = vmatpush2.msra.mxu0 0.0
        %2645 = vmatprep.subr.mxu0 0.0
        %2646 = vmatpush2.msra.mxu0 0.0
        %2647 = vmatprep.subr.mxu0 0.0
        %2648 = vmatpush2.msra.mxu0 0.0
        %2649 = vmatprep.subr.mxu0 0.0
        %2650 = vmatpush2.msra.mxu0 0.0
        %2651 = vmatprep.subr.mxu0 0.0
        %2652 = vmatpush2.msra.mxu0 0.0
        %2653 = vmatprep.subr.mxu0 0.0
        %2654 = vmatpush2.msra.mxu0 0.0
        %2655 = vmatprep.subr.mxu0 0.0
        %2656 = vmatpush2.msra.mxu0 0.0
        %2657 = vmatprep.subr.mxu0 0.0
        %2658 = vmatpush2.msra.mxu0 0.0
        %2659 = vmatprep.mubr.f32.mxu0 0.0
        %2660 = vmatmul.mubr.f32.gmra.mxu0 %v2590
        %v2661 = vpop.f32.mrf.mxu0
        %v2662 = vadd.f32 %v2581, %v2661
        %v2663 = vpop.f32.mrf.mxu0
        %2664 = vmatprep.mubr.f32.mxu0 0.0
        %2665 = vmatmul.mubr.f32.gmra.mxu0 %v2593
        %v2666 = vpop.f32.mrf.mxu0
        %v2667 = vadd.f32 %v2586, %v2666
        %v2668 = vpop.f32.mrf.mxu0
        %2669 = vdwg.mxu0
        %s2670 = scalar_lea.vmem %s16, 32
        %v2671 = vld [vmem:[%s2670] sm:$0xff]
        %v2672 = vld [vmem:[%s2670 + $0x8] sm:$0xff]
        %v2673 = vld [vmem:[%s2670 + $0x10] sm:$0xff]
        %v2674 = vld [vmem:[%s2670 + $0x18] sm:$0xff]
        %v2676 = vsel %vm1458, %v2490, 0
        %v2679 = vsel %vm1458, %v2495, 0
        %2681 = vmatprep.subr.mxu0 0.0
        %2682 = vmatpush1.msra.mxu0 0.0
        %2683 = vmatprep.subr.mxu0 0.0
        %2684 = vmatpush1.msra.mxu0 0.0
        %2685 = vmatprep.subr.mxu0 0.0
        %2686 = vmatpush1.msra.mxu0 0.0
        %2687 = vmatprep.subr.mxu0 0.0
        %2688 = vmatpush1.msra.mxu0 0.0
        %2689 = vmatprep.subr.mxu0 0.0
        %2690 = vmatpush1.msra.mxu0 0.0
        %2691 = vmatprep.subr.mxu0 0.0
        %2692 = vmatpush1.msra.mxu0 0.0
        %2693 = vmatprep.subr.mxu0 0.0
        %2694 = vmatpush1.msra.mxu0 0.0
        %2695 = vmatprep.subr.mxu0 0.0
        %2696 = vmatpush1.msra.mxu0 0.0
        %2697 = vmatprep.subr.mxu0 0.0
        %2698 = vmatpush1.msra.mxu0 0.0
        %2699 = vmatprep.subr.mxu0 0.0
        %2700 = vmatpush1.msra.mxu0 0.0
        %2701 = vmatprep.subr.mxu0 0.0
        %2702 = vmatpush1.msra.mxu0 0.0
        %2703 = vmatprep.subr.mxu0 0.0
        %2704 = vmatpush1.msra.mxu0 0.0
        %2705 = vmatprep.subr.mxu0 0.0
        %2706 = vmatpush1.msra.mxu0 %v2674
        %2707 = vmatprep.subr.mxu0 0.0
        %2708 = vmatpush1.msra.mxu0 %v2673
        %2709 = vmatprep.subr.mxu0 0.0
        %2710 = vmatpush1.msra.mxu0 %v2672
        %2711 = vmatprep.subr.mxu0 0.0
        %2712 = vmatpush1.msra.mxu0 %v2671
        %2713 = vmatprep.subr.mxu0 0.0
        %2714 = vmatpush2.msra.mxu0 0.0
        %2715 = vmatprep.subr.mxu0 0.0
        %2716 = vmatpush2.msra.mxu0 0.0
        %2717 = vmatprep.subr.mxu0 0.0
        %2718 = vmatpush2.msra.mxu0 0.0
        %2719 = vmatprep.subr.mxu0 0.0
        %2720 = vmatpush2.msra.mxu0 0.0
        %2721 = vmatprep.subr.mxu0 0.0
        %2722 = vmatpush2.msra.mxu0 0.0
        %2723 = vmatprep.subr.mxu0 0.0
        %2724 = vmatpush2.msra.mxu0 0.0
        %2725 = vmatprep.subr.mxu0 0.0
        %2726 = vmatpush2.msra.mxu0 0.0
        %2727 = vmatprep.subr.mxu0 0.0
        %2728 = vmatpush2.msra.mxu0 0.0
        %2729 = vmatprep.subr.mxu0 0.0
        %2730 = vmatpush2.msra.mxu0 0.0
        %2731 = vmatprep.subr.mxu0 0.0
        %2732 = vmatpush2.msra.mxu0 0.0
        %2733 = vmatprep.subr.mxu0 0.0
        %2734 = vmatpush2.msra.mxu0 0.0
        %2735 = vmatprep.subr.mxu0 0.0
        %2736 = vmatpush2.msra.mxu0 0.0
        %2737 = vmatprep.subr.mxu0 0.0
        %2738 = vmatpush2.msra.mxu0 0.0
        %2739 = vmatprep.subr.mxu0 0.0
        %2740 = vmatpush2.msra.mxu0 0.0
        %2741 = vmatprep.subr.mxu0 0.0
        %2742 = vmatpush2.msra.mxu0 0.0
        %2743 = vmatprep.subr.mxu0 0.0
        %2744 = vmatpush2.msra.mxu0 0.0
        %2745 = vmatprep.mubr.f32.mxu0 0.0
        %2746 = vmatmul.mubr.f32.gmra.mxu0 %v2676
        %v2747 = vpop.f32.mrf.mxu0
        %v2748 = vadd.f32 0.0, %v2747
        %v2749 = vpop.f32.mrf.mxu0
        %2750 = vmatprep.mubr.f32.mxu0 0.0
        %2751 = vmatmul.mubr.f32.gmra.mxu0 %v2679
        %v2752 = vpop.f32.mrf.mxu0
        %v2753 = vadd.f32 0.0, %v2752
        %v2754 = vpop.f32.mrf.mxu0
        %2755 = vdwg.mxu0
        %v2756 = vadd.f32 %v2662, %v2748
        %v2757 = vadd.f32 %v2667, %v2753
        %s2758 = scalar_lea.vmem %s17, 1
        %v2759 = vld [vmem:[%s2758] sm:$0x1]
        %v2761 = vlaneseq
        %v2762 = vshrl.u32 %v2761, 7
        %v2763 = vsub.s32 0, %v2762
        %v2764 = vrot.slane %v2759, %v2763
        %v2766 = vadd.f32 %v2756, %v2764
        %v2767 = vadd.f32 %v2757, %v2764
        %v2768 = vmax.f32 %v2766, 0.0
        %v2769 = vmax.f32 %v2767, 0.0
        %s2770 = scalar_lea.vmem %s18, 32
        %v2771 = vld [vmem:[%s2770] sm:$0xff]
        %v2772 = vld [vmem:[%s2770 + $0x8] sm:$0xff]
        %v2773 = vld [vmem:[%s2770 + $0x10] sm:$0xff]
        %v2774 = vld [vmem:[%s2770 + $0x18] sm:$0xff]
        %s2775 = scalar_lea.vmem %s19, 1
        %v2776 = vld [vmem:[%s2775] sm:$0x1]
        %v2778 = vlaneseq
        %v2779 = vshrl.u32 %v2778, 7
        %v2780 = vsub.s32 0, %v2779
        %v2781 = vrot.slane %v2776, %v2780
        %v2784 = vsel %vm1458, %v2768, 0
        %v2787 = vsel %vm1458, %v2769, 0
        %2789 = vmatprep.subr.mxu0 0.0
        %2790 = vmatpush1.msra.mxu0 0.0
        %2791 = vmatprep.subr.mxu0 0.0
        %2792 = vmatpush1.msra.mxu0 0.0
        %2793 = vmatprep.subr.mxu0 0.0
        %2794 = vmatpush1.msra.mxu0 0.0
        %2795 = vmatprep.subr.mxu0 0.0
        %2796 = vmatpush1.msra.mxu0 0.0
        %2797 = vmatprep.subr.mxu0 0.0
        %2798 = vmatpush1.msra.mxu0 0.0
        %2799 = vmatprep.subr.mxu0 0.0
        %2800 = vmatpush1.msra.mxu0 0.0
        %2801 = vmatprep.subr.mxu0 0.0
        %2802 = vmatpush1.msra.mxu0 0.0
        %2803 = vmatprep.subr.mxu0 0.0
        %2804 = vmatpush1.msra.mxu0 0.0
        %2805 = vmatprep.subr.mxu0 0.0
        %2806 = vmatpush1.msra.mxu0 0.0
        %2807 = vmatprep.subr.mxu0 0.0
        %2808 = vmatpush1.msra.mxu0 0.0
        %2809 = vmatprep.subr.mxu0 0.0
        %2810 = vmatpush1.msra.mxu0 0.0
        %2811 = vmatprep.subr.mxu0 0.0
        %2812 = vmatpush1.msra.mxu0 0.0
        %2813 = vmatprep.subr.mxu0 0.0
        %2814 = vmatpush1.msra.mxu0 %v2774
        %2815 = vmatprep.subr.mxu0 0.0
        %2816 = vmatpush1.msra.mxu0 %v2773
        %2817 = vmatprep.subr.mxu0 0.0
        %2818 = vmatpush1.msra.mxu0 %v2772
        %2819 = vmatprep.subr.mxu0 0.0
        %2820 = vmatpush1.msra.mxu0 %v2771
        %2821 = vmatprep.subr.mxu0 0.0
        %2822 = vmatpush2.msra.mxu0 0.0
        %2823 = vmatprep.subr.mxu0 0.0
        %2824 = vmatpush2.msra.mxu0 0.0
        %2825 = vmatprep.subr.mxu0 0.0
        %2826 = vmatpush2.msra.mxu0 0.0
        %2827 = vmatprep.subr.mxu0 0.0
        %2828 = vmatpush2.msra.mxu0 0.0
        %2829 = vmatprep.subr.mxu0 0.0
        %2830 = vmatpush2.msra.mxu0 0.0
        %2831 = vmatprep.subr.mxu0 0.0
        %2832 = vmatpush2.msra.mxu0 0.0
        %2833 = vmatprep.subr.mxu0 0.0
        %2834 = vmatpush2.msra.mxu0 0.0
        %2835 = vmatprep.subr.mxu0 0.0
        %2836 = vmatpush2.msra.mxu0 0.0
        %2837 = vmatprep.subr.mxu0 0.0
        %2838 = vmatpush2.msra.mxu0 0.0
        %2839 = vmatprep.subr.mxu0 0.0
        %2840 = vmatpush2.msra.mxu0 0.0
        %2841 = vmatprep.subr.mxu0 0.0
        %2842 = vmatpush2.msra.mxu0 0.0
        %2843 = vmatprep.subr.mxu0 0.0
        %2844 = vmatpush2.msra.mxu0 0.0
        %2845 = vmatprep.subr.mxu0 0.0
        %2846 = vmatpush2.msra.mxu0 0.0
        %2847 = vmatprep.subr.mxu0 0.0
        %2848 = vmatpush2.msra.mxu0 0.0
        %2849 = vmatprep.subr.mxu0 0.0
        %2850 = vmatpush2.msra.mxu0 0.0
        %2851 = vmatprep.subr.mxu0 0.0
        %2852 = vmatpush2.msra.mxu0 0.0
        %2853 = vmatprep.mubr.f32.mxu0 0.0
        %2854 = vmatmul.mubr.f32.gmra.mxu0 %v2784
        %v2855 = vpop.f32.mrf.mxu0
        %v2856 = vadd.f32 %v2781, %v2855
        %v2857 = vpop.f32.mrf.mxu0
        %2858 = vmatprep.mubr.f32.mxu0 0.0
        %2859 = vmatmul.mubr.f32.gmra.mxu0 %v2787
        %v2860 = vpop.f32.mrf.mxu0
        %v2861 = vadd.f32 %v2781, %v2860
        %v2862 = vpop.f32.mrf.mxu0
        %2863 = vdwg.mxu0
        %v2864 = vmax.f32 %v2856, 0.0
        %v2865 = vmax.f32 %v2861, 0.0
        %s2866 = scalar_lea.vmem %s20, 32
        %v2867 = vld [vmem:[%s2866] sm:$0xff]
        %v2868 = vld [vmem:[%s2866 + $0x8] sm:$0xff]
        %v2869 = vld [vmem:[%s2866 + $0x10] sm:$0xff]
        %v2870 = vld [vmem:[%s2866 + $0x18] sm:$0xff]
        %s2871 = scalar_lea.vmem %s21, 1
        %v2872 = vld [vmem:[%s2871] sm:$0x1]
        %v2874 = vlaneseq
        %v2875 = vshrl.u32 %v2874, 7
        %v2876 = vsub.s32 0, %v2875
        %v2877 = vrot.slane %v2872, %v2876
        %2879 = vmatprep.subr.mxu0 0.0
        %2880 = vmatpush1.msra.mxu0 0.0
        %2881 = vmatprep.subr.mxu0 0.0
        %2882 = vmatpush1.msra.mxu0 0.0
        %2883 = vmatprep.subr.mxu0 0.0
        %2884 = vmatpush1.msra.mxu0 0.0
        %2885 = vmatprep.subr.mxu0 0.0
        %2886 = vmatpush1.msra.mxu0 0.0
        %2887 = vmatprep.subr.mxu0 0.0
        %2888 = vmatpush1.msra.mxu0 0.0
        %2889 = vmatprep.subr.mxu0 0.0
        %2890 = vmatpush1.msra.mxu0 0.0
        %2891 = vmatprep.subr.mxu0 0.0
        %2892 = vmatpush1.msra.mxu0 0.0
        %2893 = vmatprep.subr.mxu0 0.0
        %2894 = vmatpush1.msra.mxu0 0.0
        %2895 = vmatprep.subr.mxu0 0.0
        %2896 = vmatpush1.msra.mxu0 0.0
        %2897 = vmatprep.subr.mxu0 0.0
        %2898 = vmatpush1.msra.mxu0 0.0
        %2899 = vmatprep.subr.mxu0 0.0
        %2900 = vmatpush1.msra.mxu0 0.0
        %2901 = vmatprep.subr.mxu0 0.0
        %2902 = vmatpush1.msra.mxu0 0.0
        %2903 = vmatprep.subr.mxu0 0.0
        %2904 = vmatpush1.msra.mxu0 %v2870
        %2905 = vmatprep.subr.mxu0 0.0
        %2906 = vmatpush1.msra.mxu0 %v2869
        %2907 = vmatprep.subr.mxu0 0.0
        %2908 = vmatpush1.msra.mxu0 %v2868
        %2909 = vmatprep.subr.mxu0 0.0
        %2910 = vmatpush1.msra.mxu0 %v2867
        %2911 = vmatprep.subr.mxu0 0.0
        %2912 = vmatpush2.msra.mxu0 0.0
        %2913 = vmatprep.subr.mxu0 0.0
        %2914 = vmatpush2.msra.mxu0 0.0
        %2915 = vmatprep.subr.mxu0 0.0
        %2916 = vmatpush2.msra.mxu0 0.0
        %2917 = vmatprep.subr.mxu0 0.0
        %2918 = vmatpush2.msra.mxu0 0.0
        %2919 = vmatprep.subr.mxu0 0.0
        %2920 = vmatpush2.msra.mxu0 0.0
        %2921 = vmatprep.subr.mxu0 0.0
        %2922 = vmatpush2.msra.mxu0 0.0
        %2923 = vmatprep.subr.mxu0 0.0
        %2924 = vmatpush2.msra.mxu0 0.0
        %2925 = vmatprep.subr.mxu0 0.0
        %2926 = vmatpush2.msra.mxu0 0.0
        %2927 = vmatprep.subr.mxu0 0.0
        %2928 = vmatpush2.msra.mxu0 0.0
        %2929 = vmatprep.subr.mxu0 0.0
        %2930 = vmatpush2.msra.mxu0 0.0
        %2931 = vmatprep.subr.mxu0 0.0
        %2932 = vmatpush2.msra.mxu0 0.0
        %2933 = vmatprep.subr.mxu0 0.0
        %2934 = vmatpush2.msra.mxu0 0.0
        %2935 = vmatprep.subr.mxu0 0.0
        %2936 = vmatpush2.msra.mxu0 0.0
        %2937 = vmatprep.subr.mxu0 0.0
        %2938 = vmatpush2.msra.mxu0 0.0
        %2939 = vmatprep.subr.mxu0 0.0
        %2940 = vmatpush2.msra.mxu0 0.0
        %2941 = vmatprep.subr.mxu0 0.0
        %2942 = vmatpush2.msra.mxu0 0.0
        %2943 = vmatprep.mubr.f32.mxu0 0.0
        %2944 = vmatmul.mubr.f32.gmra.mxu0 %v2784
        %v2945 = vpop.f32.mrf.mxu0
        %v2946 = vadd.f32 %v2877, %v2945
        %v2947 = vpop.f32.mrf.mxu0
        %2948 = vmatprep.mubr.f32.mxu0 0.0
        %2949 = vmatmul.mubr.f32.gmra.mxu0 %v2787
        %v2950 = vpop.f32.mrf.mxu0
        %v2951 = vadd.f32 %v2877, %v2950
        %v2952 = vpop.f32.mrf.mxu0
        %2953 = vdwg.mxu0
        %v2954 = vmax.f32 %v2946, 0.0
        %v2955 = vmax.f32 %v2951, 0.0
        %s2956 = scalar_lea.vmem %s22, 32
        %v2957 = vld [vmem:[%s2956] sm:$0xff]
        %v2958 = vld [vmem:[%s2956 + $0x8] sm:$0xff]
        %v2959 = vld [vmem:[%s2956 + $0x10] sm:$0xff]
        %v2960 = vld [vmem:[%s2956 + $0x18] sm:$0xff]
        %s2961 = scalar_lea.vmem %s23, 1
        %v2962 = vld [vmem:[%s2961] sm:$0x1]
        %v2964 = vlaneseq
        %v2965 = vshrl.u32 %v2964, 7
        %v2966 = vsub.s32 0, %v2965
        %v2967 = vrot.slane %v2962, %v2966
        %2969 = vmatprep.subr.mxu0 0.0
        %2970 = vmatpush1.msra.mxu0 0.0
        %2971 = vmatprep.subr.mxu0 0.0
        %2972 = vmatpush1.msra.mxu0 0.0
        %2973 = vmatprep.subr.mxu0 0.0
        %2974 = vmatpush1.msra.mxu0 0.0
        %2975 = vmatprep.subr.mxu0 0.0
        %2976 = vmatpush1.msra.mxu0 0.0
        %2977 = vmatprep.subr.mxu0 0.0
        %2978 = vmatpush1.msra.mxu0 0.0
        %2979 = vmatprep.subr.mxu0 0.0
        %2980 = vmatpush1.msra.mxu0 0.0
        %2981 = vmatprep.subr.mxu0 0.0
        %2982 = vmatpush1.msra.mxu0 0.0
        %2983 = vmatprep.subr.mxu0 0.0
        %2984 = vmatpush1.msra.mxu0 0.0
        %2985 = vmatprep.subr.mxu0 0.0
        %2986 = vmatpush1.msra.mxu0 0.0
        %2987 = vmatprep.subr.mxu0 0.0
        %2988 = vmatpush1.msra.mxu0 0.0
        %2989 = vmatprep.subr.mxu0 0.0
        %2990 = vmatpush1.msra.mxu0 0.0
        %2991 = vmatprep.subr.mxu0 0.0
        %2992 = vmatpush1.msra.mxu0 0.0
        %2993 = vmatprep.subr.mxu0 0.0
        %2994 = vmatpush1.msra.mxu0 %v2960
        %2995 = vmatprep.subr.mxu0 0.0
        %2996 = vmatpush1.msra.mxu0 %v2959
        %2997 = vmatprep.subr.mxu0 0.0
        %2998 = vmatpush1.msra.mxu0 %v2958
        %2999 = vmatprep.subr.mxu0 0.0
        %3000 = vmatpush1.msra.mxu0 %v2957
        %3001 = vmatprep.subr.mxu0 0.0
        %3002 = vmatpush2.msra.mxu0 0.0
        %3003 = vmatprep.subr.mxu0 0.0
        %3004 = vmatpush2.msra.mxu0 0.0
        %3005 = vmatprep.subr.mxu0 0.0
        %3006 = vmatpush2.msra.mxu0 0.0
        %3007 = vmatprep.subr.mxu0 0.0
        %3008 = vmatpush2.msra.mxu0 0.0
        %3009 = vmatprep.subr.mxu0 0.0
        %3010 = vmatpush2.msra.mxu0 0.0
        %3011 = vmatprep.subr.mxu0 0.0
        %3012 = vmatpush2.msra.mxu0 0.0
        %3013 = vmatprep.subr.mxu0 0.0
        %3014 = vmatpush2.msra.mxu0 0.0
        %3015 = vmatprep.subr.mxu0 0.0
        %3016 = vmatpush2.msra.mxu0 0.0
        %3017 = vmatprep.subr.mxu0 0.0
        %3018 = vmatpush2.msra.mxu0 0.0
        %3019 = vmatprep.subr.mxu0 0.0
        %3020 = vmatpush2.msra.mxu0 0.0
        %3021 = vmatprep.subr.mxu0 0.0
        %3022 = vmatpush2.msra.mxu0 0.0
        %3023 = vmatprep.subr.mxu0 0.0
        %3024 = vmatpush2.msra.mxu0 0.0
        %3025 = vmatprep.subr.mxu0 0.0
        %3026 = vmatpush2.msra.mxu0 0.0
        %3027 = vmatprep.subr.mxu0 0.0
        %3028 = vmatpush2.msra.mxu0 0.0
        %3029 = vmatprep.subr.mxu0 0.0
        %3030 = vmatpush2.msra.mxu0 0.0
        %3031 = vmatprep.subr.mxu0 0.0
        %3032 = vmatpush2.msra.mxu0 0.0
        %3033 = vmatprep.mubr.f32.mxu0 0.0
        %3034 = vmatmul.mubr.f32.gmra.mxu0 %v2784
        %v3035 = vpop.f32.mrf.mxu0
        %v3036 = vadd.f32 %v2967, %v3035
        %v3037 = vpop.f32.mrf.mxu0
        %3038 = vmatprep.mubr.f32.mxu0 0.0
        %3039 = vmatmul.mubr.f32.gmra.mxu0 %v2787
        %v3040 = vpop.f32.mrf.mxu0
        %v3041 = vadd.f32 %v2967, %v3040
        %v3042 = vpop.f32.mrf.mxu0
        %3043 = vdwg.mxu0
        %v3044 = vmax.f32 %v3036, 0.0
        %v3045 = vmax.f32 %v3041, 0.0
        %v3047 = vsel %vm1290, %v3045, 0
        %3049 = vmatprep.subr.mxu0 0.0
        %3050 = vmatpush1.msra.mxu0 0.0
        %3051 = vmatprep.subr.mxu0 0.0
        %3052 = vmatpush1.msra.mxu0 0.0
        %3053 = vmatprep.subr.mxu0 0.0
        %3054 = vmatpush1.msra.mxu0 0.0
        %3055 = vmatprep.subr.mxu0 0.0
        %3056 = vmatpush1.msra.mxu0 0.0
        %3057 = vmatprep.subr.mxu0 0.0
        %3058 = vmatpush1.msra.mxu0 0.0
        %3059 = vmatprep.subr.mxu0 0.0
        %3060 = vmatpush1.msra.mxu0 0.0
        %3061 = vmatprep.subr.mxu0 0.0
        %3062 = vmatpush1.msra.mxu0 0.0
        %3063 = vmatprep.subr.mxu0 0.0
        %3064 = vmatpush1.msra.mxu0 0.0
        %3065 = vmatprep.subr.mxu0 0.0
        %3066 = vmatpush1.msra.mxu0 0.0
        %3067 = vmatprep.subr.mxu0 0.0
        %3068 = vmatpush1.msra.mxu0 0.0
        %3069 = vmatprep.subr.mxu0 0.0
        %3070 = vmatpush1.msra.mxu0 0.0
        %3071 = vmatprep.subr.mxu0 0.0
        %3072 = vmatpush1.msra.mxu0 0.0
        %3073 = vmatprep.subr.mxu0 0.0
        %3074 = vmatpush1.msra.mxu0 0.0
        %3075 = vmatprep.subr.mxu0 0.0
        %3076 = vmatpush1.msra.mxu0 0.0
        %3077 = vmatprep.subr.mxu0 0.0
        %3078 = vmatpush1.msra.mxu0 %v3047
        %3079 = vmatprep.subr.mxu0 0.0
        %3080 = vmatpush1.msra.mxu0 %v3044
        %3081 = vmatprep.subr.mxu0 0.0
        %3082 = vmatpush2.msra.mxu0 0.0
        %3083 = vmatprep.subr.mxu0 0.0
        %3084 = vmatpush2.msra.mxu0 0.0
        %3085 = vmatprep.subr.mxu0 0.0
        %3086 = vmatpush2.msra.mxu0 0.0
        %3087 = vmatprep.subr.mxu0 0.0
        %3088 = vmatpush2.msra.mxu0 0.0
        %3089 = vmatprep.subr.mxu0 0.0
        %3090 = vmatpush2.msra.mxu0 0.0
        %3091 = vmatprep.subr.mxu0 0.0
        %3092 = vmatpush2.msra.mxu0 0.0
        %3093 = vmatprep.subr.mxu0 0.0
        %3094 = vmatpush2.msra.mxu0 0.0
        %3095 = vmatprep.subr.mxu0 0.0
        %3096 = vmatpush2.msra.mxu0 0.0
        %3097 = vmatprep.subr.mxu0 0.0
        %3098 = vmatpush2.msra.mxu0 0.0
        %3099 = vmatprep.subr.mxu0 0.0
        %3100 = vmatpush2.msra.mxu0 0.0
        %3101 = vmatprep.subr.mxu0 0.0
        %3102 = vmatpush2.msra.mxu0 0.0
        %3103 = vmatprep.subr.mxu0 0.0
        %3104 = vmatpush2.msra.mxu0 0.0
        %3105 = vmatprep.subr.mxu0 0.0
        %3106 = vmatpush2.msra.mxu0 0.0
        %3107 = vmatprep.subr.mxu0 0.0
        %3108 = vmatpush2.msra.mxu0 0.0
        %3109 = vmatprep.subr.mxu0 0.0
        %3110 = vmatpush2.msra.mxu0 0.0
        %3111 = vmatprep.subr.mxu0 0.0
        %3112 = vmatpush2.msra.mxu0 0.0
        %3113 = vmatprep.mubr.f32.mxu0 0.0
        %3114 = vmatmul.mubr.f32.gmra.mxu0 %v1990
        %v3115 = vpop.f32.mrf.mxu0
        %v3116 = vadd.f32 0.0, %v3115
        %v3117 = vpop.f32.mrf.mxu0
        %3118 = vmatprep.mubr.f32.mxu0 0.0
        %3119 = vmatmul.mubr.f32.gmra.mxu0 %v1993
        %v3120 = vpop.f32.mrf.mxu0
        %v3121 = vadd.f32 0.0, %v3120
        %v3122 = vpop.f32.mrf.mxu0
        %3123 = vdwg.mxu0
        %v3125 = vsel %vm1290, %v2865, 0
        %3127 = vmatprep.subr.mxu0 0.0
        %3128 = vmatpush1.msra.mxu0 0.0
        %3129 = vmatprep.subr.mxu0 0.0
        %3130 = vmatpush1.msra.mxu0 0.0
        %3131 = vmatprep.subr.mxu0 0.0
        %3132 = vmatpush1.msra.mxu0 0.0
        %3133 = vmatprep.subr.mxu0 0.0
        %3134 = vmatpush1.msra.mxu0 0.0
        %3135 = vmatprep.subr.mxu0 0.0
        %3136 = vmatpush1.msra.mxu0 0.0
        %3137 = vmatprep.subr.mxu0 0.0
        %3138 = vmatpush1.msra.mxu0 0.0
        %3139 = vmatprep.subr.mxu0 0.0
        %3140 = vmatpush1.msra.mxu0 0.0
        %3141 = vmatprep.subr.mxu0 0.0
        %3142 = vmatpush1.msra.mxu0 0.0
        %3143 = vmatprep.subr.mxu0 0.0
        %3144 = vmatpush1.msra.mxu0 0.0
        %3145 = vmatprep.subr.mxu0 0.0
        %3146 = vmatpush1.msra.mxu0 0.0
        %3147 = vmatprep.subr.mxu0 0.0
        %3148 = vmatpush1.msra.mxu0 0.0
        %3149 = vmatprep.subr.mxu0 0.0
        %3150 = vmatpush1.msra.mxu0 0.0
        %3151 = vmatprep.subr.mxu0 0.0
        %3152 = vmatpush1.msra.mxu0 0.0
        %3153 = vmatprep.subr.mxu0 0.0
        %3154 = vmatpush1.msra.mxu0 0.0
        %3155 = vmatprep.subr.mxu0 0.0
        %3156 = vmatpush1.msra.mxu0 %v3125
        %3157 = vmatprep.subr.mxu0 0.0
        %3158 = vmatpush1.msra.mxu0 %v2864
        %3159 = vmatprep.subr.mxu0 0.0
        %3160 = vmatpush2.msra.mxu0 0.0
        %3161 = vmatprep.subr.mxu0 0.0
        %3162 = vmatpush2.msra.mxu0 0.0
        %3163 = vmatprep.subr.mxu0 0.0
        %3164 = vmatpush2.msra.mxu0 0.0
        %3165 = vmatprep.subr.mxu0 0.0
        %3166 = vmatpush2.msra.mxu0 0.0
        %3167 = vmatprep.subr.mxu0 0.0
        %3168 = vmatpush2.msra.mxu0 0.0
        %3169 = vmatprep.subr.mxu0 0.0
        %3170 = vmatpush2.msra.mxu0 0.0
        %3171 = vmatprep.subr.mxu0 0.0
        %3172 = vmatpush2.msra.mxu0 0.0
        %3173 = vmatprep.subr.mxu0 0.0
        %3174 = vmatpush2.msra.mxu0 0.0
        %3175 = vmatprep.subr.mxu0 0.0
        %3176 = vmatpush2.msra.mxu0 0.0
        %3177 = vmatprep.subr.mxu0 0.0
        %3178 = vmatpush2.msra.mxu0 0.0
        %3179 = vmatprep.subr.mxu0 0.0
        %3180 = vmatpush2.msra.mxu0 0.0
        %3181 = vmatprep.subr.mxu0 0.0
        %3182 = vmatpush2.msra.mxu0 0.0
        %3183 = vmatprep.subr.mxu0 0.0
        %3184 = vmatpush2.msra.mxu0 0.0
        %3185 = vmatprep.subr.mxu0 0.0
        %3186 = vmatpush2.msra.mxu0 0.0
        %3187 = vmatprep.subr.mxu0 0.0
        %3188 = vmatpush2.msra.mxu0 0.0
        %3189 = vmatprep.subr.mxu0 0.0
        %3190 = vmatpush2.msra.mxu0 0.0
        %3191 = vmatprep.mubr.f32.mxu0 0.0
        %3192 = vmatmul.mubr.f32.gmra.mxu0 %v2074
        %v3193 = vpop.f32.mrf.mxu0
        %v3194 = vadd.f32 %v3116, %v3193
        %v3195 = vpop.f32.mrf.mxu0
        %3196 = vmatprep.mubr.f32.mxu0 0.0
        %3197 = vmatmul.mubr.f32.gmra.mxu0 %v2077
        %v3198 = vpop.f32.mrf.mxu0
        %v3199 = vadd.f32 %v3121, %v3198
        %v3200 = vpop.f32.mrf.mxu0
        %3201 = vdwg.mxu0
        %s3202 = scalar_lea.vmem %s24, 32
        %v3203 = vld [vmem:[%s3202] sm:$0xff]
        %v3204 = vld [vmem:[%s3202 + $0x8] sm:$0xff]
        %v3205 = vld [vmem:[%s3202 + $0x10] sm:$0xff]
        %v3206 = vld [vmem:[%s3202 + $0x18] sm:$0xff]
        %s3207 = scalar_lea.vmem %s25, 1
        %v3208 = vld [vmem:[%s3207] sm:$0x1]
        %v3210 = vlaneseq
        %v3211 = vshrl.u32 %v3210, 7
        %v3212 = vsub.s32 0, %v3211
        %v3213 = vrot.slane %v3208, %v3212
        %v3216 = vsel %vm1458, %v3194, 0
        %v3219 = vsel %vm1458, %v3199, 0
        %3221 = vmatprep.subr.mxu0 0.0
        %3222 = vmatpush1.msra.mxu0 0.0
        %3223 = vmatprep.subr.mxu0 0.0
        %3224 = vmatpush1.msra.mxu0 0.0
        %3225 = vmatprep.subr.mxu0 0.0
        %3226 = vmatpush1.msra.mxu0 0.0
        %3227 = vmatprep.subr.mxu0 0.0
        %3228 = vmatpush1.msra.mxu0 0.0
        %3229 = vmatprep.subr.mxu0 0.0
        %3230 = vmatpush1.msra.mxu0 0.0
        %3231 = vmatprep.subr.mxu0 0.0
        %3232 = vmatpush1.msra.mxu0 0.0
        %3233 = vmatprep.subr.mxu0 0.0
        %3234 = vmatpush1.msra.mxu0 0.0
        %3235 = vmatprep.subr.mxu0 0.0
        %3236 = vmatpush1.msra.mxu0 0.0
        %3237 = vmatprep.subr.mxu0 0.0
        %3238 = vmatpush1.msra.mxu0 0.0
        %3239 = vmatprep.subr.mxu0 0.0
        %3240 = vmatpush1.msra.mxu0 0.0
        %3241 = vmatprep.subr.mxu0 0.0
        %3242 = vmatpush1.msra.mxu0 0.0
        %3243 = vmatprep.subr.mxu0 0.0
        %3244 = vmatpush1.msra.mxu0 0.0
        %3245 = vmatprep.subr.mxu0 0.0
        %3246 = vmatpush1.msra.mxu0 %v3206
        %3247 = vmatprep.subr.mxu0 0.0
        %3248 = vmatpush1.msra.mxu0 %v3205
        %3249 = vmatprep.subr.mxu0 0.0
        %3250 = vmatpush1.msra.mxu0 %v3204
        %3251 = vmatprep.subr.mxu0 0.0
        %3252 = vmatpush1.msra.mxu0 %v3203
        %3253 = vmatprep.subr.mxu0 0.0
        %3254 = vmatpush2.msra.mxu0 0.0
        %3255 = vmatprep.subr.mxu0 0.0
        %3256 = vmatpush2.msra.mxu0 0.0
        %3257 = vmatprep.subr.mxu0 0.0
        %3258 = vmatpush2.msra.mxu0 0.0
        %3259 = vmatprep.subr.mxu0 0.0
        %3260 = vmatpush2.msra.mxu0 0.0
        %3261 = vmatprep.subr.mxu0 0.0
        %3262 = vmatpush2.msra.mxu0 0.0
        %3263 = vmatprep.subr.mxu0 0.0
        %3264 = vmatpush2.msra.mxu0 0.0
        %3265 = vmatprep.subr.mxu0 0.0
        %3266 = vmatpush2.msra.mxu0 0.0
        %3267 = vmatprep.subr.mxu0 0.0
        %3268 = vmatpush2.msra.mxu0 0.0
        %3269 = vmatprep.subr.mxu0 0.0
        %3270 = vmatpush2.msra.mxu0 0.0
        %3271 = vmatprep.subr.mxu0 0.0
        %3272 = vmatpush2.msra.mxu0 0.0
        %3273 = vmatprep.subr.mxu0 0.0
        %3274 = vmatpush2.msra.mxu0 0.0
        %3275 = vmatprep.subr.mxu0 0.0
        %3276 = vmatpush2.msra.mxu0 0.0
        %3277 = vmatprep.subr.mxu0 0.0
        %3278 = vmatpush2.msra.mxu0 0.0
        %3279 = vmatprep.subr.mxu0 0.0
        %3280 = vmatpush2.msra.mxu0 0.0
        %3281 = vmatprep.subr.mxu0 0.0
        %3282 = vmatpush2.msra.mxu0 0.0
        %3283 = vmatprep.subr.mxu0 0.0
        %3284 = vmatpush2.msra.mxu0 0.0
        %3285 = vmatprep.mubr.f32.mxu0 0.0
        %3286 = vmatmul.mubr.f32.gmra.mxu0 %v3216
        %v3287 = vpop.f32.mrf.mxu0
        %v3288 = vadd.f32 %v3213, %v3287
        %v3289 = vpop.f32.mrf.mxu0
        %3290 = vmatprep.mubr.f32.mxu0 0.0
        %3291 = vmatmul.mubr.f32.gmra.mxu0 %v3219
        %v3292 = vpop.f32.mrf.mxu0
        %v3293 = vadd.f32 %v3213, %v3292
        %v3294 = vpop.f32.mrf.mxu0
        %3295 = vdwg.mxu0
        %v3296 = vmax.f32 %v3288, 0.0
        %v3297 = vmax.f32 %v3293, 0.0
        %s3298 = scalar_lea.vmem [#allocation8], 32
        %v3299 = vld [vmem:[%s3298] sm:$0xff]
        %v3300 = vld [vmem:[%s3298 + $0x8] sm:$0xff]
        %v3301 = vld [vmem:[%s3298 + $0x10] sm:$0xff]
        %v3302 = vld [vmem:[%s3298 + $0x18] sm:$0xff]
        %s3303 = scalar_lea.vmem %s27, 1
        %v3304 = vld [vmem:[%s3303] sm:$0x1]
        %v3306 = vlaneseq
        %v3307 = vshrl.u32 %v3306, 7
        %v3308 = vsub.s32 0, %v3307
        %v3309 = vrot.slane %v3304, %v3308
        %v3312 = vsel %vm1458, %v3296, 0
        %v3315 = vsel %vm1458, %v3297, 0
        %3317 = vmatprep.subr.mxu0 0.0
        %3318 = vmatpush1.msra.mxu0 0.0
        %3319 = vmatprep.subr.mxu0 0.0
        %3320 = vmatpush1.msra.mxu0 0.0
        %3321 = vmatprep.subr.mxu0 0.0
        %3322 = vmatpush1.msra.mxu0 0.0
        %3323 = vmatprep.subr.mxu0 0.0
        %3324 = vmatpush1.msra.mxu0 0.0
        %3325 = vmatprep.subr.mxu0 0.0
        %3326 = vmatpush1.msra.mxu0 0.0
        %3327 = vmatprep.subr.mxu0 0.0
        %3328 = vmatpush1.msra.mxu0 0.0
        %3329 = vmatprep.subr.mxu0 0.0
        %3330 = vmatpush1.msra.mxu0 0.0
        %3331 = vmatprep.subr.mxu0 0.0
        %3332 = vmatpush1.msra.mxu0 0.0
        %3333 = vmatprep.subr.mxu0 0.0
        %3334 = vmatpush1.msra.mxu0 0.0
        %3335 = vmatprep.subr.mxu0 0.0
        %3336 = vmatpush1.msra.mxu0 0.0
        %3337 = vmatprep.subr.mxu0 0.0
        %3338 = vmatpush1.msra.mxu0 0.0
        %3339 = vmatprep.subr.mxu0 0.0
        %3340 = vmatpush1.msra.mxu0 0.0
        %3341 = vmatprep.subr.mxu0 0.0
        %3342 = vmatpush1.msra.mxu0 %v3302
        %3343 = vmatprep.subr.mxu0 0.0
        %3344 = vmatpush1.msra.mxu0 %v3301
        %3345 = vmatprep.subr.mxu0 0.0
        %3346 = vmatpush1.msra.mxu0 %v3300
        %3347 = vmatprep.subr.mxu0 0.0
        %3348 = vmatpush1.msra.mxu0 %v3299
        %3349 = vmatprep.subr.mxu0 0.0
        %3350 = vmatpush2.msra.mxu0 0.0
        %3351 = vmatprep.subr.mxu0 0.0
        %3352 = vmatpush2.msra.mxu0 0.0
        %3353 = vmatprep.subr.mxu0 0.0
        %3354 = vmatpush2.msra.mxu0 0.0
        %3355 = vmatprep.subr.mxu0 0.0
        %3356 = vmatpush2.msra.mxu0 0.0
        %3357 = vmatprep.subr.mxu0 0.0
        %3358 = vmatpush2.msra.mxu0 0.0
        %3359 = vmatprep.subr.mxu0 0.0
        %3360 = vmatpush2.msra.mxu0 0.0
        %3361 = vmatprep.subr.mxu0 0.0
        %3362 = vmatpush2.msra.mxu0 0.0
        %3363 = vmatprep.subr.mxu0 0.0
        %3364 = vmatpush2.msra.mxu0 0.0
        %3365 = vmatprep.subr.mxu0 0.0
        %3366 = vmatpush2.msra.mxu0 0.0
        %3367 = vmatprep.subr.mxu0 0.0
        %3368 = vmatpush2.msra.mxu0 0.0
        %3369 = vmatprep.subr.mxu0 0.0
        %3370 = vmatpush2.msra.mxu0 0.0
        %3371 = vmatprep.subr.mxu0 0.0
        %3372 = vmatpush2.msra.mxu0 0.0
        %3373 = vmatprep.subr.mxu0 0.0
        %3374 = vmatpush2.msra.mxu0 0.0
        %3375 = vmatprep.subr.mxu0 0.0
        %3376 = vmatpush2.msra.mxu0 0.0
        %3377 = vmatprep.subr.mxu0 0.0
        %3378 = vmatpush2.msra.mxu0 0.0
        %3379 = vmatprep.subr.mxu0 0.0
        %3380 = vmatpush2.msra.mxu0 0.0
        %3381 = vmatprep.mubr.f32.mxu0 0.0
        %3382 = vmatmul.mubr.f32.gmra.mxu0 %v3312
        %v3383 = vpop.f32.mrf.mxu0
        %v3384 = vadd.f32 %v3309, %v3383
        %v3385 = vpop.f32.mrf.mxu0
        %3386 = vmatprep.mubr.f32.mxu0 0.0
        %3387 = vmatmul.mubr.f32.gmra.mxu0 %v3315
        %v3388 = vpop.f32.mrf.mxu0
        %v3389 = vadd.f32 %v3309, %v3388
        %v3390 = vpop.f32.mrf.mxu0
        %3391 = vdwg.mxu0
        %v3392 = vmax.f32 %v3384, 0.0
        %v3393 = vmax.f32 %v3389, 0.0
        %v3395 = vsel %vm1290, %v3393, 0
        %3397 = vmatprep.subr.mxu0 0.0
        %3398 = vmatpush1.msra.mxu0 0.0
        %3399 = vmatprep.subr.mxu0 0.0
        %3400 = vmatpush1.msra.mxu0 0.0
        %3401 = vmatprep.subr.mxu0 0.0
        %3402 = vmatpush1.msra.mxu0 0.0
        %3403 = vmatprep.subr.mxu0 0.0
        %3404 = vmatpush1.msra.mxu0 0.0
        %3405 = vmatprep.subr.mxu0 0.0
        %3406 = vmatpush1.msra.mxu0 0.0
        %3407 = vmatprep.subr.mxu0 0.0
        %3408 = vmatpush1.msra.mxu0 0.0
        %3409 = vmatprep.subr.mxu0 0.0
        %3410 = vmatpush1.msra.mxu0 0.0
        %3411 = vmatprep.subr.mxu0 0.0
        %3412 = vmatpush1.msra.mxu0 0.0
        %3413 = vmatprep.subr.mxu0 0.0
        %3414 = vmatpush1.msra.mxu0 0.0
        %3415 = vmatprep.subr.mxu0 0.0
        %3416 = vmatpush1.msra.mxu0 0.0
        %3417 = vmatprep.subr.mxu0 0.0
        %3418 = vmatpush1.msra.mxu0 0.0
        %3419 = vmatprep.subr.mxu0 0.0
        %3420 = vmatpush1.msra.mxu0 0.0
        %3421 = vmatprep.subr.mxu0 0.0
        %3422 = vmatpush1.msra.mxu0 0.0
        %3423 = vmatprep.subr.mxu0 0.0
        %3424 = vmatpush1.msra.mxu0 0.0
        %3425 = vmatprep.subr.mxu0 0.0
        %3426 = vmatpush1.msra.mxu0 %v3395
        %3427 = vmatprep.subr.mxu0 0.0
        %3428 = vmatpush1.msra.mxu0 %v3392
        %3429 = vmatprep.subr.mxu0 0.0
        %3430 = vmatpush2.msra.mxu0 0.0
        %3431 = vmatprep.subr.mxu0 0.0
        %3432 = vmatpush2.msra.mxu0 0.0
        %3433 = vmatprep.subr.mxu0 0.0
        %3434 = vmatpush2.msra.mxu0 0.0
        %3435 = vmatprep.subr.mxu0 0.0
        %3436 = vmatpush2.msra.mxu0 0.0
        %3437 = vmatprep.subr.mxu0 0.0
        %3438 = vmatpush2.msra.mxu0 0.0
        %3439 = vmatprep.subr.mxu0 0.0
        %3440 = vmatpush2.msra.mxu0 0.0
        %3441 = vmatprep.subr.mxu0 0.0
        %3442 = vmatpush2.msra.mxu0 0.0
        %3443 = vmatprep.subr.mxu0 0.0
        %3444 = vmatpush2.msra.mxu0 0.0
        %3445 = vmatprep.subr.mxu0 0.0
        %3446 = vmatpush2.msra.mxu0 0.0
        %3447 = vmatprep.subr.mxu0 0.0
        %3448 = vmatpush2.msra.mxu0 0.0
        %3449 = vmatprep.subr.mxu0 0.0
        %3450 = vmatpush2.msra.mxu0 0.0
        %3451 = vmatprep.subr.mxu0 0.0
        %3452 = vmatpush2.msra.mxu0 0.0
        %3453 = vmatprep.subr.mxu0 0.0
        %3454 = vmatpush2.msra.mxu0 0.0
        %3455 = vmatprep.subr.mxu0 0.0
        %3456 = vmatpush2.msra.mxu0 0.0
        %3457 = vmatprep.subr.mxu0 0.0
        %3458 = vmatpush2.msra.mxu0 0.0
        %3459 = vmatprep.subr.mxu0 0.0
        %3460 = vmatpush2.msra.mxu0 0.0
        %3461 = vmatprep.mubr.f32.mxu0 0.0
        %3462 = vmatmul.mubr.f32.gmra.mxu0 %v1285
        %v3463 = vpop.f32.mrf.mxu0
        %v3464 = vadd.f32 0.0, %v3463
        %v3465 = vpop.f32.mrf.mxu0
        %3466 = vmatprep.mubr.f32.mxu0 0.0
        %3467 = vmatmul.mubr.f32.gmra.mxu0 %v1288
        %v3468 = vpop.f32.mrf.mxu0
        %v3469 = vadd.f32 0.0, %v3468
        %v3470 = vpop.f32.mrf.mxu0
        %3471 = vdwg.mxu0
        %3472 = vmatprep.subr.mxu0 0.0
        %3473 = vmatpush1.msra.mxu0 0.0
        %3474 = vmatprep.subr.mxu0 0.0
        %3475 = vmatpush1.msra.mxu0 0.0
        %3476 = vmatprep.subr.mxu0 0.0
        %3477 = vmatpush1.msra.mxu0 0.0
        %3478 = vmatprep.subr.mxu0 0.0
        %3479 = vmatpush1.msra.mxu0 0.0
        %3480 = vmatprep.subr.mxu0 0.0
        %3481 = vmatpush1.msra.mxu0 0.0
        %3482 = vmatprep.subr.mxu0 0.0
        %3483 = vmatpush1.msra.mxu0 0.0
        %3484 = vmatprep.subr.mxu0 0.0
        %3485 = vmatpush1.msra.mxu0 0.0
        %3486 = vmatprep.subr.mxu0 0.0
        %3487 = vmatpush1.msra.mxu0 0.0
        %3488 = vmatprep.subr.mxu0 0.0
        %3489 = vmatpush1.msra.mxu0 0.0
        %3490 = vmatprep.subr.mxu0 0.0
        %3491 = vmatpush1.msra.mxu0 0.0
        %3492 = vmatprep.subr.mxu0 0.0
        %3493 = vmatpush1.msra.mxu0 0.0
        %3494 = vmatprep.subr.mxu0 0.0
        %3495 = vmatpush1.msra.mxu0 0.0
        %3496 = vmatprep.subr.mxu0 0.0
        %3497 = vmatpush1.msra.mxu0 0.0
        %3498 = vmatprep.subr.mxu0 0.0
        %3499 = vmatpush1.msra.mxu0 0.0
        %3500 = vmatprep.subr.mxu0 0.0
        %3501 = vmatpush1.msra.mxu0 %v3395
        %3502 = vmatprep.subr.mxu0 0.0
        %3503 = vmatpush1.msra.mxu0 %v3392
        %3504 = vmatprep.subr.mxu0 0.0
        %3505 = vmatpush2.msra.mxu0 0.0
        %3506 = vmatprep.subr.mxu0 0.0
        %3507 = vmatpush2.msra.mxu0 0.0
        %3508 = vmatprep.subr.mxu0 0.0
        %3509 = vmatpush2.msra.mxu0 0.0
        %3510 = vmatprep.subr.mxu0 0.0
        %3511 = vmatpush2.msra.mxu0 0.0
        %3512 = vmatprep.subr.mxu0 0.0
        %3513 = vmatpush2.msra.mxu0 0.0
        %3514 = vmatprep.subr.mxu0 0.0
        %3515 = vmatpush2.msra.mxu0 0.0
        %3516 = vmatprep.subr.mxu0 0.0
        %3517 = vmatpush2.msra.mxu0 0.0
        %3518 = vmatprep.subr.mxu0 0.0
        %3519 = vmatpush2.msra.mxu0 0.0
        %3520 = vmatprep.subr.mxu0 0.0
        %3521 = vmatpush2.msra.mxu0 0.0
        %3522 = vmatprep.subr.mxu0 0.0
        %3523 = vmatpush2.msra.mxu0 0.0
        %3524 = vmatprep.subr.mxu0 0.0
        %3525 = vmatpush2.msra.mxu0 0.0
        %3526 = vmatprep.subr.mxu0 0.0
        %3527 = vmatpush2.msra.mxu0 0.0
        %3528 = vmatprep.subr.mxu0 0.0
        %3529 = vmatpush2.msra.mxu0 0.0
        %3530 = vmatprep.subr.mxu0 0.0
        %3531 = vmatpush2.msra.mxu0 0.0
        %3532 = vmatprep.subr.mxu0 0.0
        %3533 = vmatpush2.msra.mxu0 0.0
        %3534 = vmatprep.subr.mxu0 0.0
        %3535 = vmatpush2.msra.mxu0 0.0
        %3536 = vmatprep.mubr.f32.mxu0 0.0
        %3537 = vmatmul.mubr.f32.gmra.mxu0 %v1370
        %v3538 = vpop.f32.mrf.mxu0
        %v3539 = vadd.f32 0.0, %v3538
        %v3540 = vpop.f32.mrf.mxu0
        %3541 = vmatprep.mubr.f32.mxu0 0.0
        %3542 = vmatmul.mubr.f32.gmra.mxu0 %v1373
        %v3543 = vpop.f32.mrf.mxu0
        %v3544 = vadd.f32 0.0, %v3543
        %v3545 = vpop.f32.mrf.mxu0
        %3546 = vdwg.mxu0
        %s3547 = scalar_lea.vmem %s14, 64
        %v3548 = vld [vmem:[%s3547] sm:$0xff]
        %v3549 = vld [vmem:[%s3547 + $0x8] sm:$0xff]
        %v3550 = vld [vmem:[%s3547 + $0x10] sm:$0xff]
        %v3551 = vld [vmem:[%s3547 + $0x18] sm:$0xff]
        %s3552 = scalar_lea.vmem %s15, 64
        %v3553 = vld [vmem:[%s3552] sm:$0xff]
        %v3554 = vld [vmem:[%s3552 + $0x8] sm:$0xff]
        %v3555 = vld [vmem:[%s3552 + $0x10] sm:$0xff]
        %v3556 = vld [vmem:[%s3552 + $0x18] sm:$0xff]
        %v3558 = vsel %vm1458, %v2954, 0
        %v3561 = vsel %vm1458, %v2955, 0
        %3563 = vmatprep.subr.mxu0 0.0
        %3564 = vmatpush1.msra.mxu0 0.0
        %3565 = vmatprep.subr.mxu0 0.0
        %3566 = vmatpush1.msra.mxu0 0.0
        %3567 = vmatprep.subr.mxu0 0.0
        %3568 = vmatpush1.msra.mxu0 0.0
        %3569 = vmatprep.subr.mxu0 0.0
        %3570 = vmatpush1.msra.mxu0 0.0
        %3571 = vmatprep.subr.mxu0 0.0
        %3572 = vmatpush1.msra.mxu0 0.0
        %3573 = vmatprep.subr.mxu0 0.0
        %3574 = vmatpush1.msra.mxu0 0.0
        %3575 = vmatprep.subr.mxu0 0.0
        %3576 = vmatpush1.msra.mxu0 0.0
        %3577 = vmatprep.subr.mxu0 0.0
        %3578 = vmatpush1.msra.mxu0 0.0
        %3579 = vmatprep.subr.mxu0 0.0
        %3580 = vmatpush1.msra.mxu0 0.0
        %3581 = vmatprep.subr.mxu0 0.0
        %3582 = vmatpush1.msra.mxu0 0.0
        %3583 = vmatprep.subr.mxu0 0.0
        %3584 = vmatpush1.msra.mxu0 0.0
        %3585 = vmatprep.subr.mxu0 0.0
        %3586 = vmatpush1.msra.mxu0 0.0
        %3587 = vmatprep.subr.mxu0 0.0
        %3588 = vmatpush1.msra.mxu0 %v3556
        %3589 = vmatprep.subr.mxu0 0.0
        %3590 = vmatpush1.msra.mxu0 %v3555
        %3591 = vmatprep.subr.mxu0 0.0
        %3592 = vmatpush1.msra.mxu0 %v3554
        %3593 = vmatprep.subr.mxu0 0.0
        %3594 = vmatpush1.msra.mxu0 %v3553
        %3595 = vmatprep.subr.mxu0 0.0
        %3596 = vmatpush2.msra.mxu0 0.0
        %3597 = vmatprep.subr.mxu0 0.0
        %3598 = vmatpush2.msra.mxu0 0.0
        %3599 = vmatprep.subr.mxu0 0.0
        %3600 = vmatpush2.msra.mxu0 0.0
        %3601 = vmatprep.subr.mxu0 0.0
        %3602 = vmatpush2.msra.mxu0 0.0
        %3603 = vmatprep.subr.mxu0 0.0
        %3604 = vmatpush2.msra.mxu0 0.0
        %3605 = vmatprep.subr.mxu0 0.0
        %3606 = vmatpush2.msra.mxu0 0.0
        %3607 = vmatprep.subr.mxu0 0.0
        %3608 = vmatpush2.msra.mxu0 0.0
        %3609 = vmatprep.subr.mxu0 0.0
        %3610 = vmatpush2.msra.mxu0 0.0
        %3611 = vmatprep.subr.mxu0 0.0
        %3612 = vmatpush2.msra.mxu0 0.0
        %3613 = vmatprep.subr.mxu0 0.0
        %3614 = vmatpush2.msra.mxu0 0.0
        %3615 = vmatprep.subr.mxu0 0.0
        %3616 = vmatpush2.msra.mxu0 0.0
        %3617 = vmatprep.subr.mxu0 0.0
        %3618 = vmatpush2.msra.mxu0 0.0
        %3619 = vmatprep.subr.mxu0 0.0
        %3620 = vmatpush2.msra.mxu0 0.0
        %3621 = vmatprep.subr.mxu0 0.0
        %3622 = vmatpush2.msra.mxu0 0.0
        %3623 = vmatprep.subr.mxu0 0.0
        %3624 = vmatpush2.msra.mxu0 0.0
        %3625 = vmatprep.subr.mxu0 0.0
        %3626 = vmatpush2.msra.mxu0 0.0
        %3627 = vmatprep.mubr.f32.mxu0 0.0
        %3628 = vmatmul.mubr.f32.gmra.mxu0 %v3558
        %v3629 = vpop.f32.mrf.mxu0
        %v3630 = vadd.f32 0.0, %v3629
        %v3631 = vpop.f32.mrf.mxu0
        %3632 = vmatprep.mubr.f32.mxu0 0.0
        %3633 = vmatmul.mubr.f32.gmra.mxu0 %v3561
        %v3634 = vpop.f32.mrf.mxu0
        %v3635 = vadd.f32 0.0, %v3634
        %v3636 = vpop.f32.mrf.mxu0
        %3637 = vdwg.mxu0
        %v3639 = vsel %vm1458, %v3464, 0
        %v3642 = vsel %vm1458, %v3469, 0
        %3644 = vmatprep.subr.mxu0 0.0
        %3645 = vmatpush1.msra.mxu0 0.0
        %3646 = vmatprep.subr.mxu0 0.0
        %3647 = vmatpush1.msra.mxu0 0.0
        %3648 = vmatprep.subr.mxu0 0.0
        %3649 = vmatpush1.msra.mxu0 0.0
        %3650 = vmatprep.subr.mxu0 0.0
        %3651 = vmatpush1.msra.mxu0 0.0
        %3652 = vmatprep.subr.mxu0 0.0
        %3653 = vmatpush1.msra.mxu0 0.0
        %3654 = vmatprep.subr.mxu0 0.0
        %3655 = vmatpush1.msra.mxu0 0.0
        %3656 = vmatprep.subr.mxu0 0.0
        %3657 = vmatpush1.msra.mxu0 0.0
        %3658 = vmatprep.subr.mxu0 0.0
        %3659 = vmatpush1.msra.mxu0 0.0
        %3660 = vmatprep.subr.mxu0 0.0
        %3661 = vmatpush1.msra.mxu0 0.0
        %3662 = vmatprep.subr.mxu0 0.0
        %3663 = vmatpush1.msra.mxu0 0.0
        %3664 = vmatprep.subr.mxu0 0.0
        %3665 = vmatpush1.msra.mxu0 0.0
        %3666 = vmatprep.subr.mxu0 0.0
        %3667 = vmatpush1.msra.mxu0 0.0
        %3668 = vmatprep.subr.mxu0 0.0
        %3669 = vmatpush1.msra.mxu0 %v3551
        %3670 = vmatprep.subr.mxu0 0.0
        %3671 = vmatpush1.msra.mxu0 %v3550
        %3672 = vmatprep.subr.mxu0 0.0
        %3673 = vmatpush1.msra.mxu0 %v3549
        %3674 = vmatprep.subr.mxu0 0.0
        %3675 = vmatpush1.msra.mxu0 %v3548
        %3676 = vmatprep.subr.mxu0 0.0
        %3677 = vmatpush2.msra.mxu0 0.0
        %3678 = vmatprep.subr.mxu0 0.0
        %3679 = vmatpush2.msra.mxu0 0.0
        %3680 = vmatprep.subr.mxu0 0.0
        %3681 = vmatpush2.msra.mxu0 0.0
        %3682 = vmatprep.subr.mxu0 0.0
        %3683 = vmatpush2.msra.mxu0 0.0
        %3684 = vmatprep.subr.mxu0 0.0
        %3685 = vmatpush2.msra.mxu0 0.0
        %3686 = vmatprep.subr.mxu0 0.0
        %3687 = vmatpush2.msra.mxu0 0.0
        %3688 = vmatprep.subr.mxu0 0.0
        %3689 = vmatpush2.msra.mxu0 0.0
        %3690 = vmatprep.subr.mxu0 0.0
        %3691 = vmatpush2.msra.mxu0 0.0
        %3692 = vmatprep.subr.mxu0 0.0
        %3693 = vmatpush2.msra.mxu0 0.0
        %3694 = vmatprep.subr.mxu0 0.0
        %3695 = vmatpush2.msra.mxu0 0.0
        %3696 = vmatprep.subr.mxu0 0.0
        %3697 = vmatpush2.msra.mxu0 0.0
        %3698 = vmatprep.subr.mxu0 0.0
        %3699 = vmatpush2.msra.mxu0 0.0
        %3700 = vmatprep.subr.mxu0 0.0
        %3701 = vmatpush2.msra.mxu0 0.0
        %3702 = vmatprep.subr.mxu0 0.0
        %3703 = vmatpush2.msra.mxu0 0.0
        %3704 = vmatprep.subr.mxu0 0.0
        %3705 = vmatpush2.msra.mxu0 0.0
        %3706 = vmatprep.subr.mxu0 0.0
        %3707 = vmatpush2.msra.mxu0 0.0
        %3708 = vmatprep.mubr.f32.mxu0 0.0
        %3709 = vmatmul.mubr.f32.gmra.mxu0 %v3639
        %v3710 = vpop.f32.mrf.mxu0
        %v3711 = vadd.f32 %v3630, %v3710
        %v3712 = vpop.f32.mrf.mxu0
        %3713 = vmatprep.mubr.f32.mxu0 0.0
        %3714 = vmatmul.mubr.f32.gmra.mxu0 %v3642
        %v3715 = vpop.f32.mrf.mxu0
        %v3716 = vadd.f32 %v3635, %v3715
        %v3717 = vpop.f32.mrf.mxu0
        %3718 = vdwg.mxu0
        %s3719 = scalar_lea.vmem %s16, 64
        %v3720 = vld [vmem:[%s3719] sm:$0xff]
        %v3721 = vld [vmem:[%s3719 + $0x8] sm:$0xff]
        %v3722 = vld [vmem:[%s3719 + $0x10] sm:$0xff]
        %v3723 = vld [vmem:[%s3719 + $0x18] sm:$0xff]
        %v3725 = vsel %vm1458, %v3539, 0
        %v3728 = vsel %vm1458, %v3544, 0
        %3730 = vmatprep.subr.mxu0 0.0
        %3731 = vmatpush1.msra.mxu0 0.0
        %3732 = vmatprep.subr.mxu0 0.0
        %3733 = vmatpush1.msra.mxu0 0.0
        %3734 = vmatprep.subr.mxu0 0.0
        %3735 = vmatpush1.msra.mxu0 0.0
        %3736 = vmatprep.subr.mxu0 0.0
        %3737 = vmatpush1.msra.mxu0 0.0
        %3738 = vmatprep.subr.mxu0 0.0
        %3739 = vmatpush1.msra.mxu0 0.0
        %3740 = vmatprep.subr.mxu0 0.0
        %3741 = vmatpush1.msra.mxu0 0.0
        %3742 = vmatprep.subr.mxu0 0.0
        %3743 = vmatpush1.msra.mxu0 0.0
        %3744 = vmatprep.subr.mxu0 0.0
        %3745 = vmatpush1.msra.mxu0 0.0
        %3746 = vmatprep.subr.mxu0 0.0
        %3747 = vmatpush1.msra.mxu0 0.0
        %3748 = vmatprep.subr.mxu0 0.0
        %3749 = vmatpush1.msra.mxu0 0.0
        %3750 = vmatprep.subr.mxu0 0.0
        %3751 = vmatpush1.msra.mxu0 0.0
        %3752 = vmatprep.subr.mxu0 0.0
        %3753 = vmatpush1.msra.mxu0 0.0
        %3754 = vmatprep.subr.mxu0 0.0
        %3755 = vmatpush1.msra.mxu0 %v3723
        %3756 = vmatprep.subr.mxu0 0.0
        %3757 = vmatpush1.msra.mxu0 %v3722
        %3758 = vmatprep.subr.mxu0 0.0
        %3759 = vmatpush1.msra.mxu0 %v3721
        %3760 = vmatprep.subr.mxu0 0.0
        %3761 = vmatpush1.msra.mxu0 %v3720
        %3762 = vmatprep.subr.mxu0 0.0
        %3763 = vmatpush2.msra.mxu0 0.0
        %3764 = vmatprep.subr.mxu0 0.0
        %3765 = vmatpush2.msra.mxu0 0.0
        %3766 = vmatprep.subr.mxu0 0.0
        %3767 = vmatpush2.msra.mxu0 0.0
        %3768 = vmatprep.subr.mxu0 0.0
        %3769 = vmatpush2.msra.mxu0 0.0
        %3770 = vmatprep.subr.mxu0 0.0
        %3771 = vmatpush2.msra.mxu0 0.0
        %3772 = vmatprep.subr.mxu0 0.0
        %3773 = vmatpush2.msra.mxu0 0.0
        %3774 = vmatprep.subr.mxu0 0.0
        %3775 = vmatpush2.msra.mxu0 0.0
        %3776 = vmatprep.subr.mxu0 0.0
        %3777 = vmatpush2.msra.mxu0 0.0
        %3778 = vmatprep.subr.mxu0 0.0
        %3779 = vmatpush2.msra.mxu0 0.0
        %3780 = vmatprep.subr.mxu0 0.0
        %3781 = vmatpush2.msra.mxu0 0.0
        %3782 = vmatprep.subr.mxu0 0.0
        %3783 = vmatpush2.msra.mxu0 0.0
        %3784 = vmatprep.subr.mxu0 0.0
        %3785 = vmatpush2.msra.mxu0 0.0
        %3786 = vmatprep.subr.mxu0 0.0
        %3787 = vmatpush2.msra.mxu0 0.0
        %3788 = vmatprep.subr.mxu0 0.0
        %3789 = vmatpush2.msra.mxu0 0.0
        %3790 = vmatprep.subr.mxu0 0.0
        %3791 = vmatpush2.msra.mxu0 0.0
        %3792 = vmatprep.subr.mxu0 0.0
        %3793 = vmatpush2.msra.mxu0 0.0
        %3794 = vmatprep.mubr.f32.mxu0 0.0
        %3795 = vmatmul.mubr.f32.gmra.mxu0 %v3725
        %v3796 = vpop.f32.mrf.mxu0
        %v3797 = vadd.f32 0.0, %v3796
        %v3798 = vpop.f32.mrf.mxu0
        %3799 = vmatprep.mubr.f32.mxu0 0.0
        %3800 = vmatmul.mubr.f32.gmra.mxu0 %v3728
        %v3801 = vpop.f32.mrf.mxu0
        %v3802 = vadd.f32 0.0, %v3801
        %v3803 = vpop.f32.mrf.mxu0
        %3804 = vdwg.mxu0
        %v3805 = vadd.f32 %v3711, %v3797
        %v3806 = vadd.f32 %v3716, %v3802
        %s3807 = scalar_lea.vmem %s17, 2
        %v3808 = vld [vmem:[%s3807] sm:$0x1]
        %v3810 = vlaneseq
        %v3811 = vshrl.u32 %v3810, 7
        %v3812 = vsub.s32 0, %v3811
        %v3813 = vrot.slane %v3808, %v3812
        %v3815 = vadd.f32 %v3805, %v3813
        %v3816 = vadd.f32 %v3806, %v3813
        %v3817 = vmax.f32 %v3815, 0.0
        %v3818 = vmax.f32 %v3816, 0.0
        %s3819 = scalar_lea.vmem %s18, 64
        %v3820 = vld [vmem:[%s3819] sm:$0xff]
        %v3821 = vld [vmem:[%s3819 + $0x8] sm:$0xff]
        %v3822 = vld [vmem:[%s3819 + $0x10] sm:$0xff]
        %v3823 = vld [vmem:[%s3819 + $0x18] sm:$0xff]
        %s3824 = scalar_lea.vmem %s19, 2
        %v3825 = vld [vmem:[%s3824] sm:$0x1]
        %v3827 = vlaneseq
        %v3828 = vshrl.u32 %v3827, 7
        %v3829 = vsub.s32 0, %v3828
        %v3830 = vrot.slane %v3825, %v3829
        %v3833 = vsel %vm1458, %v3817, 0
        %v3836 = vsel %vm1458, %v3818, 0
        %3838 = vmatprep.subr.mxu0 0.0
        %3839 = vmatpush1.msra.mxu0 0.0
        %3840 = vmatprep.subr.mxu0 0.0
        %3841 = vmatpush1.msra.mxu0 0.0
        %3842 = vmatprep.subr.mxu0 0.0
        %3843 = vmatpush1.msra.mxu0 0.0
        %3844 = vmatprep.subr.mxu0 0.0
        %3845 = vmatpush1.msra.mxu0 0.0
        %3846 = vmatprep.subr.mxu0 0.0
        %3847 = vmatpush1.msra.mxu0 0.0
        %3848 = vmatprep.subr.mxu0 0.0
        %3849 = vmatpush1.msra.mxu0 0.0
        %3850 = vmatprep.subr.mxu0 0.0
        %3851 = vmatpush1.msra.mxu0 0.0
        %3852 = vmatprep.subr.mxu0 0.0
        %3853 = vmatpush1.msra.mxu0 0.0
        %3854 = vmatprep.subr.mxu0 0.0
        %3855 = vmatpush1.msra.mxu0 0.0
        %3856 = vmatprep.subr.mxu0 0.0
        %3857 = vmatpush1.msra.mxu0 0.0
        %3858 = vmatprep.subr.mxu0 0.0
        %3859 = vmatpush1.msra.mxu0 0.0
        %3860 = vmatprep.subr.mxu0 0.0
        %3861 = vmatpush1.msra.mxu0 0.0
        %3862 = vmatprep.subr.mxu0 0.0
        %3863 = vmatpush1.msra.mxu0 %v3823
        %3864 = vmatprep.subr.mxu0 0.0
        %3865 = vmatpush1.msra.mxu0 %v3822
        %3866 = vmatprep.subr.mxu0 0.0
        %3867 = vmatpush1.msra.mxu0 %v3821
        %3868 = vmatprep.subr.mxu0 0.0
        %3869 = vmatpush1.msra.mxu0 %v3820
        %3870 = vmatprep.subr.mxu0 0.0
        %3871 = vmatpush2.msra.mxu0 0.0
        %3872 = vmatprep.subr.mxu0 0.0
        %3873 = vmatpush2.msra.mxu0 0.0
        %3874 = vmatprep.subr.mxu0 0.0
        %3875 = vmatpush2.msra.mxu0 0.0
        %3876 = vmatprep.subr.mxu0 0.0
        %3877 = vmatpush2.msra.mxu0 0.0
        %3878 = vmatprep.subr.mxu0 0.0
        %3879 = vmatpush2.msra.mxu0 0.0
        %3880 = vmatprep.subr.mxu0 0.0
        %3881 = vmatpush2.msra.mxu0 0.0
        %3882 = vmatprep.subr.mxu0 0.0
        %3883 = vmatpush2.msra.mxu0 0.0
        %3884 = vmatprep.subr.mxu0 0.0
        %3885 = vmatpush2.msra.mxu0 0.0
        %3886 = vmatprep.subr.mxu0 0.0
        %3887 = vmatpush2.msra.mxu0 0.0
        %3888 = vmatprep.subr.mxu0 0.0
        %3889 = vmatpush2.msra.mxu0 0.0
        %3890 = vmatprep.subr.mxu0 0.0
        %3891 = vmatpush2.msra.mxu0 0.0
        %3892 = vmatprep.subr.mxu0 0.0
        %3893 = vmatpush2.msra.mxu0 0.0
        %3894 = vmatprep.subr.mxu0 0.0
        %3895 = vmatpush2.msra.mxu0 0.0
        %3896 = vmatprep.subr.mxu0 0.0
        %3897 = vmatpush2.msra.mxu0 0.0
        %3898 = vmatprep.subr.mxu0 0.0
        %3899 = vmatpush2.msra.mxu0 0.0
        %3900 = vmatprep.subr.mxu0 0.0
        %3901 = vmatpush2.msra.mxu0 0.0
        %3902 = vmatprep.mubr.f32.mxu0 0.0
        %3903 = vmatmul.mubr.f32.gmra.mxu0 %v3833
        %v3904 = vpop.f32.mrf.mxu0
        %v3905 = vadd.f32 %v3830, %v3904
        %v3906 = vpop.f32.mrf.mxu0
        %3907 = vmatprep.mubr.f32.mxu0 0.0
        %3908 = vmatmul.mubr.f32.gmra.mxu0 %v3836
        %v3909 = vpop.f32.mrf.mxu0
        %v3910 = vadd.f32 %v3830, %v3909
        %v3911 = vpop.f32.mrf.mxu0
        %3912 = vdwg.mxu0
        %v3913 = vmax.f32 %v3905, 0.0
        %v3914 = vmax.f32 %v3910, 0.0
        %s3915 = scalar_lea.vmem %s20, 64
        %v3916 = vld [vmem:[%s3915] sm:$0xff]
        %v3917 = vld [vmem:[%s3915 + $0x8] sm:$0xff]
        %v3918 = vld [vmem:[%s3915 + $0x10] sm:$0xff]
        %v3919 = vld [vmem:[%s3915 + $0x18] sm:$0xff]
        %s3920 = scalar_lea.vmem %s21, 2
        %v3921 = vld [vmem:[%s3920] sm:$0x1]
        %v3923 = vlaneseq
        %v3924 = vshrl.u32 %v3923, 7
        %v3925 = vsub.s32 0, %v3924
        %v3926 = vrot.slane %v3921, %v3925
        %3928 = vmatprep.subr.mxu0 0.0
        %3929 = vmatpush1.msra.mxu0 0.0
        %3930 = vmatprep.subr.mxu0 0.0
        %3931 = vmatpush1.msra.mxu0 0.0
        %3932 = vmatprep.subr.mxu0 0.0
        %3933 = vmatpush1.msra.mxu0 0.0
        %3934 = vmatprep.subr.mxu0 0.0
        %3935 = vmatpush1.msra.mxu0 0.0
        %3936 = vmatprep.subr.mxu0 0.0
        %3937 = vmatpush1.msra.mxu0 0.0
        %3938 = vmatprep.subr.mxu0 0.0
        %3939 = vmatpush1.msra.mxu0 0.0
        %3940 = vmatprep.subr.mxu0 0.0
        %3941 = vmatpush1.msra.mxu0 0.0
        %3942 = vmatprep.subr.mxu0 0.0
        %3943 = vmatpush1.msra.mxu0 0.0
        %3944 = vmatprep.subr.mxu0 0.0
        %3945 = vmatpush1.msra.mxu0 0.0
        %3946 = vmatprep.subr.mxu0 0.0
        %3947 = vmatpush1.msra.mxu0 0.0
        %3948 = vmatprep.subr.mxu0 0.0
        %3949 = vmatpush1.msra.mxu0 0.0
        %3950 = vmatprep.subr.mxu0 0.0
        %3951 = vmatpush1.msra.mxu0 0.0
        %3952 = vmatprep.subr.mxu0 0.0
        %3953 = vmatpush1.msra.mxu0 %v3919
        %3954 = vmatprep.subr.mxu0 0.0
        %3955 = vmatpush1.msra.mxu0 %v3918
        %3956 = vmatprep.subr.mxu0 0.0
        %3957 = vmatpush1.msra.mxu0 %v3917
        %3958 = vmatprep.subr.mxu0 0.0
        %3959 = vmatpush1.msra.mxu0 %v3916
        %3960 = vmatprep.subr.mxu0 0.0
        %3961 = vmatpush2.msra.mxu0 0.0
        %3962 = vmatprep.subr.mxu0 0.0
        %3963 = vmatpush2.msra.mxu0 0.0
        %3964 = vmatprep.subr.mxu0 0.0
        %3965 = vmatpush2.msra.mxu0 0.0
        %3966 = vmatprep.subr.mxu0 0.0
        %3967 = vmatpush2.msra.mxu0 0.0
        %3968 = vmatprep.subr.mxu0 0.0
        %3969 = vmatpush2.msra.mxu0 0.0
        %3970 = vmatprep.subr.mxu0 0.0
        %3971 = vmatpush2.msra.mxu0 0.0
        %3972 = vmatprep.subr.mxu0 0.0
        %3973 = vmatpush2.msra.mxu0 0.0
        %3974 = vmatprep.subr.mxu0 0.0
        %3975 = vmatpush2.msra.mxu0 0.0
        %3976 = vmatprep.subr.mxu0 0.0
        %3977 = vmatpush2.msra.mxu0 0.0
        %3978 = vmatprep.subr.mxu0 0.0
        %3979 = vmatpush2.msra.mxu0 0.0
        %3980 = vmatprep.subr.mxu0 0.0
        %3981 = vmatpush2.msra.mxu0 0.0
        %3982 = vmatprep.subr.mxu0 0.0
        %3983 = vmatpush2.msra.mxu0 0.0
        %3984 = vmatprep.subr.mxu0 0.0
        %3985 = vmatpush2.msra.mxu0 0.0
        %3986 = vmatprep.subr.mxu0 0.0
        %3987 = vmatpush2.msra.mxu0 0.0
        %3988 = vmatprep.subr.mxu0 0.0
        %3989 = vmatpush2.msra.mxu0 0.0
        %3990 = vmatprep.subr.mxu0 0.0
        %3991 = vmatpush2.msra.mxu0 0.0
        %3992 = vmatprep.mubr.f32.mxu0 0.0
        %3993 = vmatmul.mubr.f32.gmra.mxu0 %v3833
        %v3994 = vpop.f32.mrf.mxu0
        %v3995 = vadd.f32 %v3926, %v3994
        %v3996 = vpop.f32.mrf.mxu0
        %3997 = vmatprep.mubr.f32.mxu0 0.0
        %3998 = vmatmul.mubr.f32.gmra.mxu0 %v3836
        %v3999 = vpop.f32.mrf.mxu0
        %v4000 = vadd.f32 %v3926, %v3999
        %v4001 = vpop.f32.mrf.mxu0
        %4002 = vdwg.mxu0
        %v4003 = vmax.f32 %v3995, 0.0
        %v4004 = vmax.f32 %v4000, 0.0
        %s4005 = scalar_lea.vmem %s22, 64
        %v4006 = vld [vmem:[%s4005] sm:$0xff]
        %v4007 = vld [vmem:[%s4005 + $0x8] sm:$0xff]
        %v4008 = vld [vmem:[%s4005 + $0x10] sm:$0xff]
        %v4009 = vld [vmem:[%s4005 + $0x18] sm:$0xff]
        %s4010 = scalar_lea.vmem %s23, 2
        %v4011 = vld [vmem:[%s4010] sm:$0x1]
        %v4013 = vlaneseq
        %v4014 = vshrl.u32 %v4013, 7
        %v4015 = vsub.s32 0, %v4014
        %v4016 = vrot.slane %v4011, %v4015
        %4018 = vmatprep.subr.mxu0 0.0
        %4019 = vmatpush1.msra.mxu0 0.0
        %4020 = vmatprep.subr.mxu0 0.0
        %4021 = vmatpush1.msra.mxu0 0.0
        %4022 = vmatprep.subr.mxu0 0.0
        %4023 = vmatpush1.msra.mxu0 0.0
        %4024 = vmatprep.subr.mxu0 0.0
        %4025 = vmatpush1.msra.mxu0 0.0
        %4026 = vmatprep.subr.mxu0 0.0
        %4027 = vmatpush1.msra.mxu0 0.0
        %4028 = vmatprep.subr.mxu0 0.0
        %4029 = vmatpush1.msra.mxu0 0.0
        %4030 = vmatprep.subr.mxu0 0.0
        %4031 = vmatpush1.msra.mxu0 0.0
        %4032 = vmatprep.subr.mxu0 0.0
        %4033 = vmatpush1.msra.mxu0 0.0
        %4034 = vmatprep.subr.mxu0 0.0
        %4035 = vmatpush1.msra.mxu0 0.0
        %4036 = vmatprep.subr.mxu0 0.0
        %4037 = vmatpush1.msra.mxu0 0.0
        %4038 = vmatprep.subr.mxu0 0.0
        %4039 = vmatpush1.msra.mxu0 0.0
        %4040 = vmatprep.subr.mxu0 0.0
        %4041 = vmatpush1.msra.mxu0 0.0
        %4042 = vmatprep.subr.mxu0 0.0
        %4043 = vmatpush1.msra.mxu0 %v4009
        %4044 = vmatprep.subr.mxu0 0.0
        %4045 = vmatpush1.msra.mxu0 %v4008
        %4046 = vmatprep.subr.mxu0 0.0
        %4047 = vmatpush1.msra.mxu0 %v4007
        %4048 = vmatprep.subr.mxu0 0.0
        %4049 = vmatpush1.msra.mxu0 %v4006
        %4050 = vmatprep.subr.mxu0 0.0
        %4051 = vmatpush2.msra.mxu0 0.0
        %4052 = vmatprep.subr.mxu0 0.0
        %4053 = vmatpush2.msra.mxu0 0.0
        %4054 = vmatprep.subr.mxu0 0.0
        %4055 = vmatpush2.msra.mxu0 0.0
        %4056 = vmatprep.subr.mxu0 0.0
        %4057 = vmatpush2.msra.mxu0 0.0
        %4058 = vmatprep.subr.mxu0 0.0
        %4059 = vmatpush2.msra.mxu0 0.0
        %4060 = vmatprep.subr.mxu0 0.0
        %4061 = vmatpush2.msra.mxu0 0.0
        %4062 = vmatprep.subr.mxu0 0.0
        %4063 = vmatpush2.msra.mxu0 0.0
        %4064 = vmatprep.subr.mxu0 0.0
        %4065 = vmatpush2.msra.mxu0 0.0
        %4066 = vmatprep.subr.mxu0 0.0
        %4067 = vmatpush2.msra.mxu0 0.0
        %4068 = vmatprep.subr.mxu0 0.0
        %4069 = vmatpush2.msra.mxu0 0.0
        %4070 = vmatprep.subr.mxu0 0.0
        %4071 = vmatpush2.msra.mxu0 0.0
        %4072 = vmatprep.subr.mxu0 0.0
        %4073 = vmatpush2.msra.mxu0 0.0
        %4074 = vmatprep.subr.mxu0 0.0
        %4075 = vmatpush2.msra.mxu0 0.0
        %4076 = vmatprep.subr.mxu0 0.0
        %4077 = vmatpush2.msra.mxu0 0.0
        %4078 = vmatprep.subr.mxu0 0.0
        %4079 = vmatpush2.msra.mxu0 0.0
        %4080 = vmatprep.subr.mxu0 0.0
        %4081 = vmatpush2.msra.mxu0 0.0
        %4082 = vmatprep.mubr.f32.mxu0 0.0
        %4083 = vmatmul.mubr.f32.gmra.mxu0 %v3833
        %v4084 = vpop.f32.mrf.mxu0
        %v4085 = vadd.f32 %v4016, %v4084
        %v4086 = vpop.f32.mrf.mxu0
        %4087 = vmatprep.mubr.f32.mxu0 0.0
        %4088 = vmatmul.mubr.f32.gmra.mxu0 %v3836
        %v4089 = vpop.f32.mrf.mxu0
        %v4090 = vadd.f32 %v4016, %v4089
        %v4091 = vpop.f32.mrf.mxu0
        %4092 = vdwg.mxu0
        %v4093 = vmax.f32 %v4085, 0.0
        %v4094 = vmax.f32 %v4090, 0.0
        %v4096 = vsel %vm1290, %v4094, 0
        %4098 = vmatprep.subr.mxu0 0.0
        %4099 = vmatpush1.msra.mxu0 0.0
        %4100 = vmatprep.subr.mxu0 0.0
        %4101 = vmatpush1.msra.mxu0 0.0
        %4102 = vmatprep.subr.mxu0 0.0
        %4103 = vmatpush1.msra.mxu0 0.0
        %4104 = vmatprep.subr.mxu0 0.0
        %4105 = vmatpush1.msra.mxu0 0.0
        %4106 = vmatprep.subr.mxu0 0.0
        %4107 = vmatpush1.msra.mxu0 0.0
        %4108 = vmatprep.subr.mxu0 0.0
        %4109 = vmatpush1.msra.mxu0 0.0
        %4110 = vmatprep.subr.mxu0 0.0
        %4111 = vmatpush1.msra.mxu0 0.0
        %4112 = vmatprep.subr.mxu0 0.0
        %4113 = vmatpush1.msra.mxu0 0.0
        %4114 = vmatprep.subr.mxu0 0.0
        %4115 = vmatpush1.msra.mxu0 0.0
        %4116 = vmatprep.subr.mxu0 0.0
        %4117 = vmatpush1.msra.mxu0 0.0
        %4118 = vmatprep.subr.mxu0 0.0
        %4119 = vmatpush1.msra.mxu0 0.0
        %4120 = vmatprep.subr.mxu0 0.0
        %4121 = vmatpush1.msra.mxu0 0.0
        %4122 = vmatprep.subr.mxu0 0.0
        %4123 = vmatpush1.msra.mxu0 0.0
        %4124 = vmatprep.subr.mxu0 0.0
        %4125 = vmatpush1.msra.mxu0 0.0
        %4126 = vmatprep.subr.mxu0 0.0
        %4127 = vmatpush1.msra.mxu0 %v4096
        %4128 = vmatprep.subr.mxu0 0.0
        %4129 = vmatpush1.msra.mxu0 %v4093
        %4130 = vmatprep.subr.mxu0 0.0
        %4131 = vmatpush2.msra.mxu0 0.0
        %4132 = vmatprep.subr.mxu0 0.0
        %4133 = vmatpush2.msra.mxu0 0.0
        %4134 = vmatprep.subr.mxu0 0.0
        %4135 = vmatpush2.msra.mxu0 0.0
        %4136 = vmatprep.subr.mxu0 0.0
        %4137 = vmatpush2.msra.mxu0 0.0
        %4138 = vmatprep.subr.mxu0 0.0
        %4139 = vmatpush2.msra.mxu0 0.0
        %4140 = vmatprep.subr.mxu0 0.0
        %4141 = vmatpush2.msra.mxu0 0.0
        %4142 = vmatprep.subr.mxu0 0.0
        %4143 = vmatpush2.msra.mxu0 0.0
        %4144 = vmatprep.subr.mxu0 0.0
        %4145 = vmatpush2.msra.mxu0 0.0
        %4146 = vmatprep.subr.mxu0 0.0
        %4147 = vmatpush2.msra.mxu0 0.0
        %4148 = vmatprep.subr.mxu0 0.0
        %4149 = vmatpush2.msra.mxu0 0.0
        %4150 = vmatprep.subr.mxu0 0.0
        %4151 = vmatpush2.msra.mxu0 0.0
        %4152 = vmatprep.subr.mxu0 0.0
        %4153 = vmatpush2.msra.mxu0 0.0
        %4154 = vmatprep.subr.mxu0 0.0
        %4155 = vmatpush2.msra.mxu0 0.0
        %4156 = vmatprep.subr.mxu0 0.0
        %4157 = vmatpush2.msra.mxu0 0.0
        %4158 = vmatprep.subr.mxu0 0.0
        %4159 = vmatpush2.msra.mxu0 0.0
        %4160 = vmatprep.subr.mxu0 0.0
        %4161 = vmatpush2.msra.mxu0 0.0
        %4162 = vmatprep.mubr.f32.mxu0 0.0
        %4163 = vmatmul.mubr.f32.gmra.mxu0 %v1990
        %v4164 = vpop.f32.mrf.mxu0
        %v4165 = vadd.f32 0.0, %v4164
        %v4166 = vpop.f32.mrf.mxu0
        %4167 = vmatprep.mubr.f32.mxu0 0.0
        %4168 = vmatmul.mubr.f32.gmra.mxu0 %v1993
        %v4169 = vpop.f32.mrf.mxu0
        %v4170 = vadd.f32 0.0, %v4169
        %v4171 = vpop.f32.mrf.mxu0
        %4172 = vdwg.mxu0
        %v4174 = vsel %vm1290, %v3914, 0
        %4176 = vmatprep.subr.mxu0 0.0
        %4177 = vmatpush1.msra.mxu0 0.0
        %4178 = vmatprep.subr.mxu0 0.0
        %4179 = vmatpush1.msra.mxu0 0.0
        %4180 = vmatprep.subr.mxu0 0.0
        %4181 = vmatpush1.msra.mxu0 0.0
        %4182 = vmatprep.subr.mxu0 0.0
        %4183 = vmatpush1.msra.mxu0 0.0
        %4184 = vmatprep.subr.mxu0 0.0
        %4185 = vmatpush1.msra.mxu0 0.0
        %4186 = vmatprep.subr.mxu0 0.0
        %4187 = vmatpush1.msra.mxu0 0.0
        %4188 = vmatprep.subr.mxu0 0.0
        %4189 = vmatpush1.msra.mxu0 0.0
        %4190 = vmatprep.subr.mxu0 0.0
        %4191 = vmatpush1.msra.mxu0 0.0
        %4192 = vmatprep.subr.mxu0 0.0
        %4193 = vmatpush1.msra.mxu0 0.0
        %4194 = vmatprep.subr.mxu0 0.0
        %4195 = vmatpush1.msra.mxu0 0.0
        %4196 = vmatprep.subr.mxu0 0.0
        %4197 = vmatpush1.msra.mxu0 0.0
        %4198 = vmatprep.subr.mxu0 0.0
        %4199 = vmatpush1.msra.mxu0 0.0
        %4200 = vmatprep.subr.mxu0 0.0
        %4201 = vmatpush1.msra.mxu0 0.0
        %4202 = vmatprep.subr.mxu0 0.0
        %4203 = vmatpush1.msra.mxu0 0.0
        %4204 = vmatprep.subr.mxu0 0.0
        %4205 = vmatpush1.msra.mxu0 %v4174
        %4206 = vmatprep.subr.mxu0 0.0
        %4207 = vmatpush1.msra.mxu0 %v3913
        %4208 = vmatprep.subr.mxu0 0.0
        %4209 = vmatpush2.msra.mxu0 0.0
        %4210 = vmatprep.subr.mxu0 0.0
        %4211 = vmatpush2.msra.mxu0 0.0
        %4212 = vmatprep.subr.mxu0 0.0
        %4213 = vmatpush2.msra.mxu0 0.0
        %4214 = vmatprep.subr.mxu0 0.0
        %4215 = vmatpush2.msra.mxu0 0.0
        %4216 = vmatprep.subr.mxu0 0.0
        %4217 = vmatpush2.msra.mxu0 0.0
        %4218 = vmatprep.subr.mxu0 0.0
        %4219 = vmatpush2.msra.mxu0 0.0
        %4220 = vmatprep.subr.mxu0 0.0
        %4221 = vmatpush2.msra.mxu0 0.0
        %4222 = vmatprep.subr.mxu0 0.0
        %4223 = vmatpush2.msra.mxu0 0.0
        %4224 = vmatprep.subr.mxu0 0.0
        %4225 = vmatpush2.msra.mxu0 0.0
        %4226 = vmatprep.subr.mxu0 0.0
        %4227 = vmatpush2.msra.mxu0 0.0
        %4228 = vmatprep.subr.mxu0 0.0
        %4229 = vmatpush2.msra.mxu0 0.0
        %4230 = vmatprep.subr.mxu0 0.0
        %4231 = vmatpush2.msra.mxu0 0.0
        %4232 = vmatprep.subr.mxu0 0.0
        %4233 = vmatpush2.msra.mxu0 0.0
        %4234 = vmatprep.subr.mxu0 0.0
        %4235 = vmatpush2.msra.mxu0 0.0
        %4236 = vmatprep.subr.mxu0 0.0
        %4237 = vmatpush2.msra.mxu0 0.0
        %4238 = vmatprep.subr.mxu0 0.0
        %4239 = vmatpush2.msra.mxu0 0.0
        %4240 = vmatprep.mubr.f32.mxu0 0.0
        %4241 = vmatmul.mubr.f32.gmra.mxu0 %v2074
        %v4242 = vpop.f32.mrf.mxu0
        %v4243 = vadd.f32 %v4165, %v4242
        %v4244 = vpop.f32.mrf.mxu0
        %4245 = vmatprep.mubr.f32.mxu0 0.0
        %4246 = vmatmul.mubr.f32.gmra.mxu0 %v2077
        %v4247 = vpop.f32.mrf.mxu0
        %v4248 = vadd.f32 %v4170, %v4247
        %v4249 = vpop.f32.mrf.mxu0
        %4250 = vdwg.mxu0
        %s4251 = scalar_lea.vmem %s24, 64
        %v4252 = vld [vmem:[%s4251] sm:$0xff]
        %v4253 = vld [vmem:[%s4251 + $0x8] sm:$0xff]
        %v4254 = vld [vmem:[%s4251 + $0x10] sm:$0xff]
        %v4255 = vld [vmem:[%s4251 + $0x18] sm:$0xff]
        %s4256 = scalar_lea.vmem %s25, 2
        %v4257 = vld [vmem:[%s4256] sm:$0x1]
        %v4259 = vlaneseq
        %v4260 = vshrl.u32 %v4259, 7
        %v4261 = vsub.s32 0, %v4260
        %v4262 = vrot.slane %v4257, %v4261
        %v4265 = vsel %vm1458, %v4243, 0
        %v4268 = vsel %vm1458, %v4248, 0
        %4270 = vmatprep.subr.mxu0 0.0
        %4271 = vmatpush1.msra.mxu0 0.0
        %4272 = vmatprep.subr.mxu0 0.0
        %4273 = vmatpush1.msra.mxu0 0.0
        %4274 = vmatprep.subr.mxu0 0.0
        %4275 = vmatpush1.msra.mxu0 0.0
        %4276 = vmatprep.subr.mxu0 0.0
        %4277 = vmatpush1.msra.mxu0 0.0
        %4278 = vmatprep.subr.mxu0 0.0
        %4279 = vmatpush1.msra.mxu0 0.0
        %4280 = vmatprep.subr.mxu0 0.0
        %4281 = vmatpush1.msra.mxu0 0.0
        %4282 = vmatprep.subr.mxu0 0.0
        %4283 = vmatpush1.msra.mxu0 0.0
        %4284 = vmatprep.subr.mxu0 0.0
        %4285 = vmatpush1.msra.mxu0 0.0
        %4286 = vmatprep.subr.mxu0 0.0
        %4287 = vmatpush1.msra.mxu0 0.0
        %4288 = vmatprep.subr.mxu0 0.0
        %4289 = vmatpush1.msra.mxu0 0.0
        %4290 = vmatprep.subr.mxu0 0.0
        %4291 = vmatpush1.msra.mxu0 0.0
        %4292 = vmatprep.subr.mxu0 0.0
        %4293 = vmatpush1.msra.mxu0 0.0
        %4294 = vmatprep.subr.mxu0 0.0
        %4295 = vmatpush1.msra.mxu0 %v4255
        %4296 = vmatprep.subr.mxu0 0.0
        %4297 = vmatpush1.msra.mxu0 %v4254
        %4298 = vmatprep.subr.mxu0 0.0
        %4299 = vmatpush1.msra.mxu0 %v4253
        %4300 = vmatprep.subr.mxu0 0.0
        %4301 = vmatpush1.msra.mxu0 %v4252
        %4302 = vmatprep.subr.mxu0 0.0
        %4303 = vmatpush2.msra.mxu0 0.0
        %4304 = vmatprep.subr.mxu0 0.0
        %4305 = vmatpush2.msra.mxu0 0.0
        %4306 = vmatprep.subr.mxu0 0.0
        %4307 = vmatpush2.msra.mxu0 0.0
        %4308 = vmatprep.subr.mxu0 0.0
        %4309 = vmatpush2.msra.mxu0 0.0
        %4310 = vmatprep.subr.mxu0 0.0
        %4311 = vmatpush2.msra.mxu0 0.0
        %4312 = vmatprep.subr.mxu0 0.0
        %4313 = vmatpush2.msra.mxu0 0.0
        %4314 = vmatprep.subr.mxu0 0.0
        %4315 = vmatpush2.msra.mxu0 0.0
        %4316 = vmatprep.subr.mxu0 0.0
        %4317 = vmatpush2.msra.mxu0 0.0
        %4318 = vmatprep.subr.mxu0 0.0
        %4319 = vmatpush2.msra.mxu0 0.0
        %4320 = vmatprep.subr.mxu0 0.0
        %4321 = vmatpush2.msra.mxu0 0.0
        %4322 = vmatprep.subr.mxu0 0.0
        %4323 = vmatpush2.msra.mxu0 0.0
        %4324 = vmatprep.subr.mxu0 0.0
        %4325 = vmatpush2.msra.mxu0 0.0
        %4326 = vmatprep.subr.mxu0 0.0
        %4327 = vmatpush2.msra.mxu0 0.0
        %4328 = vmatprep.subr.mxu0 0.0
        %4329 = vmatpush2.msra.mxu0 0.0
        %4330 = vmatprep.subr.mxu0 0.0
        %4331 = vmatpush2.msra.mxu0 0.0
        %4332 = vmatprep.subr.mxu0 0.0
        %4333 = vmatpush2.msra.mxu0 0.0
        %4334 = vmatprep.mubr.f32.mxu0 0.0
        %4335 = vmatmul.mubr.f32.gmra.mxu0 %v4265
        %v4336 = vpop.f32.mrf.mxu0
        %v4337 = vadd.f32 %v4262, %v4336
        %v4338 = vpop.f32.mrf.mxu0
        %4339 = vmatprep.mubr.f32.mxu0 0.0
        %4340 = vmatmul.mubr.f32.gmra.mxu0 %v4268
        %v4341 = vpop.f32.mrf.mxu0
        %v4342 = vadd.f32 %v4262, %v4341
        %v4343 = vpop.f32.mrf.mxu0
        %4344 = vdwg.mxu0
        %v4345 = vmax.f32 %v4337, 0.0
        %v4346 = vmax.f32 %v4342, 0.0
        %s4347 = scalar_lea.vmem [#allocation8], 64
        %v4348 = vld [vmem:[%s4347] sm:$0xff]
        %v4349 = vld [vmem:[%s4347 + $0x8] sm:$0xff]
        %v4350 = vld [vmem:[%s4347 + $0x10] sm:$0xff]
        %v4351 = vld [vmem:[%s4347 + $0x18] sm:$0xff]
        %s4352 = scalar_lea.vmem %s27, 2
        %v4353 = vld [vmem:[%s4352] sm:$0x1]
        %v4355 = vlaneseq
        %v4356 = vshrl.u32 %v4355, 7
        %v4357 = vsub.s32 0, %v4356
        %v4358 = vrot.slane %v4353, %v4357
        %v4361 = vsel %vm1458, %v4345, 0
        %v4364 = vsel %vm1458, %v4346, 0
        %4366 = vmatprep.subr.mxu0 0.0
        %4367 = vmatpush1.msra.mxu0 0.0
        %4368 = vmatprep.subr.mxu0 0.0
        %4369 = vmatpush1.msra.mxu0 0.0
        %4370 = vmatprep.subr.mxu0 0.0
        %4371 = vmatpush1.msra.mxu0 0.0
        %4372 = vmatprep.subr.mxu0 0.0
        %4373 = vmatpush1.msra.mxu0 0.0
        %4374 = vmatprep.subr.mxu0 0.0
        %4375 = vmatpush1.msra.mxu0 0.0
        %4376 = vmatprep.subr.mxu0 0.0
        %4377 = vmatpush1.msra.mxu0 0.0
        %4378 = vmatprep.subr.mxu0 0.0
        %4379 = vmatpush1.msra.mxu0 0.0
        %4380 = vmatprep.subr.mxu0 0.0
        %4381 = vmatpush1.msra.mxu0 0.0
        %4382 = vmatprep.subr.mxu0 0.0
        %4383 = vmatpush1.msra.mxu0 0.0
        %4384 = vmatprep.subr.mxu0 0.0
        %4385 = vmatpush1.msra.mxu0 0.0
        %4386 = vmatprep.subr.mxu0 0.0
        %4387 = vmatpush1.msra.mxu0 0.0
        %4388 = vmatprep.subr.mxu0 0.0
        %4389 = vmatpush1.msra.mxu0 0.0
        %4390 = vmatprep.subr.mxu0 0.0
        %4391 = vmatpush1.msra.mxu0 %v4351
        %4392 = vmatprep.subr.mxu0 0.0
        %4393 = vmatpush1.msra.mxu0 %v4350
        %4394 = vmatprep.subr.mxu0 0.0
        %4395 = vmatpush1.msra.mxu0 %v4349
        %4396 = vmatprep.subr.mxu0 0.0
        %4397 = vmatpush1.msra.mxu0 %v4348
        %4398 = vmatprep.subr.mxu0 0.0
        %4399 = vmatpush2.msra.mxu0 0.0
        %4400 = vmatprep.subr.mxu0 0.0
        %4401 = vmatpush2.msra.mxu0 0.0
        %4402 = vmatprep.subr.mxu0 0.0
        %4403 = vmatpush2.msra.mxu0 0.0
        %4404 = vmatprep.subr.mxu0 0.0
        %4405 = vmatpush2.msra.mxu0 0.0
        %4406 = vmatprep.subr.mxu0 0.0
        %4407 = vmatpush2.msra.mxu0 0.0
        %4408 = vmatprep.subr.mxu0 0.0
        %4409 = vmatpush2.msra.mxu0 0.0
        %4410 = vmatprep.subr.mxu0 0.0
        %4411 = vmatpush2.msra.mxu0 0.0
        %4412 = vmatprep.subr.mxu0 0.0
        %4413 = vmatpush2.msra.mxu0 0.0
        %4414 = vmatprep.subr.mxu0 0.0
        %4415 = vmatpush2.msra.mxu0 0.0
        %4416 = vmatprep.subr.mxu0 0.0
        %4417 = vmatpush2.msra.mxu0 0.0
        %4418 = vmatprep.subr.mxu0 0.0
        %4419 = vmatpush2.msra.mxu0 0.0
        %4420 = vmatprep.subr.mxu0 0.0
        %4421 = vmatpush2.msra.mxu0 0.0
        %4422 = vmatprep.subr.mxu0 0.0
        %4423 = vmatpush2.msra.mxu0 0.0
        %4424 = vmatprep.subr.mxu0 0.0
        %4425 = vmatpush2.msra.mxu0 0.0
        %4426 = vmatprep.subr.mxu0 0.0
        %4427 = vmatpush2.msra.mxu0 0.0
        %4428 = vmatprep.subr.mxu0 0.0
        %4429 = vmatpush2.msra.mxu0 0.0
        %4430 = vmatprep.mubr.f32.mxu0 0.0
        %4431 = vmatmul.mubr.f32.gmra.mxu0 %v4361
        %v4432 = vpop.f32.mrf.mxu0
        %v4433 = vadd.f32 %v4358, %v4432
        %v4434 = vpop.f32.mrf.mxu0
        %4435 = vmatprep.mubr.f32.mxu0 0.0
        %4436 = vmatmul.mubr.f32.gmra.mxu0 %v4364
        %v4437 = vpop.f32.mrf.mxu0
        %v4438 = vadd.f32 %v4358, %v4437
        %v4439 = vpop.f32.mrf.mxu0
        %4440 = vdwg.mxu0
        %v4441 = vmax.f32 %v4433, 0.0
        %v4442 = vmax.f32 %v4438, 0.0
        %v4443 = vmul.f32 %v4441, %v4441
        %v4444 = vmul.f32 %v4442, %v4442
        %v4445 = vsel %vm1458, %v4443, 0.0
        %4446 = vadd.xlane.f32.xlu0 %v4445
        %v4447 = vpop.xlane.xlu0 %4446
        %vm4448 = vcmask 254976
        %v4449 = vsel %vm4448, %v4444, 0.0
        %4450 = vadd.xlane.f32.xlu0 %v4449
        %v4451 = vpop.xlane.xlu0 %4450
        %v4452 = vmax.f32 %v4447, 1e-24
        %v4453 = vmax.f32 %v4451, 1e-24
        %v4454 = vrsqrt.pop %v4452
        %v4455 = vrsqrt.pop %v4453
        %v4456 = vmul.f32 %v4441, %v4454
        %v4457 = vmul.f32 %v4442, %v4455
        %v4458 = vmul.f32 %v4003, %v4003
        %v4459 = vmul.f32 %v4004, %v4004
        %v4460 = vsel %vm1458, %v4458, 0.0
        %4461 = vadd.xlane.f32.xlu0 %v4460
        %v4462 = vpop.xlane.xlu0 %4461
        %v4463 = vsel %vm4448, %v4459, 0.0
        %4464 = vadd.xlane.f32.xlu0 %v4463
        %v4465 = vpop.xlane.xlu0 %4464
        %v4466 = vmax.f32 %v4462, 1e-24
        %v4467 = vmax.f32 %v4465, 1e-24
        %v4468 = vrsqrt.pop %v4466
        %v4469 = vrsqrt.pop %v4467
        %v4470 = vmul.f32 %v4003, %v4468
        %v4471 = vmul.f32 %v4004, %v4469
        %v4472 = vld [vmem:[#allocation7] sm:$0xff]
        %v4473 = vld [vmem:[#allocation7 + $0x8] sm:$0xff]
        %v4474 = vld [vmem:[#allocation7 + $0x10] sm:$0xff]
        %v4475 = vld [vmem:[#allocation7 + $0x18] sm:$0xff]
        %v4477 = vsel %vm1458, %v4456, 0
        %v4480 = vsel %vm1458, %v4457, 0
        %4482 = vmatprep.subr.mxu0 0.0
        %4483 = vmatpush1.msra.mxu0 0.0
        %4484 = vmatprep.subr.mxu0 0.0
        %4485 = vmatpush1.msra.mxu0 0.0
        %4486 = vmatprep.subr.mxu0 0.0
        %4487 = vmatpush1.msra.mxu0 0.0
        %4488 = vmatprep.subr.mxu0 0.0
        %4489 = vmatpush1.msra.mxu0 0.0
        %4490 = vmatprep.subr.mxu0 0.0
        %4491 = vmatpush1.msra.mxu0 0.0
        %4492 = vmatprep.subr.mxu0 0.0
        %4493 = vmatpush1.msra.mxu0 0.0
        %4494 = vmatprep.subr.mxu0 0.0
        %4495 = vmatpush1.msra.mxu0 0.0
        %4496 = vmatprep.subr.mxu0 0.0
        %4497 = vmatpush1.msra.mxu0 0.0
        %4498 = vmatprep.subr.mxu0 0.0
        %4499 = vmatpush1.msra.mxu0 0.0
        %4500 = vmatprep.subr.mxu0 0.0
        %4501 = vmatpush1.msra.mxu0 0.0
        %4502 = vmatprep.subr.mxu0 0.0
        %4503 = vmatpush1.msra.mxu0 0.0
        %4504 = vmatprep.subr.mxu0 0.0
        %4505 = vmatpush1.msra.mxu0 0.0
        %4506 = vmatprep.subr.mxu0 0.0
        %4507 = vmatpush1.msra.mxu0 %v4475
        %4508 = vmatprep.subr.mxu0 0.0
        %4509 = vmatpush1.msra.mxu0 %v4474
        %4510 = vmatprep.subr.mxu0 0.0
        %4511 = vmatpush1.msra.mxu0 %v4473
        %4512 = vmatprep.subr.mxu0 0.0
        %4513 = vmatpush1.msra.mxu0 %v4472
        %4514 = vmatprep.subr.mxu0 0.0
        %4515 = vmatpush2.msra.mxu0 0.0
        %4516 = vmatprep.subr.mxu0 0.0
        %4517 = vmatpush2.msra.mxu0 0.0
        %4518 = vmatprep.subr.mxu0 0.0
        %4519 = vmatpush2.msra.mxu0 0.0
        %4520 = vmatprep.subr.mxu0 0.0
        %4521 = vmatpush2.msra.mxu0 0.0
        %4522 = vmatprep.subr.mxu0 0.0
        %4523 = vmatpush2.msra.mxu0 0.0
        %4524 = vmatprep.subr.mxu0 0.0
        %4525 = vmatpush2.msra.mxu0 0.0
        %4526 = vmatprep.subr.mxu0 0.0
        %4527 = vmatpush2.msra.mxu0 0.0
        %4528 = vmatprep.subr.mxu0 0.0
        %4529 = vmatpush2.msra.mxu0 0.0
        %4530 = vmatprep.subr.mxu0 0.0
        %4531 = vmatpush2.msra.mxu0 0.0
        %4532 = vmatprep.subr.mxu0 0.0
        %4533 = vmatpush2.msra.mxu0 0.0
        %4534 = vmatprep.subr.mxu0 0.0
        %4535 = vmatpush2.msra.mxu0 0.0
        %4536 = vmatprep.subr.mxu0 0.0
        %4537 = vmatpush2.msra.mxu0 0.0
        %4538 = vmatprep.subr.mxu0 0.0
        %4539 = vmatpush2.msra.mxu0 0.0
        %4540 = vmatprep.subr.mxu0 0.0
        %4541 = vmatpush2.msra.mxu0 0.0
        %4542 = vmatprep.subr.mxu0 0.0
        %4543 = vmatpush2.msra.mxu0 0.0
        %4544 = vmatprep.subr.mxu0 0.0
        %4545 = vmatpush2.msra.mxu0 0.0
        %4546 = vmatprep.mubr.f32.mxu0 0.0
        %4547 = vmatmul.mubr.f32.gmra.mxu0 %v4477
        %v4548 = vpop.f32.mrf.mxu0
        %v4549 = vadd.f32 0.0, %v4548
        %v4550 = vpop.f32.mrf.mxu0
        %4551 = vmatprep.mubr.f32.mxu0 0.0
        %4552 = vmatmul.mubr.f32.gmra.mxu0 %v4480
        %v4553 = vpop.f32.mrf.mxu0
        %v4554 = vadd.f32 0.0, %v4553
        %v4555 = vpop.f32.mrf.mxu0
        %4556 = vdwg.mxu0
        %v4558 = vsel %vm1458, %v4470, 0
        %v4561 = vsel %vm1458, %v4471, 0
        %4563 = vmatprep.subr.mxu0 0.0
        %4564 = vmatpush1.msra.mxu0 0.0
        %4565 = vmatprep.subr.mxu0 0.0
        %4566 = vmatpush1.msra.mxu0 0.0
        %4567 = vmatprep.subr.mxu0 0.0
        %4568 = vmatpush1.msra.mxu0 0.0
        %4569 = vmatprep.subr.mxu0 0.0
        %4570 = vmatpush1.msra.mxu0 0.0
        %4571 = vmatprep.subr.mxu0 0.0
        %4572 = vmatpush1.msra.mxu0 0.0
        %4573 = vmatprep.subr.mxu0 0.0
        %4574 = vmatpush1.msra.mxu0 0.0
        %4575 = vmatprep.subr.mxu0 0.0
        %4576 = vmatpush1.msra.mxu0 0.0
        %4577 = vmatprep.subr.mxu0 0.0
        %4578 = vmatpush1.msra.mxu0 0.0
        %4579 = vmatprep.subr.mxu0 0.0
        %4580 = vmatpush1.msra.mxu0 0.0
        %4581 = vmatprep.subr.mxu0 0.0
        %4582 = vmatpush1.msra.mxu0 0.0
        %4583 = vmatprep.subr.mxu0 0.0
        %4584 = vmatpush1.msra.mxu0 0.0
        %4585 = vmatprep.subr.mxu0 0.0
        %4586 = vmatpush1.msra.mxu0 0.0
        %4587 = vmatprep.subr.mxu0 0.0
        %4588 = vmatpush1.msra.mxu0 %v4475
        %4589 = vmatprep.subr.mxu0 0.0
        %4590 = vmatpush1.msra.mxu0 %v4474
        %4591 = vmatprep.subr.mxu0 0.0
        %4592 = vmatpush1.msra.mxu0 %v4473
        %4593 = vmatprep.subr.mxu0 0.0
        %4594 = vmatpush1.msra.mxu0 %v4472
        %4595 = vmatprep.subr.mxu0 0.0
        %4596 = vmatpush2.msra.mxu0 0.0
        %4597 = vmatprep.subr.mxu0 0.0
        %4598 = vmatpush2.msra.mxu0 0.0
        %4599 = vmatprep.subr.mxu0 0.0
        %4600 = vmatpush2.msra.mxu0 0.0
        %4601 = vmatprep.subr.mxu0 0.0
        %4602 = vmatpush2.msra.mxu0 0.0
        %4603 = vmatprep.subr.mxu0 0.0
        %4604 = vmatpush2.msra.mxu0 0.0
        %4605 = vmatprep.subr.mxu0 0.0
        %4606 = vmatpush2.msra.mxu0 0.0
        %4607 = vmatprep.subr.mxu0 0.0
        %4608 = vmatpush2.msra.mxu0 0.0
        %4609 = vmatprep.subr.mxu0 0.0
        %4610 = vmatpush2.msra.mxu0 0.0
        %4611 = vmatprep.subr.mxu0 0.0
        %4612 = vmatpush2.msra.mxu0 0.0
        %4613 = vmatprep.subr.mxu0 0.0
        %4614 = vmatpush2.msra.mxu0 0.0
        %4615 = vmatprep.subr.mxu0 0.0
        %4616 = vmatpush2.msra.mxu0 0.0
        %4617 = vmatprep.subr.mxu0 0.0
        %4618 = vmatpush2.msra.mxu0 0.0
        %4619 = vmatprep.subr.mxu0 0.0
        %4620 = vmatpush2.msra.mxu0 0.0
        %4621 = vmatprep.subr.mxu0 0.0
        %4622 = vmatpush2.msra.mxu0 0.0
        %4623 = vmatprep.subr.mxu0 0.0
        %4624 = vmatpush2.msra.mxu0 0.0
        %4625 = vmatprep.subr.mxu0 0.0
        %4626 = vmatpush2.msra.mxu0 0.0
        %4627 = vmatprep.mubr.f32.mxu0 0.0
        %4628 = vmatmul.mubr.f32.gmra.mxu0 %v4558
        %v4629 = vpop.f32.mrf.mxu0
        %v4630 = vadd.f32 0.0, %v4629
        %v4631 = vpop.f32.mrf.mxu0
        %4632 = vmatprep.mubr.f32.mxu0 0.0
        %4633 = vmatmul.mubr.f32.gmra.mxu0 %v4561
        %v4634 = vpop.f32.mrf.mxu0
        %v4635 = vadd.f32 0.0, %v4634
        %v4636 = vpop.f32.mrf.mxu0
        %4637 = vdwg.mxu0
        %v4638 = vld [vmem:[%s1089] sm:$0xff]
        %v4639 = vld [vmem:[%s1089 + $0x8] sm:$0xff]
        %v4640 = vld [vmem:[%s1089 + $0x10] sm:$0xf]
        %v4641 = vld [vmem:[%s1094] sm:$0xff]
        %v4642 = vld [vmem:[%s1094 + $0x8] sm:$0xff]
        %v4643 = vld [vmem:[%s1094 + $0x10] sm:$0xf]
        %v4645 = vsel %vm1283, %v4641, 0
        %v4648 = vsel %vm1283, %v4642, 0
        %v4651 = vsel %vm1283, %v4643, 0
        %v4654 = vsel %vm1290, %v4635, 0
        %4656 = vmatprep.subr.mxu0 0.0
        %4657 = vmatpush1.msra.mxu0 0.0
        %4658 = vmatprep.subr.mxu0 0.0
        %4659 = vmatpush1.msra.mxu0 0.0
        %4660 = vmatprep.subr.mxu0 0.0
        %4661 = vmatpush1.msra.mxu0 0.0
        %4662 = vmatprep.subr.mxu0 0.0
        %4663 = vmatpush1.msra.mxu0 0.0
        %4664 = vmatprep.subr.mxu0 0.0
        %4665 = vmatpush1.msra.mxu0 0.0
        %4666 = vmatprep.subr.mxu0 0.0
        %4667 = vmatpush1.msra.mxu0 0.0
        %4668 = vmatprep.subr.mxu0 0.0
        %4669 = vmatpush1.msra.mxu0 0.0
        %4670 = vmatprep.subr.mxu0 0.0
        %4671 = vmatpush1.msra.mxu0 0.0
        %4672 = vmatprep.subr.mxu0 0.0
        %4673 = vmatpush1.msra.mxu0 0.0
        %4674 = vmatprep.subr.mxu0 0.0
        %4675 = vmatpush1.msra.mxu0 0.0
        %4676 = vmatprep.subr.mxu0 0.0
        %4677 = vmatpush1.msra.mxu0 0.0
        %4678 = vmatprep.subr.mxu0 0.0
        %4679 = vmatpush1.msra.mxu0 0.0
        %4680 = vmatprep.subr.mxu0 0.0
        %4681 = vmatpush1.msra.mxu0 0.0
        %4682 = vmatprep.subr.mxu0 0.0
        %4683 = vmatpush1.msra.mxu0 0.0
        %4684 = vmatprep.subr.mxu0 0.0
        %4685 = vmatpush1.msra.mxu0 %v4654
        %4686 = vmatprep.subr.mxu0 0.0
        %4687 = vmatpush1.msra.mxu0 %v4630
        %4688 = vmatprep.subr.mxu0 0.0
        %4689 = vmatpush2.msra.mxu0 0.0
        %4690 = vmatprep.subr.mxu0 0.0
        %4691 = vmatpush2.msra.mxu0 0.0
        %4692 = vmatprep.subr.mxu0 0.0
        %4693 = vmatpush2.msra.mxu0 0.0
        %4694 = vmatprep.subr.mxu0 0.0
        %4695 = vmatpush2.msra.mxu0 0.0
        %4696 = vmatprep.subr.mxu0 0.0
        %4697 = vmatpush2.msra.mxu0 0.0
        %4698 = vmatprep.subr.mxu0 0.0
        %4699 = vmatpush2.msra.mxu0 0.0
        %4700 = vmatprep.subr.mxu0 0.0
        %4701 = vmatpush2.msra.mxu0 0.0
        %4702 = vmatprep.subr.mxu0 0.0
        %4703 = vmatpush2.msra.mxu0 0.0
        %4704 = vmatprep.subr.mxu0 0.0
        %4705 = vmatpush2.msra.mxu0 0.0
        %4706 = vmatprep.subr.mxu0 0.0
        %4707 = vmatpush2.msra.mxu0 0.0
        %4708 = vmatprep.subr.mxu0 0.0
        %4709 = vmatpush2.msra.mxu0 0.0
        %4710 = vmatprep.subr.mxu0 0.0
        %4711 = vmatpush2.msra.mxu0 0.0
        %4712 = vmatprep.subr.mxu0 0.0
        %4713 = vmatpush2.msra.mxu0 0.0
        %4714 = vmatprep.subr.mxu0 0.0
        %4715 = vmatpush2.msra.mxu0 0.0
        %4716 = vmatprep.subr.mxu0 0.0
        %4717 = vmatpush2.msra.mxu0 0.0
        %4718 = vmatprep.subr.mxu0 0.0
        %4719 = vmatpush2.msra.mxu0 0.0
        %4720 = vmatprep.mubr.f32.mxu0 0.0
        %4721 = vmatmul.mubr.f32.gmra.mxu0 %v4645
        %v4722 = vpop.f32.mrf.mxu0
        %v4723 = vadd.f32 0.0, %v4722
        %v4724 = vpop.f32.mrf.mxu0
        %4725 = vmatprep.mubr.f32.mxu0 0.0
        %4726 = vmatmul.mubr.f32.gmra.mxu0 %v4648
        %v4727 = vpop.f32.mrf.mxu0
        %v4728 = vadd.f32 0.0, %v4727
        %v4729 = vpop.f32.mrf.mxu0
        %4730 = vmatprep.mubr.f32.mxu0 0.0
        %4731 = vmatmul.mubr.f32.gmra.mxu0 %v4651
        %v4732 = vpop.f32.mrf.mxu0
        %v4733 = vadd.f32 0.0, %v4732
        %v4734 = vpop.f32.mrf.mxu0
        %4735 = vdwg.mxu0
        %v4737 = vsel %vm1283, %v4638, 0
        %v4740 = vsel %vm1283, %v4639, 0
        %v4743 = vsel %vm1283, %v4640, 0
        %v4746 = vsel %vm1290, %v4554, 0
        %4748 = vmatprep.subr.mxu0 0.0
        %4749 = vmatpush1.msra.mxu0 0.0
        %4750 = vmatprep.subr.mxu0 0.0
        %4751 = vmatpush1.msra.mxu0 0.0
        %4752 = vmatprep.subr.mxu0 0.0
        %4753 = vmatpush1.msra.mxu0 0.0
        %4754 = vmatprep.subr.mxu0 0.0
        %4755 = vmatpush1.msra.mxu0 0.0
        %4756 = vmatprep.subr.mxu0 0.0
        %4757 = vmatpush1.msra.mxu0 0.0
        %4758 = vmatprep.subr.mxu0 0.0
        %4759 = vmatpush1.msra.mxu0 0.0
        %4760 = vmatprep.subr.mxu0 0.0
        %4761 = vmatpush1.msra.mxu0 0.0
        %4762 = vmatprep.subr.mxu0 0.0
        %4763 = vmatpush1.msra.mxu0 0.0
        %4764 = vmatprep.subr.mxu0 0.0
        %4765 = vmatpush1.msra.mxu0 0.0
        %4766 = vmatprep.subr.mxu0 0.0
        %4767 = vmatpush1.msra.mxu0 0.0
        %4768 = vmatprep.subr.mxu0 0.0
        %4769 = vmatpush1.msra.mxu0 0.0
        %4770 = vmatprep.subr.mxu0 0.0
        %4771 = vmatpush1.msra.mxu0 0.0
        %4772 = vmatprep.subr.mxu0 0.0
        %4773 = vmatpush1.msra.mxu0 0.0
        %4774 = vmatprep.subr.mxu0 0.0
        %4775 = vmatpush1.msra.mxu0 0.0
        %4776 = vmatprep.subr.mxu0 0.0
        %4777 = vmatpush1.msra.mxu0 %v4746
        %4778 = vmatprep.subr.mxu0 0.0
        %4779 = vmatpush1.msra.mxu0 %v4549
        %4780 = vmatprep.subr.mxu0 0.0
        %4781 = vmatpush2.msra.mxu0 0.0
        %4782 = vmatprep.subr.mxu0 0.0
        %4783 = vmatpush2.msra.mxu0 0.0
        %4784 = vmatprep.subr.mxu0 0.0
        %4785 = vmatpush2.msra.mxu0 0.0
        %4786 = vmatprep.subr.mxu0 0.0
        %4787 = vmatpush2.msra.mxu0 0.0
        %4788 = vmatprep.subr.mxu0 0.0
        %4789 = vmatpush2.msra.mxu0 0.0
        %4790 = vmatprep.subr.mxu0 0.0
        %4791 = vmatpush2.msra.mxu0 0.0
        %4792 = vmatprep.subr.mxu0 0.0
        %4793 = vmatpush2.msra.mxu0 0.0
        %4794 = vmatprep.subr.mxu0 0.0
        %4795 = vmatpush2.msra.mxu0 0.0
        %4796 = vmatprep.subr.mxu0 0.0
        %4797 = vmatpush2.msra.mxu0 0.0
        %4798 = vmatprep.subr.mxu0 0.0
        %4799 = vmatpush2.msra.mxu0 0.0
        %4800 = vmatprep.subr.mxu0 0.0
        %4801 = vmatpush2.msra.mxu0 0.0
        %4802 = vmatprep.subr.mxu0 0.0
        %4803 = vmatpush2.msra.mxu0 0.0
        %4804 = vmatprep.subr.mxu0 0.0
        %4805 = vmatpush2.msra.mxu0 0.0
        %4806 = vmatprep.subr.mxu0 0.0
        %4807 = vmatpush2.msra.mxu0 0.0
        %4808 = vmatprep.subr.mxu0 0.0
        %4809 = vmatpush2.msra.mxu0 0.0
        %4810 = vmatprep.subr.mxu0 0.0
        %4811 = vmatpush2.msra.mxu0 0.0
        %4812 = vmatprep.mubr.f32.mxu0 0.0
        %4813 = vmatmul.mubr.f32.gmra.mxu0 %v4737
        %v4814 = vpop.f32.mrf.mxu0
        %v4815 = vadd.f32 %v4723, %v4814
        %v4816 = vpop.f32.mrf.mxu0
        %4817 = vmatprep.mubr.f32.mxu0 0.0
        %4818 = vmatmul.mubr.f32.gmra.mxu0 %v4740
        %v4819 = vpop.f32.mrf.mxu0
        %v4820 = vadd.f32 %v4728, %v4819
        %v4821 = vpop.f32.mrf.mxu0
        %4822 = vmatprep.mubr.f32.mxu0 0.0
        %4823 = vmatmul.mubr.f32.gmra.mxu0 %v4743
        %v4824 = vpop.f32.mrf.mxu0
        %v4825 = vadd.f32 %v4733, %v4824
        %v4826 = vpop.f32.mrf.mxu0
        %4827 = vdwg.mxu0
        %v4828 = vld [vmem:[%s1099] sm:$0xff]
        %v4829 = vld [vmem:[%s1099 + $0x8] sm:$0xff]
        %v4830 = vld [vmem:[%s1099 + $0x10] sm:$0xf]
        %v4831 = vld [vmem:[#allocation2] sm:$0x1]
        %v4833 = vlaneseq
        %v4834 = vshrl.u32 %v4833, 7
        %v4835 = vsub.s32 0, %v4834
        %v4836 = vrot.slane %v4831, %v4835
        %4837 = vset.pattern.permute.xlu0 0
        %4838 = vperm.xlu0 %4837, %v4836
        %v4839 = vpop.permute.xlu0 %4838
        %v4841 = vmul.f32 %v4839, %v4815
        %v4842 = vmul.f32 %v4839, %v4820
        %v4843 = vmul.f32 %v4839, %v4825
        %v4844 = vadd.f32 %v4828, %v4841
        %v4845 = vadd.f32 %v4829, %v4842
        %v4846 = vadd.f32 %v4830, %v4843
        %v4847 = vld [vmem:[%s918] sm:$0x1]
        %v4848 = vld [vmem:[%s926] sm:$0x1]
        %v4850 = vlaneseq
        %v4851 = vshrl.u32 %v4850, 7
        %v4852 = vsub.s32 0, %v4851
        %v4853 = vrot.slane %v4848, %v4852
        %vm4858 = vcmask 1040384
        %v4859 = vrot.slane %v4844, 7
        %v4860 = vrot.slane %v4845, 7
        %v4861 = vsel %vm4858, %v4859, %v4860
        %v4862 = vrot.slane %v4846, 7
        %v4863 = vsel %vm4858, %v4860, %v4862
        %v4867 = vsel %vm4858, %v4847, %v4859
        %vm4868 = vcmask 1044480
        %v4869 = vsel %vm4868, %v4863, %v4853
        %4870 = vst [vmem:[%s1104] sm:$0xff] %v4867
        %4871 = vst [vmem:[%s1104 + $0x8] sm:$0xff] %v4861
        %4872 = vst [vmem:[%s1104 + $0x10] sm:$0xff] %v4869
        %4873 = vst [vmem:[%s1104 + $0x18] sm:$0xff] %v4853
        %4874 = vst [vmem:[%s1104 + $0x20] sm:$0xff] %v4853
        %4875 = vst [vmem:[%s1104 + $0x28] sm:$0xff] %v4853
        %4876 = vst [vmem:[%s1104 + $0x30] sm:$0xff] %v4853
        %4877 = vst [vmem:[%s1104 + $0x38] sm:$0xff] %v4853
        %4878 = vst [vmem:[%s1104 + $0x40] sm:$0xff] %v4853
        %4879 = vst [vmem:[%s1104 + $0x48] sm:$0x1f] %v4853
        %p4880 = scmp.lt.s32.totalorder %s48, 1
        %s4881 = scalar_select %p4880, %s48, 1
        %s4882 = smul.addr %s4881, 10
        %s4883 = smul.addr %s4882, 8
        %s4884 = scalar_lea.vmem %s28, %s4883
        // Predicated region
        $region149: #{tpu_custom_call.1} parent=131 // pred_check
          %p4885 = pneg %p709
        $region150: #{tpu_custom_call.1} parent=131 // pred_check_branch
          %4887 = sbr.rel (%p4885) target = $region152
        $region151: #{tpu_custom_call.1} parent=131 // pred_region
          _
        $region152: #{tpu_custom_call.1} parent=131 // pred_fallthru
          _
      $region132: #{tpu_custom_call.1} parent=5 // pred_fallthru
        _
      %p4888 = scmp.le.s32.totalorder 2, %s43
      // Predicated region
      $region153: #{tpu_custom_call.1} parent=5 // pred_check
        %p4889 = pneg %p4888
      $region154: #{tpu_custom_call.1} parent=5 // pred_check_branch
        %4891 = sbr.rel (%p4889) target = $region156
      $region155: #{tpu_custom_call.1} parent=5 // pred_region
        %s4892 = ssub.s32 %s43, 2
        // Predicated region
        $region157: #{tpu_custom_call.1} parent=155 // pred_check
          %p4893 = pneg %p715
        $region158: #{tpu_custom_call.1} parent=155 // pred_check_branch
          %4895 = sbr.rel (%p4893) target = $region160
        $region159: #{tpu_custom_call.1} parent=155 // pred_region
          %p4896 = scmp.lt.s32.totalorder %s49, 1
          %s4897 = scalar_select %p4896, %s49, 1
          %s4898 = smul.addr %s4897, 10
          %s4899 = smul.addr %s4898, 8
          %s4900 = scalar_lea.vmem %s28, %s4899
        $region160: #{tpu_custom_call.1} parent=155 // pred_fallthru
          _
      $region156: #{tpu_custom_call.1} parent=5 // pred_fallthru
        _
    $region6: #{tpu_custom_call.1} parent=1 // loop_footer
      %s47 = sadd.s32 1, %s43
    $region7: #{tpu_custom_call.1} parent=1 // loop_footer_branch
      %42 = sbr.rel target = $region3
    $region8: #{tpu_custom_call.1} parent=1 // loop_exit
      _
    %4901 = vsyncpa [#allocation4], 1
    %s4902 = scalar_lea.sflag [#allocation4], 1
    %4903 = vsyncpa %s4902, 1
    %4904 = vsyncpa [#allocation6], 1
    %s4905 = scalar_lea.sflag [#allocation6], 1
    %4906 = vsyncpa %s4905, 1
    %4907 = vsyncpa [#allocation9], 1

</llo_original>
